<compile_context>
chip_gen: v7x
topology: tpu7x:2x2x1
jax: 0.10.0
libtpu: 0.0.40
codegen_flags: <defaults>
</compile_context>

<pallas_src>
import functools
import math

import jax
import jax.numpy as jnp
import numpy as np
from jax.experimental import pallas as pl
from jax.experimental.pallas import tpu as pltpu


def _tap_contract(w_tap, x2d, cin):
    """(Cout, Cin) x (Cin, L*tt) -> (Cout, L*tt) channel contraction."""
    if cin >= 4:
        # MXU path (review: the matmul wins well below Cin=8 on v6e/v7x).
        return jnp.dot(w_tap, x2d, preferred_element_type=jnp.float32)
    # Tiny-Cin fallback: Cin outer-product MACs on the VPU.
    acc = w_tap[:, 0:1] * x2d[0:1, :]
    for c in range(1, cin):
        acc = acc + w_tap[:, c:c + 1] * x2d[c:c + 1, :]
    return acc


def _overlap_add_folded(taps, L, tt):
    """Overlap-add taps (each (Cout, L*tt); tap q is shifted down by q rows) into
    a folded phase plane (Cout, (L+n-1)*tt).

    Only overlapping windows are added (no zero-padding planes); every lane
    offset is a multiple of tt (>=128), so all slices stay lane-aligned."""
    n = len(taps)
    if n == 1:
        return taps[0]
    m = L + n - 1
    pieces = []
    j = 0
    while j < m:
        lo = max(0, j - L + 1)          # first tap contributing to row j
        hi = min(n - 1, j)              # last tap contributing to row j
        if lo == 0 and hi == n - 1:
            # Rows j..L-1 receive every tap: one blocked add over the window.
            blk = L - j
            seg = taps[0][:, j * tt:(j + blk) * tt]
            for q in range(1, n):
                seg = seg + taps[q][:, (j - q) * tt:(j - q + blk) * tt]
            pieces.append(seg)
            j += blk
        else:
            seg = taps[lo][:, (j - lo) * tt:(j - lo + 1) * tt]
            for q in range(lo + 1, hi + 1):
                seg = seg + taps[q][:, (j - q) * tt:(j - q + 1) * tt]
            pieces.append(seg)
            j += 1
    return jnp.concatenate(pieces, axis=1)


def _su_fused_kernel(x_ref, *refs, band_meta):
    # x_ref : (1, Cin, Fr, Tt)                one batch element, one T tile
    # refs  : w0..w_{nb-1}, b0..b_{nb-1}, o_ref
    #   w_i : (k_i, Cout, Cin)   w_i[kf, co, c] == ConvTranspose2d.weight[c, co, kf, 0]
    #   b_i : (Cout, 1)
    #   o_ref: (1, Cout, F_out, Tt)           trimmed bands concatenated along freq
    nb = len(band_meta)
    w_refs = refs[:nb]
    b_refs = refs[nb:2 * nb]
    o_ref = refs[2 * nb]
    _, cin, _, tt = x_ref.shape

    off = 0
    for (k, s, start, L, dist, trim_len), w_ref, b_ref in zip(band_meta, w_refs, b_refs):
        if trim_len == 0:          # PyTorch would emit an empty band; skip it.
            continue
        cout = b_ref.shape[0]

        # The only input-side retile per band: MXU wants Cin on sublanes and all
        # L*Tt columns on lanes.
        x2d = x_ref[0, :, start:start + L, :].reshape(cin, L * tt)

        if s == 1:
            # Single phase: stream the k per-tap contractions into a folded
            # overlap-add; the centered trim is a contiguous tt-aligned lane slice.
            taps = [_tap_contract(w_ref[kf], x2d, cin) for kf in range(k)]
            ph = _overlap_add_folded(taps, L, tt)              # (Cout, L_out*tt)
            folded = ph[:, dist * tt:(dist + trim_len) * tt]
        else:
            # s phases.  Process one phase at a time (holds at most ceil(k/s)
            # taps live) and compute only the output rows that survive the trim.
            row_vals = [None] * trim_len
            for p in range(s):
                rows = [r for r in range(dist, dist + trim_len) if r % s == p]
                if not rows:
                    continue
                n_q = (k - 1 - p) // s + 1
                taps = [_tap_contract(w_ref[q * s + p], x2d, cin)
                        for q in range(n_q)]
                for r in rows:
                    j = r // s
                    seg = None
                    for q in range(n_q):
                        l = j - q
                        if 0 <= l < L:
                            t_ = taps[q][:, l * tt:(l + 1) * tt]
                            seg = t_ if seg is None else seg + t_
                    row_vals[r - dist] = seg
            folded = (row_vals[0] if trim_len == 1
                      else jnp.concatenate(row_vals, axis=1))  # (Cout, trim_len*tt)

        # Bias folded in, ONE lane->sublane unfold, direct lane-dense store into
        # this band's static frequency sub-slice of the output block.
        band = (folded + b_ref[...]).reshape(cout, trim_len, tt)
        o_ref[0, :, off:off + trim_len, :] = band.astype(o_ref.dtype)
        off += trim_len


def su_fused(x, w_list, b_list, *, band_meta):
    """All bands of the SUlayer in one pallas_call.

    band_meta: tuple of (k, s, start, L, dist, trim_len) per band (static)."""
    B, Cin, Fr, T = x.shape
    cout = b_list[0].shape[0]
    F_out = sum(m[5] for m in band_meta)

    def _round_up(a, b):
        return -(-a // b) * b

    def _vmem_bytes(t_tile):
        f32 = 4
        blocks = 2 * (Cin * Fr + cout * F_out) * t_tile * f32   # double-buffered I/O
        inter = 0
        for (k, s, _start, L, _dist, trim_len) in band_meta:
            n = -(-k // s)
            inter = max(inter, (Cin * L + (n + 1) * cout * L
                                + 3 * cout * max(trim_len, 1)) * t_tile * f32)
        return blocks + inter

    # Lane-dense T tiling: single full-width tile for small T, otherwise the
    # largest 128-multiple tile whose working set stays inside a conservative
    # (v7x-safe) VMEM budget.  Avoids the old degenerate fallback to 128-wide
    # tiles when T is not a multiple of 256/512.
    budget = 30 * 1024 * 1024
    T_pad128 = _round_up(T, 128)
    if T_pad128 <= 512:
        cands = [T_pad128]
    else:
        cands = [c for c in (1024, 512, 256, 128) if c <= T_pad128]
    t_tile = cands[-1]
    for c in cands:
        if _vmem_bytes(c) <= budget:
            t_tile = c
            break
    # Keep both v7x TensorCores busy: >= 2 parallel grid steps when possible.
    if B * (_round_up(T, t_tile) // t_tile) < 2 and t_tile % 256 == 0:
        t_tile //= 2
    T_pad = _round_up(T, t_tile)
    if T_pad != T:
        x = jnp.pad(x, ((0, 0), (0, 0), (0, 0), (0, T_pad - T)))

    kernel = functools.partial(_su_fused_kernel, band_meta=band_meta)

    in_specs = [pl.BlockSpec((1, Cin, Fr, t_tile), lambda b, t: (b, 0, 0, t))]
    in_specs += [pl.BlockSpec(w.shape, lambda b, t: (0, 0, 0)) for w in w_list]
    in_specs += [pl.BlockSpec(bb.shape, lambda b, t: (0, 0)) for bb in b_list]

    vmem_limit = int(min(48 * 1024 * 1024,
                         max(32 * 1024 * 1024, int(1.5 * _vmem_bytes(t_tile)))))

    out = pl.pallas_call(
        kernel,
        out_shape=jax.ShapeDtypeStruct((B, cout, F_out, T_pad), x.dtype),
        grid_spec=pltpu.PrefetchScalarGridSpec(
            num_scalar_prefetch=0,
            grid=(B, T_pad // t_tile),
            in_specs=in_specs,
            out_specs=pl.BlockSpec((1, cout, F_out, t_tile),
                                   lambda b, t: (b, 0, 0, t)),
        ),
        compiler_params=pltpu.CompilerParams(
            dimension_semantics=("parallel", "parallel"),
            vmem_limit_bytes=vmem_limit,
        ),
    )(x, *w_list, *b_list)

    if T_pad != T:
        out = out[:, :, :, :T]
    return out


class SUlayerPallas:
    """Pallas port of SUlayer: one ConvTranspose2d([k,1],[s,1]) per band, fused."""

    def __init__(self, channels_in, channels_out, band_configs, key):
        self.cin = channels_in
        self.cout = channels_out
        self.configs = [(cfg['kernel'], cfg['stride']) for _, cfg in band_configs.items()]
        self.weights = []   # each (Cin, Cout, k, 1), like nn.ConvTranspose2d.weight
        self.biases = []    # each (Cout,)
        for (k, s) in self.configs:
            key, wk, bk = jax.random.split(key, 3)
            bound = 1.0 / math.sqrt(channels_in * k)
            W = jax.random.uniform(wk, (channels_in, channels_out, k, 1),
                                   jnp.float32, -bound, bound)
            bvec = jax.random.uniform(bk, (channels_out,), jnp.float32, -bound, bound)
            self.weights.append(W)
            self.biases.append(bvec)

    def __call__(self, x, lengths, origin_lengths):
        B, C, Fr, T = x.shape
        splits = [(0, lengths[0]),
                  (lengths[0], lengths[0] + lengths[1]),
                  (lengths[0] + lengths[1], Fr)]
        band_meta = []
        w_list, b_list = [], []
        for idx, ((k, s), (start, end)) in enumerate(zip(self.configs, splits)):
            L = end - start
            L_out = (L - 1) * s + k
            origin = origin_lengths[idx]
            dist = abs(origin - L_out) // 2
            trim_len = max(0, min(dist + origin, L_out) - dist)
            band_meta.append((k, s, start, L, dist, trim_len))
            # Tap-major weights (k, Cout, Cin): each w_ref[kf] inside the kernel
            # is a natively tiled (Cout, Cin) plane (no misaligned sublane slices).
            w_list.append(jnp.transpose(self.weights[idx][:, :, :, 0], (2, 1, 0)))
            b_list.append(self.biases[idx].reshape(self.cout, 1))
        return su_fused(x, w_list, b_list, band_meta=tuple(band_meta))


def reference(x, weights, biases, configs, lengths, origin_lengths):
    """Pure-JAX reference of the ConvTranspose2d([k,1],[s,1]) + trim + concat."""
    B, C, Fr, T = x.shape
    splits = [(0, lengths[0]),
              (lengths[0], lengths[0] + lengths[1]),
              (lengths[0] + lengths[1], Fr)]
    outs = []
    for idx, ((k, s), (start, end)) in enumerate(zip(configs, splits)):
        xb = x[:, :, start:end, :]
        L = xb.shape[2]
        L_out = (L - 1) * s + k
        W = weights[idx][:, :, :, 0]                                # (Cin, Cout, k)
        Cout = W.shape[1]
        out = jnp.zeros((B, Cout, L_out, T), jnp.float32)
        for l in range(L):
            contrib = jnp.einsum('bct,cok->bokt', xb[:, :, l, :], W)
            out = out.at[:, :, l * s:l * s + k, :].add(contrib)
        out = out + biases[idx].reshape(1, -1, 1, 1)
        origin = origin_lengths[idx]
        dist = abs(origin - L_out) // 2
        outs.append(out[:, :, dist:dist + origin, :])
    return jnp.concatenate(outs, axis=2)


if __name__ == "__main__":
    key = jax.random.PRNGKey(0)
    band_configs = {
        'low':  {'kernel': 3, 'stride': 1},
        'mid':  {'kernel': 4, 'stride': 2},
        'high': {'kernel': 4, 'stride': 4},
    }
    B, Cin, Cout, T = 2, 4, 4, 16
    lengths = [6, 6, 4]            # encoded per-band frequency lengths (static)
    origin_lengths = [7, 12, 16]   # target per-band lengths after upsample+trim
    Fr = sum(lengths)

    key, xk, pk = jax.random.split(key, 3)
    x = jax.random.normal(xk, (B, Cin, Fr, T), jnp.float32)

    layer = SUlayerPallas(Cin, Cout, band_configs, pk)
    out = layer(x, lengths, origin_lengths)
    jax.block_until_ready(out)

    ref = reference(x, layer.weights, layer.biases, layer.configs,
                    lengths, origin_lengths)
    assert out.shape == (B, Cout, sum(origin_lengths), T), out.shape
    np.testing.assert_allclose(np.asarray(out), np.asarray(ref),
                               rtol=1e-4, atol=1e-4)
    print("KERNEL_OK")
</pallas_src>

<mosaic_0001>
module attributes {stable_mosaic.version = 11 : i64} {
  func.func @_su_fused_kernel(%arg0: i32, %arg1: i32, %arg2: memref<1x4x16x128xf32, #tpu.memory_space<vmem>>, %arg3: memref<3x4x4xf32, #tpu.memory_space<vmem>>, %arg4: memref<4x4x4xf32, #tpu.memory_space<vmem>>, %arg5: memref<4x4x4xf32, #tpu.memory_space<vmem>>, %arg6: memref<4x1xf32, #tpu.memory_space<vmem>>, %arg7: memref<4x1xf32, #tpu.memory_space<vmem>>, %arg8: memref<4x1xf32, #tpu.memory_space<vmem>>, %arg9: memref<1x4x35x128xf32, #tpu.memory_space<vmem>>) attributes {dimension_semantics = [#tpu.dimension_semantics<parallel>, #tpu.dimension_semantics<parallel>], iteration_bounds = array<i64: 2, 1>, scalar_prefetch = 0 : i64, scratch_operands = 0 : i64, tpu.core_type = #tpu.core_type<tc>, window_params = [{transform_indices = @transform_0, window_bounds = array<i64: 1, 4, 16, 128>}, {pipeline_mode = #tpu.pipeline_mode<synchronous>, transform_indices = @transform_1, window_bounds = array<i64: 3, 4, 4>}, {pipeline_mode = #tpu.pipeline_mode<synchronous>, transform_indices = @transform_2, window_bounds = array<i64: 4, 4, 4>}, {pipeline_mode = #tpu.pipeline_mode<synchronous>, transform_indices = @transform_3, window_bounds = array<i64: 4, 4, 4>}, {pipeline_mode = #tpu.pipeline_mode<synchronous>, transform_indices = @transform_4, window_bounds = array<i64: 4, 1>}, {pipeline_mode = #tpu.pipeline_mode<synchronous>, transform_indices = @transform_5, window_bounds = array<i64: 4, 1>}, {pipeline_mode = #tpu.pipeline_mode<synchronous>, transform_indices = @transform_6, window_bounds = array<i64: 4, 1>}, {transform_indices = @transform_7, window_bounds = array<i64: 1, 4, 35, 128>}]} {
    %c0 = arith.constant 0 : index
    %c0_0 = arith.constant 0 : index
    %c0_1 = arith.constant 0 : index
    %c0_2 = arith.constant 0 : index
    %0 = vector.load %arg2[%c0, %c0_0, %c0_1, %c0_2] : memref<1x4x16x128xf32, #tpu.memory_space<vmem>>, vector<1x4x6x128xf32>
    %1 = vector.shape_cast %0 : vector<1x4x6x128xf32> to vector<4x6x128xf32>
    %2 = vector.shape_cast %1 : vector<4x6x128xf32> to vector<4x768xf32>
    %c0_3 = arith.constant 0 : index
    %c0_4 = arith.constant 0 : index
    %c0_5 = arith.constant 0 : index
    %3 = vector.load %arg3[%c0_3, %c0_4, %c0_5] : memref<3x4x4xf32, #tpu.memory_space<vmem>>, vector<1x4x4xf32>
    %4 = vector.shape_cast %3 : vector<1x4x4xf32> to vector<4x4xf32>
    %cst = arith.constant dense<0.000000e+00> : vector<4x768xf32>
    %5 = tpu.matmul %4, %2, %cst {dimension_numbers = #tpu.dot_dimension_numbers<[1], [0], [0], [1], [0, 0, 1, 1], [], []>} : vector<4x4xf32>, vector<4x768xf32>, vector<4x768xf32> -> vector<4x768xf32>
    %c1 = arith.constant 1 : index
    %c0_6 = arith.constant 0 : index
    %c0_7 = arith.constant 0 : index
    %6 = vector.load %arg3[%c1, %c0_6, %c0_7] : memref<3x4x4xf32, #tpu.memory_space<vmem>>, vector<1x4x4xf32>
    %7 = vector.shape_cast %6 : vector<1x4x4xf32> to vector<4x4xf32>
    %cst_8 = arith.constant dense<0.000000e+00> : vector<4x768xf32>
    %8 = tpu.matmul %7, %2, %cst_8 {dimension_numbers = #tpu.dot_dimension_numbers<[1], [0], [0], [1], [0, 0, 1, 1], [], []>} : vector<4x4xf32>, vector<4x768xf32>, vector<4x768xf32> -> vector<4x768xf32>
    %c2 = arith.constant 2 : index
    %c0_9 = arith.constant 0 : index
    %c0_10 = arith.constant 0 : index
    %9 = vector.load %arg3[%c2, %c0_9, %c0_10] : memref<3x4x4xf32, #tpu.memory_space<vmem>>, vector<1x4x4xf32>
    %10 = vector.shape_cast %9 : vector<1x4x4xf32> to vector<4x4xf32>
    %cst_11 = arith.constant dense<0.000000e+00> : vector<4x768xf32>
    %11 = tpu.matmul %10, %2, %cst_11 {dimension_numbers = #tpu.dot_dimension_numbers<[1], [0], [0], [1], [0, 0, 1, 1], [], []>} : vector<4x4xf32>, vector<4x768xf32>, vector<4x768xf32> -> vector<4x768xf32>
    %12 = vector.extract_strided_slice %5 {offsets = [0, 0], sizes = [4, 128], strides = [1, 1]} : vector<4x768xf32> to vector<4x128xf32>
    %13 = vector.extract_strided_slice %5 {offsets = [0, 128], sizes = [4, 128], strides = [1, 1]} : vector<4x768xf32> to vector<4x128xf32>
    %14 = vector.extract_strided_slice %8 {offsets = [0, 0], sizes = [4, 128], strides = [1, 1]} : vector<4x768xf32> to vector<4x128xf32>
    %15 = arith.addf %13, %14 : vector<4x128xf32>
    %16 = vector.extract_strided_slice %5 {offsets = [0, 256], sizes = [4, 512], strides = [1, 1]} : vector<4x768xf32> to vector<4x512xf32>
    %17 = vector.extract_strided_slice %8 {offsets = [0, 128], sizes = [4, 512], strides = [1, 1]} : vector<4x768xf32> to vector<4x512xf32>
    %18 = arith.addf %16, %17 : vector<4x512xf32>
    %19 = vector.extract_strided_slice %11 {offsets = [0, 0], sizes = [4, 512], strides = [1, 1]} : vector<4x768xf32> to vector<4x512xf32>
    %20 = arith.addf %18, %19 : vector<4x512xf32>
    %21 = vector.extract_strided_slice %8 {offsets = [0, 640], sizes = [4, 128], strides = [1, 1]} : vector<4x768xf32> to vector<4x128xf32>
    %22 = vector.extract_strided_slice %11 {offsets = [0, 512], sizes = [4, 128], strides = [1, 1]} : vector<4x768xf32> to vector<4x128xf32>
    %23 = arith.addf %21, %22 : vector<4x128xf32>
    %24 = vector.extract_strided_slice %11 {offsets = [0, 640], sizes = [4, 128], strides = [1, 1]} : vector<4x768xf32> to vector<4x128xf32>
    %25 = tpu.concatenate %12, %15, %20, %23, %24 in 1 : vector<4x128xf32>, vector<4x128xf32>, vector<4x512xf32>, vector<4x128xf32>, vector<4x128xf32> -> vector<4x1024xf32>
    %26 = vector.extract_strided_slice %25 {offsets = [0, 0], sizes = [4, 896], strides = [1, 1]} : vector<4x1024xf32> to vector<4x896xf32>
    %c0_12 = arith.constant 0 : index
    %c0_13 = arith.constant 0 : index
    %27 = vector.load %arg6[%c0_12, %c0_13] : memref<4x1xf32, #tpu.memory_space<vmem>>, vector<4x1xf32>
    %28 = vector.broadcast %27 : vector<4x1xf32> to vector<4x896xf32>
    %29 = arith.addf %26, %28 : vector<4x896xf32>
    %30 = vector.shape_cast %29 : vector<4x896xf32> to vector<4x7x128xf32>
    %c0_14 = arith.constant 0 : index
    %c0_15 = arith.constant 0 : index
    %c0_16 = arith.constant 0 : index
    %c0_17 = arith.constant 0 : index
    %31 = vector.load %arg9[%c0_14, %c0_15, %c0_16, %c0_17] : memref<1x4x35x128xf32, #tpu.memory_space<vmem>>, vector<1x4x7x128xf32>
    %32 = vector.shape_cast %31 : vector<1x4x7x128xf32> to vector<4x7x128xf32>
    %33 = vector.shape_cast %30 : vector<4x7x128xf32> to vector<1x4x7x128xf32>
    tpu.vector_store %arg9[%c0_14, %c0_15, %c0_16, %c0_17], %33 {strides = array<i32>} : memref<1x4x35x128xf32, #tpu.memory_space<vmem>>, vector<1x4x7x128xf32>,
    %c0_18 = arith.constant 0 : index
    %c0_19 = arith.constant 0 : index
    %c6 = arith.constant 6 : index
    %c0_20 = arith.constant 0 : index
    %34 = vector.load %arg2[%c0_18, %c0_19, %c6, %c0_20] : memref<1x4x16x128xf32, #tpu.memory_space<vmem>>, vector<1x4x6x128xf32>
    %35 = vector.shape_cast %34 : vector<1x4x6x128xf32> to vector<4x6x128xf32>
    %36 = vector.shape_cast %35 : vector<4x6x128xf32> to vector<4x768xf32>
    %c0_21 = arith.constant 0 : index
    %c0_22 = arith.constant 0 : index
    %c0_23 = arith.constant 0 : index
    %37 = vector.load %arg4[%c0_21, %c0_22, %c0_23] : memref<4x4x4xf32, #tpu.memory_space<vmem>>, vector<1x4x4xf32>
    %38 = vector.shape_cast %37 : vector<1x4x4xf32> to vector<4x4xf32>
    %cst_24 = arith.constant dense<0.000000e+00> : vector<4x768xf32>
    %39 = tpu.matmul %38, %36, %cst_24 {dimension_numbers = #tpu.dot_dimension_numbers<[1], [0], [0], [1], [0, 0, 1, 1], [], []>} : vector<4x4xf32>, vector<4x768xf32>, vector<4x768xf32> -> vector<4x768xf32>
    %c2_25 = arith.constant 2 : index
    %c0_26 = arith.constant 0 : index
    %c0_27 = arith.constant 0 : index
    %40 = vector.load %arg4[%c2_25, %c0_26, %c0_27] : memref<4x4x4xf32, #tpu.memory_space<vmem>>, vector<1x4x4xf32>
    %41 = vector.shape_cast %40 : vector<1x4x4xf32> to vector<4x4xf32>
    %cst_28 = arith.constant dense<0.000000e+00> : vector<4x768xf32>
    %42 = tpu.matmul %41, %36, %cst_28 {dimension_numbers = #tpu.dot_dimension_numbers<[1], [0], [0], [1], [0, 0, 1, 1], [], []>} : vector<4x4xf32>, vector<4x768xf32>, vector<4x768xf32> -> vector<4x768xf32>
    %43 = vector.extract_strided_slice %39 {offsets = [0, 128], sizes = [4, 128], strides = [1, 1]} : vector<4x768xf32> to vector<4x128xf32>
    %44 = vector.extract_strided_slice %42 {offsets = [0, 0], sizes = [4, 128], strides = [1, 1]} : vector<4x768xf32> to vector<4x128xf32>
    %45 = arith.addf %43, %44 : vector<4x128xf32>
    %46 = vector.extract_strided_slice %39 {offsets = [0, 256], sizes = [4, 128], strides = [1, 1]} : vector<4x768xf32> to vector<4x128xf32>
    %47 = vector.extract_strided_slice %42 {offsets = [0, 128], sizes = [4, 128], strides = [1, 1]} : vector<4x768xf32> to vector<4x128xf32>
    %48 = arith.addf %46, %47 : vector<4x128xf32>
    %49 = vector.extract_strided_slice %39 {offsets = [0, 384], sizes = [4, 128], strides = [1, 1]} : vector<4x768xf32> to vector<4x128xf32>
    %50 = vector.extract_strided_slice %42 {offsets = [0, 256], sizes = [4, 128], strides = [1, 1]} : vector<4x768xf32> to vector<4x128xf32>
    %51 = arith.addf %49, %50 : vector<4x128xf32>
    %52 = vector.extract_strided_slice %39 {offsets = [0, 512], sizes = [4, 128], strides = [1, 1]} : vector<4x768xf32> to vector<4x128xf32>
    %53 = vector.extract_strided_slice %42 {offsets = [0, 384], sizes = [4, 128], strides = [1, 1]} : vector<4x768xf32> to vector<4x128xf32>
    %54 = arith.addf %52, %53 : vector<4x128xf32>
    %55 = vector.extract_strided_slice %39 {offsets = [0, 640], sizes = [4, 128], strides = [1, 1]} : vector<4x768xf32> to vector<4x128xf32>
    %56 = vector.extract_strided_slice %42 {offsets = [0, 512], sizes = [4, 128], strides = [1, 1]} : vector<4x768xf32> to vector<4x128xf32>
    %57 = arith.addf %55, %56 : vector<4x128xf32>
    %58 = vector.extract_strided_slice %42 {offsets = [0, 640], sizes = [4, 128], strides = [1, 1]} : vector<4x768xf32> to vector<4x128xf32>
    %c1_29 = arith.constant 1 : index
    %c0_30 = arith.constant 0 : index
    %c0_31 = arith.constant 0 : index
    %59 = vector.load %arg4[%c1_29, %c0_30, %c0_31] : memref<4x4x4xf32, #tpu.memory_space<vmem>>, vector<1x4x4xf32>
    %60 = vector.shape_cast %59 : vector<1x4x4xf32> to vector<4x4xf32>
    %cst_32 = arith.constant dense<0.000000e+00> : vector<4x768xf32>
    %61 = tpu.matmul %60, %36, %cst_32 {dimension_numbers = #tpu.dot_dimension_numbers<[1], [0], [0], [1], [0, 0, 1, 1], [], []>} : vector<4x4xf32>, vector<4x768xf32>, vector<4x768xf32> -> vector<4x768xf32>
    %c3 = arith.constant 3 : index
    %c0_33 = arith.constant 0 : index
    %c0_34 = arith.constant 0 : index
    %62 = vector.load %arg4[%c3, %c0_33, %c0_34] : memref<4x4x4xf32, #tpu.memory_space<vmem>>, vector<1x4x4xf32>
    %63 = vector.shape_cast %62 : vector<1x4x4xf32> to vector<4x4xf32>
    %cst_35 = arith.constant dense<0.000000e+00> : vector<4x768xf32>
    %64 = tpu.matmul %63, %36, %cst_35 {dimension_numbers = #tpu.dot_dimension_numbers<[1], [0], [0], [1], [0, 0, 1, 1], [], []>} : vector<4x4xf32>, vector<4x768xf32>, vector<4x768xf32> -> vector<4x768xf32>
    %65 = vector.extract_strided_slice %61 {offsets = [0, 0], sizes = [4, 128], strides = [1, 1]} : vector<4x768xf32> to vector<4x128xf32>
    %66 = vector.extract_strided_slice %61 {offsets = [0, 128], sizes = [4, 128], strides = [1, 1]} : vector<4x768xf32> to vector<4x128xf32>
    %67 = vector.extract_strided_slice %64 {offsets = [0, 0], sizes = [4, 128], strides = [1, 1]} : vector<4x768xf32> to vector<4x128xf32>
    %68 = arith.addf %66, %67 : vector<4x128xf32>
    %69 = vector.extract_strided_slice %61 {offsets = [0, 256], sizes = [4, 128], strides = [1, 1]} : vector<4x768xf32> to vector<4x128xf32>
    %70 = vector.extract_strided_slice %64 {offsets = [0, 128], sizes = [4, 128], strides = [1, 1]} : vector<4x768xf32> to vector<4x128xf32>
    %71 = arith.addf %69, %70 : vector<4x128xf32>
    %72 = vector.extract_strided_slice %61 {offsets = [0, 384], sizes = [4, 128], strides = [1, 1]} : vector<4x768xf32> to vector<4x128xf32>
    %73 = vector.extract_strided_slice %64 {offsets = [0, 256], sizes = [4, 128], strides = [1, 1]} : vector<4x768xf32> to vector<4x128xf32>
    %74 = arith.addf %72, %73 : vector<4x128xf32>
    %75 = vector.extract_strided_slice %61 {offsets = [0, 512], sizes = [4, 128], strides = [1, 1]} : vector<4x768xf32> to vector<4x128xf32>
    %76 = vector.extract_strided_slice %64 {offsets = [0, 384], sizes = [4, 128], strides = [1, 1]} : vector<4x768xf32> to vector<4x128xf32>
    %77 = arith.addf %75, %76 : vector<4x128xf32>
    %78 = vector.extract_strided_slice %61 {offsets = [0, 640], sizes = [4, 128], strides = [1, 1]} : vector<4x768xf32> to vector<4x128xf32>
    %79 = vector.extract_strided_slice %64 {offsets = [0, 512], sizes = [4, 128], strides = [1, 1]} : vector<4x768xf32> to vector<4x128xf32>
    %80 = arith.addf %78, %79 : vector<4x128xf32>
    %81 = tpu.concatenate %65, %45, %68, %48, %71, %51, %74, %54, %77, %57, %80, %58 in 1 : vector<4x128xf32>, vector<4x128xf32>, vector<4x128xf32>, vector<4x128xf32>, vector<4x128xf32>, vector<4x128xf32>, vector<4x128xf32>, vector<4x128xf32>, vector<4x128xf32>, vector<4x128xf32>, vector<4x128xf32>, vector<4x128xf32> -> vector<4x1536xf32>
    %c0_36 = arith.constant 0 : index
    %c0_37 = arith.constant 0 : index
    %82 = vector.load %arg7[%c0_36, %c0_37] : memref<4x1xf32, #tpu.memory_space<vmem>>, vector<4x1xf32>
    %83 = vector.broadcast %82 : vector<4x1xf32> to vector<4x1536xf32>
    %84 = arith.addf %81, %83 : vector<4x1536xf32>
    %85 = vector.shape_cast %84 : vector<4x1536xf32> to vector<4x12x128xf32>
    %c0_38 = arith.constant 0 : index
    %c0_39 = arith.constant 0 : index
    %c7 = arith.constant 7 : index
    %c0_40 = arith.constant 0 : index
    %86 = vector.load %arg9[%c0_38, %c0_39, %c7, %c0_40] : memref<1x4x35x128xf32, #tpu.memory_space<vmem>>, vector<1x4x12x128xf32>
    %87 = vector.shape_cast %86 : vector<1x4x12x128xf32> to vector<4x12x128xf32>
    %88 = vector.shape_cast %85 : vector<4x12x128xf32> to vector<1x4x12x128xf32>
    tpu.vector_store %arg9[%c0_38, %c0_39, %c7, %c0_40], %88 {strides = array<i32>} : memref<1x4x35x128xf32, #tpu.memory_space<vmem>>, vector<1x4x12x128xf32>,
    %c0_41 = arith.constant 0 : index
    %c0_42 = arith.constant 0 : index
    %c12 = arith.constant 12 : index
    %c0_43 = arith.constant 0 : index
    %89 = vector.load %arg2[%c0_41, %c0_42, %c12, %c0_43] : memref<1x4x16x128xf32, #tpu.memory_space<vmem>>, vector<1x4x4x128xf32>
    %90 = vector.shape_cast %89 : vector<1x4x4x128xf32> to vector<4x4x128xf32>
    %91 = vector.shape_cast %90 : vector<4x4x128xf32> to vector<4x512xf32>
    %c0_44 = arith.constant 0 : index
    %c0_45 = arith.constant 0 : index
    %c0_46 = arith.constant 0 : index
    %92 = vector.load %arg5[%c0_44, %c0_45, %c0_46] : memref<4x4x4xf32, #tpu.memory_space<vmem>>, vector<1x4x4xf32>
    %93 = vector.shape_cast %92 : vector<1x4x4xf32> to vector<4x4xf32>
    %cst_47 = arith.constant dense<0.000000e+00> : vector<4x512xf32>
    %94 = tpu.matmul %93, %91, %cst_47 {dimension_numbers = #tpu.dot_dimension_numbers<[1], [0], [0], [1], [0, 0, 1, 1], [], []>} : vector<4x4xf32>, vector<4x512xf32>, vector<4x512xf32> -> vector<4x512xf32>
    %95 = vector.extract_strided_slice %94 {offsets = [0, 0], sizes = [4, 128], strides = [1, 1]} : vector<4x512xf32> to vector<4x128xf32>
    %96 = vector.extract_strided_slice %94 {offsets = [0, 128], sizes = [4, 128], strides = [1, 1]} : vector<4x512xf32> to vector<4x128xf32>
    %97 = vector.extract_strided_slice %94 {offsets = [0, 256], sizes = [4, 128], strides = [1, 1]} : vector<4x512xf32> to vector<4x128xf32>
    %98 = vector.extract_strided_slice %94 {offsets = [0, 384], sizes = [4, 128], strides = [1, 1]} : vector<4x512xf32> to vector<4x128xf32>
    %c1_48 = arith.constant 1 : index
    %c0_49 = arith.constant 0 : index
    %c0_50 = arith.constant 0 : index
    %99 = vector.load %arg5[%c1_48, %c0_49, %c0_50] : memref<4x4x4xf32, #tpu.memory_space<vmem>>, vector<1x4x4xf32>
    %100 = vector.shape_cast %99 : vector<1x4x4xf32> to vector<4x4xf32>
    %cst_51 = arith.constant dense<0.000000e+00> : vector<4x512xf32>
    %101 = tpu.matmul %100, %91, %cst_51 {dimension_numbers = #tpu.dot_dimension_numbers<[1], [0], [0], [1], [0, 0, 1, 1], [], []>} : vector<4x4xf32>, vector<4x512xf32>, vector<4x512xf32> -> vector<4x512xf32>
    %102 = vector.extract_strided_slice %101 {offsets = [0, 0], sizes = [4, 128], strides = [1, 1]} : vector<4x512xf32> to vector<4x128xf32>
    %103 = vector.extract_strided_slice %101 {offsets = [0, 128], sizes = [4, 128], strides = [1, 1]} : vector<4x512xf32> to vector<4x128xf32>
    %104 = vector.extract_strided_slice %101 {offsets = [0, 256], sizes = [4, 128], strides = [1, 1]} : vector<4x512xf32> to vector<4x128xf32>
    %105 = vector.extract_strided_slice %101 {offsets = [0, 384], sizes = [4, 128], strides = [1, 1]} : vector<4x512xf32> to vector<4x128xf32>
    %c2_52 = arith.constant 2 : index
    %c0_53 = arith.constant 0 : index
    %c0_54 = arith.constant 0 : index
    %106 = vector.load %arg5[%c2_52, %c0_53, %c0_54] : memref<4x4x4xf32, #tpu.memory_space<vmem>>, vector<1x4x4xf32>
    %107 = vector.shape_cast %106 : vector<1x4x4xf32> to vector<4x4xf32>
    %cst_55 = arith.constant dense<0.000000e+00> : vector<4x512xf32>
    %108 = tpu.matmul %107, %91, %cst_55 {dimension_numbers = #tpu.dot_dimension_numbers<[1], [0], [0], [1], [0, 0, 1, 1], [], []>} : vector<4x4xf32>, vector<4x512xf32>, vector<4x512xf32> -> vector<4x512xf32>
    %109 = vector.extract_strided_slice %108 {offsets = [0, 0], sizes = [4, 128], strides = [1, 1]} : vector<4x512xf32> to vector<4x128xf32>
    %110 = vector.extract_strided_slice %108 {offsets = [0, 128], sizes = [4, 128], strides = [1, 1]} : vector<4x512xf32> to vector<4x128xf32>
    %111 = vector.extract_strided_slice %108 {offsets = [0, 256], sizes = [4, 128], strides = [1, 1]} : vector<4x512xf32> to vector<4x128xf32>
    %112 = vector.extract_strided_slice %108 {offsets = [0, 384], sizes = [4, 128], strides = [1, 1]} : vector<4x512xf32> to vector<4x128xf32>
    %c3_56 = arith.constant 3 : index
    %c0_57 = arith.constant 0 : index
    %c0_58 = arith.constant 0 : index
    %113 = vector.load %arg5[%c3_56, %c0_57, %c0_58] : memref<4x4x4xf32, #tpu.memory_space<vmem>>, vector<1x4x4xf32>
    %114 = vector.shape_cast %113 : vector<1x4x4xf32> to vector<4x4xf32>
    %cst_59 = arith.constant dense<0.000000e+00> : vector<4x512xf32>
    %115 = tpu.matmul %114, %91, %cst_59 {dimension_numbers = #tpu.dot_dimension_numbers<[1], [0], [0], [1], [0, 0, 1, 1], [], []>} : vector<4x4xf32>, vector<4x512xf32>, vector<4x512xf32> -> vector<4x512xf32>
    %116 = vector.extract_strided_slice %115 {offsets = [0, 0], sizes = [4, 128], strides = [1, 1]} : vector<4x512xf32> to vector<4x128xf32>
    %117 = vector.extract_strided_slice %115 {offsets = [0, 128], sizes = [4, 128], strides = [1, 1]} : vector<4x512xf32> to vector<4x128xf32>
    %118 = vector.extract_strided_slice %115 {offsets = [0, 256], sizes = [4, 128], strides = [1, 1]} : vector<4x512xf32> to vector<4x128xf32>
    %119 = vector.extract_strided_slice %115 {offsets = [0, 384], sizes = [4, 128], strides = [1, 1]} : vector<4x512xf32> to vector<4x128xf32>
    %120 = tpu.concatenate %95, %102, %109, %116, %96, %103, %110, %117, %97, %104, %111, %118, %98, %105, %112, %119 in 1 : vector<4x128xf32>, vector<4x128xf32>, vector<4x128xf32>, vector<4x128xf32>, vector<4x128xf32>, vector<4x128xf32>, vector<4x128xf32>, vector<4x128xf32>, vector<4x128xf32>, vector<4x128xf32>, vector<4x128xf32>, vector<4x128xf32>, vector<4x128xf32>, vector<4x128xf32>, vector<4x128xf32>, vector<4x128xf32> -> vector<4x2048xf32>
    %c0_60 = arith.constant 0 : index
    %c0_61 = arith.constant 0 : index
    %121 = vector.load %arg8[%c0_60, %c0_61] : memref<4x1xf32, #tpu.memory_space<vmem>>, vector<4x1xf32>
    %122 = vector.broadcast %121 : vector<4x1xf32> to vector<4x2048xf32>
    %123 = arith.addf %120, %122 : vector<4x2048xf32>
    %124 = vector.shape_cast %123 : vector<4x2048xf32> to vector<4x16x128xf32>
    %c0_62 = arith.constant 0 : index
    %c0_63 = arith.constant 0 : index
    %c19 = arith.constant 19 : index
    %c0_64 = arith.constant 0 : index
    %125 = vector.load %arg9[%c0_62, %c0_63, %c19, %c0_64] : memref<1x4x35x128xf32, #tpu.memory_space<vmem>>, vector<1x4x16x128xf32>
    %126 = vector.shape_cast %125 : vector<1x4x16x128xf32> to vector<4x16x128xf32>
    %127 = vector.shape_cast %124 : vector<4x16x128xf32> to vector<1x4x16x128xf32>
    tpu.vector_store %arg9[%c0_62, %c0_63, %c19, %c0_64], %127 {strides = array<i32>} : memref<1x4x35x128xf32, #tpu.memory_space<vmem>>, vector<1x4x16x128xf32>,
    return
  }
  func.func @transform_0(%arg0: i32, %arg1: i32) -> (i32, i32, i32, i32) {
    %c0_i32 = arith.constant 0 : i32
    %c0_i32_0 = arith.constant 0 : i32
    %c0_i32_1 = arith.constant 0 : i32
    return %arg0, %c0_i32, %c0_i32_0, %arg1 : i32, i32, i32, i32
  }
  func.func @transform_1(%arg0: i32, %arg1: i32) -> (i32, i32, i32) {
    %c0_i32 = arith.constant 0 : i32
    %c0_i32_0 = arith.constant 0 : i32
    %c0_i32_1 = arith.constant 0 : i32
    %c0_i32_2 = arith.constant 0 : i32
    return %c0_i32, %c0_i32_0, %c0_i32_1 : i32, i32, i32
  }
  func.func @transform_2(%arg0: i32, %arg1: i32) -> (i32, i32, i32) {
    %c0_i32 = arith.constant 0 : i32
    %c0_i32_0 = arith.constant 0 : i32
    %c0_i32_1 = arith.constant 0 : i32
    %c0_i32_2 = arith.constant 0 : i32
    return %c0_i32, %c0_i32_0, %c0_i32_1 : i32, i32, i32
  }
  func.func @transform_3(%arg0: i32, %arg1: i32) -> (i32, i32, i32) {
    %c0_i32 = arith.constant 0 : i32
    %c0_i32_0 = arith.constant 0 : i32
    %c0_i32_1 = arith.constant 0 : i32
    %c0_i32_2 = arith.constant 0 : i32
    return %c0_i32, %c0_i32_0, %c0_i32_1 : i32, i32, i32
  }
  func.func @transform_4(%arg0: i32, %arg1: i32) -> (i32, i32) {
    %c0_i32 = arith.constant 0 : i32
    %c0_i32_0 = arith.constant 0 : i32
    %c0_i32_1 = arith.constant 0 : i32
    return %c0_i32, %c0_i32_0 : i32, i32
  }
  func.func @transform_5(%arg0: i32, %arg1: i32) -> (i32, i32) {
    %c0_i32 = arith.constant 0 : i32
    %c0_i32_0 = arith.constant 0 : i32
    %c0_i32_1 = arith.constant 0 : i32
    return %c0_i32, %c0_i32_0 : i32, i32
  }
  func.func @transform_6(%arg0: i32, %arg1: i32) -> (i32, i32) {
    %c0_i32 = arith.constant 0 : i32
    %c0_i32_0 = arith.constant 0 : i32
    %c0_i32_1 = arith.constant 0 : i32
    return %c0_i32, %c0_i32_0 : i32, i32
  }
  func.func @transform_7(%arg0: i32, %arg1: i32) -> (i32, i32, i32, i32) {
    %c0_i32 = arith.constant 0 : i32
    %c0_i32_0 = arith.constant 0 : i32
    %c0_i32_1 = arith.constant 0 : i32
    return %arg0, %c0_i32, %c0_i32_0, %arg1 : i32, i32, i32, i32
  }
}

</mosaic_0001>

<llo_original>
// kernel: tpu_custom_call.1
$region0: #{tpu_custom_call.1}
  #allocation0 [shape = 'u32[]', space=smem, size = 0x4, offset = 0x4, fixed_abs, tag = 'smem constant byte address 0x4 - core index']
  #allocation1 [shape = 'u32[144,128]{1,0:T(1,128)}', space=vmem, size = 0x12000, scoped, tag = 'internal scratch']
  %s0 = inlined_call_operand.hbm [shape: f32[2,4,16,128], index: 0, kind: input, shape index: {}]
  %s1 = inlined_call_operand.hbm [shape: f32[3,4,4], index: 1, kind: input, shape index: {}]
  %s2 = inlined_call_operand.vmem [shape: f32[4,4,4], index: 2, kind: input, shape index: {}]
  %s3 = inlined_call_operand.hbm [shape: f32[4,4,4], index: 3, kind: input, shape index: {}]
  %s4 = inlined_call_operand.vmem [shape: f32[4,1], index: 4, kind: input, shape index: {}]
  %s5 = inlined_call_operand.vmem [shape: f32[4,1], index: 5, kind: input, shape index: {}]
  %s6 = inlined_call_operand.vmem [shape: f32[4,1], index: 6, kind: input, shape index: {}]
  %s7 = inlined_call_operand.vmem [shape: f32[2,4,35,128], index: 7, kind: output, shape index: {}]
  %s8 = sld [smem:[#allocation0]]
  $region73: #{tpu_custom_call.1} parent=0
    _
  %s10 = ssub.s32 1, %s8
  %s11 = scalar_select 0, %s10, %s8
  $region1: #{tpu_custom_call.1} parent=0
    #allocation2 [shape = 'u8[65536]{0}', space=vmem, size = 0x10000, scoped, tag = 'input window, operand 0']
    #allocation3 [shape = 's32[2]{0}', space=sflag, size = 0x8, scoped, tag = 'scoped memory for tpu_custom_call.1']
    #allocation4 [shape = 'u8[6144]{0}', space=vmem, size = 0x1800, scoped, tag = 'input window, operand 1, single buffered']
    #allocation5 [shape = 's32[1]{0}', space=sflag, size = 0x4, scoped, tag = 'scoped memory for tpu_custom_call.1']
    #allocation6 [shape = 'u8[8192]{0}', space=vmem, size = 0x2000, scoped, tag = 'input window, operand 3, single buffered']
    %12 = vsyncpa [#allocation3], 0
    %s13 = scalar_lea.sflag [#allocation3], 1
    %14 = vsyncpa %s13, 0
    %15 = vsyncpa [#allocation5], 0
    loop: start=0, step=1, limit=4
    $region2: #{tpu_custom_call.1} parent=1 // loop_pre_header
      _
    $region3: #{tpu_custom_call.1} parent=1 // loop_header
      %s17 = sphi 0, %s21
      %p18 = scmp.ge.s32.totalorder %s17, 4
      %s24 = sphi 0, %s36
      %s25 = sphi 0, %s32
      %s26 = sphi 0, %s24
      %s27 = sphi 0, %s25
      %s28 = sphi 0, %s26
      %s29 = sphi 0, %s27
      %s41 = sphi 0, %s43
      %s44 = sphi 0, %s41
      %s45 = sphi 0, %s44
      %s61 = sphi 0, %s45
      %s65 = sphi 0, %s65
      %s67 = sphi 0, %s65
      %s68 = sphi 0, %s67
      %s82 = sphi 0, %s68
      %s86 = sphi 0, %s86
      %s88 = sphi 0, %s86
      %s89 = sphi 0, %s88
      %s103 = sphi 0, %s89
      %s107 = sphi 0, %s107
      %s109 = sphi 0, %s107
      %s110 = sphi 0, %s109
      %s124 = sphi 0, %s110
      %s128 = sphi 0, %s128
      %s130 = sphi 0, %s128
      %s131 = sphi 0, %s130
      %s145 = sphi 0, %s131
      %s149 = sphi 0, %s149
      %s151 = sphi 0, %s149
      %s152 = sphi 0, %s151
      %s166 = sphi 0, %s152
      %s170 = sphi 0, %s170
      %s172 = sphi 0, %s170
      %s173 = sphi 0, %s172
      %s187 = sphi 0, %s173
      %s195 = sphi 0, %s197
      %s198 = sphi 0, %s195
      %s199 = sphi 0, %s198
      %s215 = sphi 0, %s199
    $region4: #{tpu_custom_call.1} parent=1 // loop_header_branch
      %20 = sbr.rel (%p18) target = $region8
    $region5: #{tpu_custom_call.1} parent=1 // loop_body
      %s22 = ssub.s32 %s17, 1
      %s23 = ssub.s32 %s17, 2
      %s30 = sadd.s32 1, %s25
      %p31 = scmp.ge.s32.totalorder %s30, 1
      %s32 = scalar_select %p31, 0, %s30
      %s33 = sadd.s32 1, %s24
      %s34 = scalar_select %p31, %s33, %s24
      %p35 = scmp.ge.s32.totalorder %s34, 2
      %s36 = scalar_select %p35, 0, %s34
      %s37 = ssub.s32 %s24, %s36
      %s38 = ssub.s32 %s25, %s32
      %s39 = sor.u32 %s37, %s38
      %p40 = scmp.eq.s32.totalorder %s39, 0
      %s42 = sadd.s32 %s41, 1
      %s43 = scalar_select %p40, %s41, %s42
      %p46 = pneg %p40
      %p47 = scmp.eq.s32.totalorder %s17, 1
      %p48 = por %p46, %p47
      %p49 = scmp.ne.s32.totalorder %s41, %s44
      %p50 = scmp.eq.s32.totalorder %s17, 0
      %p51 = por %p49, %p50
      %p52 = scmp.ne.s32.totalorder %s41, %s44
      %p53 = scmp.eq.s32.totalorder %s22, 1
      %p54 = por %p52, %p53
      %p55 = scmp.ne.s32.totalorder %s44, %s45
      %p56 = scmp.eq.s32.totalorder %s22, 0
      %p57 = por %p55, %p56
      %p58 = scmp.ne.s32.totalorder %s44, %s45
      %p59 = scmp.eq.s32.totalorder %s23, 1
      %p60 = por %p58, %p59
      %p62 = scmp.ne.s32.totalorder %s45, %s61
      %p63 = scmp.eq.s32.totalorder %s23, 0
      %p64 = por %p62, %p63
      %s66 = sadd.s32 %s65, 1
      %p69 = scmp.eq.s32.totalorder %s17, 1
      %p70 = scmp.ne.s32.totalorder %s65, %s67
      %p71 = scmp.eq.s32.totalorder %s17, 0
      %p72 = por %p70, %p71
      %p73 = scmp.ne.s32.totalorder %s65, %s67
      %p74 = scmp.eq.s32.totalorder %s22, 1
      %p75 = por %p73, %p74
      %p76 = scmp.ne.s32.totalorder %s67, %s68
      %p77 = scmp.eq.s32.totalorder %s22, 0
      %p78 = por %p76, %p77
      %p79 = scmp.ne.s32.totalorder %s67, %s68
      %p80 = scmp.eq.s32.totalorder %s23, 1
      %p81 = por %p79, %p80
      %p83 = scmp.ne.s32.totalorder %s68, %s82
      %p84 = scmp.eq.s32.totalorder %s23, 0
      %p85 = por %p83, %p84
      %s87 = sadd.s32 %s86, 1
      %p90 = scmp.eq.s32.totalorder %s17, 1
      %p91 = scmp.ne.s32.totalorder %s86, %s88
      %p92 = scmp.eq.s32.totalorder %s17, 0
      %p93 = por %p91, %p92
      %p94 = scmp.ne.s32.totalorder %s86, %s88
      %p95 = scmp.eq.s32.totalorder %s22, 1
      %p96 = por %p94, %p95
      %p97 = scmp.ne.s32.totalorder %s88, %s89
      %p98 = scmp.eq.s32.totalorder %s22, 0
      %p99 = por %p97, %p98
      %p100 = scmp.ne.s32.totalorder %s88, %s89
      %p101 = scmp.eq.s32.totalorder %s23, 1
      %p102 = por %p100, %p101
      %p104 = scmp.ne.s32.totalorder %s89, %s103
      %p105 = scmp.eq.s32.totalorder %s23, 0
      %p106 = por %p104, %p105
      %s108 = sadd.s32 %s107, 1
      %p111 = scmp.eq.s32.totalorder %s17, 1
      %p112 = scmp.ne.s32.totalorder %s107, %s109
      %p113 = scmp.eq.s32.totalorder %s17, 0
      %p114 = por %p112, %p113
      %p115 = scmp.ne.s32.totalorder %s107, %s109
      %p116 = scmp.eq.s32.totalorder %s22, 1
      %p117 = por %p115, %p116
      %p118 = scmp.ne.s32.totalorder %s109, %s110
      %p119 = scmp.eq.s32.totalorder %s22, 0
      %p120 = por %p118, %p119
      %p121 = scmp.ne.s32.totalorder %s109, %s110
      %p122 = scmp.eq.s32.totalorder %s23, 1
      %p123 = por %p121, %p122
      %p125 = scmp.ne.s32.totalorder %s110, %s124
      %p126 = scmp.eq.s32.totalorder %s23, 0
      %p127 = por %p125, %p126
      %s129 = sadd.s32 %s128, 1
      %p132 = scmp.eq.s32.totalorder %s17, 1
      %p133 = scmp.ne.s32.totalorder %s128, %s130
      %p134 = scmp.eq.s32.totalorder %s17, 0
      %p135 = por %p133, %p134
      %p136 = scmp.ne.s32.totalorder %s128, %s130
      %p137 = scmp.eq.s32.totalorder %s22, 1
      %p138 = por %p136, %p137
      %p139 = scmp.ne.s32.totalorder %s130, %s131
      %p140 = scmp.eq.s32.totalorder %s22, 0
      %p141 = por %p139, %p140
      %p142 = scmp.ne.s32.totalorder %s130, %s131
      %p143 = scmp.eq.s32.totalorder %s23, 1
      %p144 = por %p142, %p143
      %p146 = scmp.ne.s32.totalorder %s131, %s145
      %p147 = scmp.eq.s32.totalorder %s23, 0
      %p148 = por %p146, %p147
      %s150 = sadd.s32 %s149, 1
      %p153 = scmp.eq.s32.totalorder %s17, 1
      %p154 = scmp.ne.s32.totalorder %s149, %s151
      %p155 = scmp.eq.s32.totalorder %s17, 0
      %p156 = por %p154, %p155
      %p157 = scmp.ne.s32.totalorder %s149, %s151
      %p158 = scmp.eq.s32.totalorder %s22, 1
      %p159 = por %p157, %p158
      %p160 = scmp.ne.s32.totalorder %s151, %s152
      %p161 = scmp.eq.s32.totalorder %s22, 0
      %p162 = por %p160, %p161
      %p163 = scmp.ne.s32.totalorder %s151, %s152
      %p164 = scmp.eq.s32.totalorder %s23, 1
      %p165 = por %p163, %p164
      %p167 = scmp.ne.s32.totalorder %s152, %s166
      %p168 = scmp.eq.s32.totalorder %s23, 0
      %p169 = por %p167, %p168
      %s171 = sadd.s32 %s170, 1
      %p174 = scmp.eq.s32.totalorder %s17, 1
      %p175 = scmp.ne.s32.totalorder %s170, %s172
      %p176 = scmp.eq.s32.totalorder %s17, 0
      %p177 = por %p175, %p176
      %p178 = scmp.ne.s32.totalorder %s170, %s172
      %p179 = scmp.eq.s32.totalorder %s22, 1
      %p180 = por %p178, %p179
      %p181 = scmp.ne.s32.totalorder %s172, %s173
      %p182 = scmp.eq.s32.totalorder %s22, 0
      %p183 = por %p181, %p182
      %p184 = scmp.ne.s32.totalorder %s172, %s173
      %p185 = scmp.eq.s32.totalorder %s23, 1
      %p186 = por %p184, %p185
      %p188 = scmp.ne.s32.totalorder %s173, %s187
      %p189 = scmp.eq.s32.totalorder %s23, 0
      %p190 = por %p188, %p189
      %s191 = ssub.s32 %s24, %s36
      %s192 = ssub.s32 %s25, %s32
      %s193 = sor.u32 %s191, %s192
      %p194 = scmp.eq.s32.totalorder %s193, 0
      %s196 = sadd.s32 %s195, 1
      %s197 = scalar_select %p194, %s195, %s196
      %p200 = pneg %p194
      %p201 = scmp.eq.s32.totalorder %s17, 1
      %p202 = por %p200, %p201
      %p203 = scmp.ne.s32.totalorder %s195, %s198
      %p204 = scmp.eq.s32.totalorder %s17, 0
      %p205 = por %p203, %p204
      %p206 = scmp.ne.s32.totalorder %s195, %s198
      %p207 = scmp.eq.s32.totalorder %s22, 1
      %p208 = por %p206, %p207
      %p209 = scmp.ne.s32.totalorder %s198, %s199
      %p210 = scmp.eq.s32.totalorder %s22, 0
      %p211 = por %p209, %p210
      %p212 = scmp.ne.s32.totalorder %s198, %s199
      %p213 = scmp.eq.s32.totalorder %s23, 1
      %p214 = por %p212, %p213
      %p216 = scmp.ne.s32.totalorder %s199, %s215
      %p217 = scmp.eq.s32.totalorder %s23, 0
      %p218 = por %p216, %p217
      %p219 = scmp.le.s32.totalorder 1, %s17
      %p220 = scmp.lt.s32.totalorder %s17, 3
      %p221 = pnand %p219, %p220
      %p222 = pneg %p221
      // Predicated region
      $region9: #{tpu_custom_call.1} parent=5 // pred_check
        _
      $region10: #{tpu_custom_call.1} parent=5 // pred_check_branch
        %224 = sbr.rel (%p221) target = $region12
      $region11: #{tpu_custom_call.1} parent=5 // pred_region
        %s225 = ssub.s32 %s17, 1
        // Predicated region
        $region13: #{tpu_custom_call.1} parent=11 // pred_check
          %p226 = pneg %p78
        $region14: #{tpu_custom_call.1} parent=11 // pred_check_branch
          %228 = sbr.rel (%p226) target = $region16
        $region15: #{tpu_custom_call.1} parent=11 // pred_region
          %s230 = ssub.s32 192, 192
          %231 = vsyncadd [#allocation5], %s230
          %s232 = sshll.u32 [#allocation4], 4
          %s233 = int_to_ptr.vmem [resolvable:$true] %s232
          %238 = dma.hbm_to_vmem [thread:$0]  %s1, 192, %s233, [#allocation5], 64, 64, 4
        $region16: #{tpu_custom_call.1} parent=11 // pred_fallthru
          _
        // Predicated region
        $region17: #{tpu_custom_call.1} parent=11 // pred_check
          %p239 = pneg %p99
        $region18: #{tpu_custom_call.1} parent=11 // pred_check_branch
          %241 = sbr.rel (%p239) target = $region20
        $region19: #{tpu_custom_call.1} parent=11 // pred_region
          _
        $region20: #{tpu_custom_call.1} parent=11 // pred_fallthru
          _
        // Predicated region
        $region21: #{tpu_custom_call.1} parent=11 // pred_check
          %p242 = pneg %p120
        $region22: #{tpu_custom_call.1} parent=11 // pred_check_branch
          %244 = sbr.rel (%p242) target = $region24
        $region23: #{tpu_custom_call.1} parent=11 // pred_region
          %s246 = ssub.s32 256, 256
          %247 = vsyncadd [#allocation5], %s246
          %s248 = sshll.u32 [#allocation6], 4
          %s249 = int_to_ptr.vmem [resolvable:$true] %s248
          %254 = dma.hbm_to_vmem [thread:$0]  %s3, 256, %s249, [#allocation5], 64, 64, 4
        $region24: #{tpu_custom_call.1} parent=11 // pred_fallthru
          _
        // Predicated region
        $region25: #{tpu_custom_call.1} parent=11 // pred_check
          %p255 = pneg %p141
        $region26: #{tpu_custom_call.1} parent=11 // pred_check_branch
          %257 = sbr.rel (%p255) target = $region28
        $region27: #{tpu_custom_call.1} parent=11 // pred_region
          _
        $region28: #{tpu_custom_call.1} parent=11 // pred_fallthru
          _
        // Predicated region
        $region29: #{tpu_custom_call.1} parent=11 // pred_check
          %p258 = pneg %p162
        $region30: #{tpu_custom_call.1} parent=11 // pred_check_branch
          %260 = sbr.rel (%p258) target = $region32
        $region31: #{tpu_custom_call.1} parent=11 // pred_region
          _
        $region32: #{tpu_custom_call.1} parent=11 // pred_fallthru
          _
        // Predicated region
        $region33: #{tpu_custom_call.1} parent=11 // pred_check
          %p261 = pneg %p183
        $region34: #{tpu_custom_call.1} parent=11 // pred_check_branch
          %263 = sbr.rel (%p261) target = $region36
        $region35: #{tpu_custom_call.1} parent=11 // pred_region
          _
        $region36: #{tpu_custom_call.1} parent=11 // pred_fallthru
          _
      $region12: #{tpu_custom_call.1} parent=5 // pred_fallthru
        _
      %p264 = scmp.lt.s32.totalorder %s17, 2
      // Predicated region
      $region37: #{tpu_custom_call.1} parent=5 // pred_check
        %p265 = pneg %p264
      $region38: #{tpu_custom_call.1} parent=5 // pred_check_branch
        %267 = sbr.rel (%p265) target = $region40
      $region39: #{tpu_custom_call.1} parent=5 // pred_region
        // Predicated region
        $region41: #{tpu_custom_call.1} parent=39 // pred_check
          %p268 = pneg %p51
        $region42: #{tpu_custom_call.1} parent=39 // pred_check_branch
          %270 = sbr.rel (%p268) target = $region44
        $region43: #{tpu_custom_call.1} parent=39 // pred_region
          %s271 = sand.u32 %s41, 1
          %s272 = scalar_lea.sflag [#allocation3], %s271
          %s273 = sand.u32 %s41, 1
          %s274 = smul.addr %s273, 64
          %s275 = scalar_lea.vmem [#allocation2], %s274
          %s277 = ssub.s32 1024, 1024
          %278 = vsyncadd %s272, %s277
          %s279 = smul.addr %s24, 8
          %s280 = sadd.s32 %s25, %s279
          %s281 = smul.addr %s280, 128
          %s282 = scalar_lea.hbm %s0, %s281
          %s283 = sshll.u32 %s275, 4
          %s284 = int_to_ptr.vmem [resolvable:$true] %s283
          %289 = dma.hbm_to_vmem [thread:$0]  %s282, 1024, %s284, %s272, 128, 128, 8
        $region44: #{tpu_custom_call.1} parent=39 // pred_fallthru
          _
      $region40: #{tpu_custom_call.1} parent=5 // pred_fallthru
        _
      %p290 = scmp.le.s32.totalorder 1, %s17
      %p291 = scmp.lt.s32.totalorder %s17, 3
      %p292 = pnand %p290, %p291
      %p293 = pneg %p292
      // Predicated region
      $region45: #{tpu_custom_call.1} parent=5 // pred_check
        _
      $region46: #{tpu_custom_call.1} parent=5 // pred_check_branch
        %295 = sbr.rel (%p292) target = $region48
      $region47: #{tpu_custom_call.1} parent=5 // pred_region
        %s296 = ssub.s32 %s17, 1
        %s297 = sand.u32 %s44, 1
        %s298 = scalar_lea.sflag [#allocation3], %s297
        %s299 = sand.u32 %s44, 1
        %s300 = smul.addr %s299, 64
        %s301 = scalar_lea.vmem [#allocation2], %s300
        // Predicated region
        $region49: #{tpu_custom_call.1} parent=47 // pred_check
          %p302 = pneg %p57
        $region50: #{tpu_custom_call.1} parent=47 // pred_check_branch
          %304 = sbr.rel (%p302) target = $region52
        $region51: #{tpu_custom_call.1} parent=47 // pred_region
          %305 = dma.done %s298, 1024
        $region52: #{tpu_custom_call.1} parent=47 // pred_fallthru
          _
        // Predicated region
        $region53: #{tpu_custom_call.1} parent=47 // pred_check
          %p306 = pneg %p78
        $region54: #{tpu_custom_call.1} parent=47 // pred_check_branch
          %308 = sbr.rel (%p306) target = $region56
        $region55: #{tpu_custom_call.1} parent=47 // pred_region
          %309 = dma.done [#allocation5], 192
        $region56: #{tpu_custom_call.1} parent=47 // pred_fallthru
          _
        // Predicated region
        $region57: #{tpu_custom_call.1} parent=47 // pred_check
          %p310 = pneg %p120
        $region58: #{tpu_custom_call.1} parent=47 // pred_check_branch
          %312 = sbr.rel (%p310) target = $region60
        $region59: #{tpu_custom_call.1} parent=47 // pred_region
          %313 = dma.done [#allocation5], 256
        $region60: #{tpu_custom_call.1} parent=47 // pred_fallthru
          _
        %s314 = sand.u32 %s44, 1
        %s315 = scalar_lea.sflag [#allocation3], %s314
        %s316 = sand.u32 %s44, 1
        %s317 = smul.addr %s316, 64
        %s318 = scalar_lea.vmem [#allocation2], %s317
        %p319 = pneg %p57
        %p320 = pneg %p54
        %p321 = pneg %p78
        %p322 = pneg %p75
        %p323 = pneg %p99
        %p324 = pneg %p96
        %p325 = pneg %p120
        %p326 = pneg %p117
        %p327 = pneg %p141
        %p328 = pneg %p138
        %p329 = pneg %p162
        %p330 = pneg %p159
        %p331 = pneg %p183
        %p332 = pneg %p180
        %p333 = pneg %p211
        %p334 = pneg %p208
        %p335 = scmp.lt.s32.totalorder %s26, 1
        %s336 = scalar_select %p335, %s26, 1
        %p337 = scmp.lt.s32.totalorder %s27, 0
        %s338 = scalar_select %p337, %s27, 0
        %s339 = smul.addr %s336, 20
        %s340 = sadd.s32 %s338, %s339
        %s341 = smul.addr %s340, 8
        %s342 = scalar_lea.vmem %s7, %s341
        %p343 = scmp.lt.s32.totalorder %s26, 1
        %s344 = scalar_select %p343, %s26, 1
        %p345 = scmp.lt.s32.totalorder %s27, 0
        %s346 = scalar_select %p345, %s27, 0
        %s347 = smul.addr %s344, 20
        %s348 = sadd.s32 %s346, %s347
        %s349 = smul.addr %s348, 8
        %s350 = scalar_lea.vmem %s7, %s349
        %v351 = vld [vmem:[%s301] sm:$0x3f]
        %v352 = vld [vmem:[%s301 + $0x10] sm:$0x3f]
        %v353 = vld [vmem:[%s301 + $0x20] sm:$0x3f]
        %v354 = vld [vmem:[%s301 + $0x30] sm:$0x3f]
        %v355 = vcombine.low %v351, %v353
        %v356 = vcombine.high %v351, %v353
        %v358 = vunpack.c.l.s4 1983009808
        %v359 = vunpack.c.0.s8 %v358
        %v360 = vlaneseq
        %v361 = vshrl.u32 %v360, 7
        %v362 = vsub.s32 %v359, %v361
        %v363 = vrot.slane %v355, %v362
        %v365 = vunpack.c.l.s4 1983009808
        %v366 = vunpack.c.0.s8 %v365
        %v367 = vlaneseq
        %v368 = vshrl.u32 %v367, 7
        %v369 = vsub.s32 %v366, %v368
        %v370 = vrot.slane %v356, %v369
        %v371 = vcombine.low %v352, %v354
        %v372 = vcombine.high %v352, %v354
        %v374 = vunpack.c.l.s4 1983009808
        %v375 = vunpack.c.0.s8 %v374
        %v376 = vlaneseq
        %v377 = vshrl.u32 %v376, 7
        %v378 = vsub.s32 %v375, %v377
        %v379 = vrot.slane %v371, %v378
        %v381 = vunpack.c.l.s4 1983009808
        %v382 = vunpack.c.0.s8 %v381
        %v383 = vlaneseq
        %v384 = vshrl.u32 %v383, 7
        %v385 = vsub.s32 %v382, %v384
        %v386 = vrot.slane %v372, %v385
        %v387 = vcombine.low %v363, %v379
        %v388 = vcombine.high %v363, %v379
        %v390 = vunpack.c.l.s4 1934713408
        %v391 = vunpack.c.0.s8 %v390
        %v392 = vlaneseq
        %v393 = vshrl.u32 %v392, 7
        %v394 = vsub.s32 %v391, %v393
        %v395 = vrot.slane %v387, %v394
        %v397 = vunpack.c.l.s4 1934713408
        %v398 = vunpack.c.0.s8 %v397
        %v399 = vlaneseq
        %v400 = vshrl.u32 %v399, 7
        %v401 = vsub.s32 %v398, %v400
        %v402 = vrot.slane %v388, %v401
        %v403 = vcombine.low %v370, %v386
        %v405 = vunpack.c.l.s4 1934713408
        %v406 = vunpack.c.0.s8 %v405
        %v407 = vlaneseq
        %v408 = vshrl.u32 %v407, 7
        %v409 = vsub.s32 %v406, %v408
        %v410 = vrot.slane %v403, %v409
        %v411 = vcombine.high %v395, 0.0
        %v412 = vcombine.high %v402, 0.0
        %v413 = vcombine.high %v410, 0.0
        %v414 = vld [vmem:[#allocation4] sm:$0xf]
        %vm415 = vcmask 31744
        %v417 = vsel %vm415, %v414, 0
        %vm419 = vcmask 1043456
        %v421 = vsel %vm419, %v395, 0
        %v424 = vsel %vm419, %v411, 0
        %v427 = vsel %vm419, %v402, 0
        %v430 = vsel %vm419, %v412, 0
        %v433 = vsel %vm419, %v410, 0
        %v436 = vsel %vm419, %v413, 0
        %438 = vmatprep.subr.mxu0 %v424
        %439 = vmatpush1.msra.mxu0 %v421
        %440 = vmatprep.subr.mxu0 0.0
        %441 = vmatpush1.msra.mxu0 0.0
        %442 = vmatprep.subr.mxu0 0.0
        %443 = vmatpush1.msra.mxu0 0.0
        %444 = vmatprep.subr.mxu0 0.0
        %445 = vmatpush1.msra.mxu0 0.0
        %446 = vmatprep.subr.mxu0 0.0
        %447 = vmatpush1.msra.mxu0 0.0
        %448 = vmatprep.subr.mxu0 0.0
        %449 = vmatpush1.msra.mxu0 0.0
        %450 = vmatprep.subr.mxu0 0.0
        %451 = vmatpush1.msra.mxu0 0.0
        %452 = vmatprep.subr.mxu0 0.0
        %453 = vmatpush1.msra.mxu0 0.0
        %454 = vmatprep.subr.mxu0 0.0
        %455 = vmatpush1.msra.mxu0 0.0
        %456 = vmatprep.subr.mxu0 0.0
        %457 = vmatpush1.msra.mxu0 0.0
        %458 = vmatprep.subr.mxu0 0.0
        %459 = vmatpush1.msra.mxu0 0.0
        %460 = vmatprep.subr.mxu0 0.0
        %461 = vmatpush1.msra.mxu0 0.0
        %462 = vmatprep.subr.mxu0 0.0
        %463 = vmatpush1.msra.mxu0 0.0
        %464 = vmatprep.subr.mxu0 0.0
        %465 = vmatpush1.msra.mxu0 0.0
        %466 = vmatprep.subr.mxu0 0.0
        %467 = vmatpush1.msra.mxu0 0.0
        %468 = vmatprep.subr.mxu0 0.0
        %469 = vmatpush1.msra.mxu0 0.0
        %470 = vmatprep.subr.mxu0 0.0
        %471 = vmatpush1.msra.mxu0 0.0
        %472 = vmatprep.subr.mxu0 0.0
        %473 = vmatpush1.msra.mxu0 0.0
        %474 = vmatprep.subr.mxu0 0.0
        %475 = vmatpush1.msra.mxu0 0.0
        %476 = vmatprep.subr.mxu0 0.0
        %477 = vmatpush1.msra.mxu0 0.0
        %478 = vmatprep.subr.mxu0 0.0
        %479 = vmatpush1.msra.mxu0 0.0
        %480 = vmatprep.subr.mxu0 0.0
        %481 = vmatpush1.msra.mxu0 0.0
        %482 = vmatprep.subr.mxu0 0.0
        %483 = vmatpush1.msra.mxu0 0.0
        %484 = vmatprep.subr.mxu0 0.0
        %485 = vmatpush1.msra.mxu0 0.0
        %486 = vmatprep.subr.mxu0 0.0
        %487 = vmatpush1.msra.mxu0 0.0
        %488 = vmatprep.subr.mxu0 0.0
        %489 = vmatpush1.msra.mxu0 0.0
        %490 = vmatprep.subr.mxu0 0.0
        %491 = vmatpush1.msra.mxu0 0.0
        %492 = vmatprep.subr.mxu0 0.0
        %493 = vmatpush1.msra.mxu0 0.0
        %494 = vmatprep.subr.mxu0 0.0
        %495 = vmatpush1.msra.mxu0 0.0
        %496 = vmatprep.subr.mxu0 0.0
        %497 = vmatpush1.msra.mxu0 0.0
        %498 = vmatprep.subr.mxu0 0.0
        %499 = vmatpush1.msra.mxu0 0.0
        %500 = vmatprep.subr.mxu0 0.0
        %501 = vmatpush1.msra.mxu0 0.0
        %502 = vmatprep.mubr.f32.mxu0 0.0
        %503 = vmatmul.mubr.f32.gmra.mrb[0].mxu0 %v417
        %v504 = vpop.f32.mrb[0].mxu0
        %v505 = vadd.f32 0.0, %v504
        %v506 = vpop.f32.mrb[0].mxu0
        %v507 = vadd.f32 0.0, %v506
        %508 = vdwg.mxu0
        %509 = vmatprep.subr.mxu0 %v430
        %510 = vmatpush1.msra.mxu0 %v427
        %511 = vmatprep.subr.mxu0 0.0
        %512 = vmatpush1.msra.mxu0 0.0
        %513 = vmatprep.subr.mxu0 0.0
        %514 = vmatpush1.msra.mxu0 0.0
        %515 = vmatprep.subr.mxu0 0.0
        %516 = vmatpush1.msra.mxu0 0.0
        %517 = vmatprep.subr.mxu0 0.0
        %518 = vmatpush1.msra.mxu0 0.0
        %519 = vmatprep.subr.mxu0 0.0
        %520 = vmatpush1.msra.mxu0 0.0
        %521 = vmatprep.subr.mxu0 0.0
        %522 = vmatpush1.msra.mxu0 0.0
        %523 = vmatprep.subr.mxu0 0.0
        %524 = vmatpush1.msra.mxu0 0.0
        %525 = vmatprep.subr.mxu0 0.0
        %526 = vmatpush1.msra.mxu0 0.0
        %527 = vmatprep.subr.mxu0 0.0
        %528 = vmatpush1.msra.mxu0 0.0
        %529 = vmatprep.subr.mxu0 0.0
        %530 = vmatpush1.msra.mxu0 0.0
        %531 = vmatprep.subr.mxu0 0.0
        %532 = vmatpush1.msra.mxu0 0.0
        %533 = vmatprep.subr.mxu0 0.0
        %534 = vmatpush1.msra.mxu0 0.0
        %535 = vmatprep.subr.mxu0 0.0
        %536 = vmatpush1.msra.mxu0 0.0
        %537 = vmatprep.subr.mxu0 0.0
        %538 = vmatpush1.msra.mxu0 0.0
        %539 = vmatprep.subr.mxu0 0.0
        %540 = vmatpush1.msra.mxu0 0.0
        %541 = vmatprep.subr.mxu0 0.0
        %542 = vmatpush1.msra.mxu0 0.0
        %543 = vmatprep.subr.mxu0 0.0
        %544 = vmatpush1.msra.mxu0 0.0
        %545 = vmatprep.subr.mxu0 0.0
        %546 = vmatpush1.msra.mxu0 0.0
        %547 = vmatprep.subr.mxu0 0.0
        %548 = vmatpush1.msra.mxu0 0.0
        %549 = vmatprep.subr.mxu0 0.0
        %550 = vmatpush1.msra.mxu0 0.0
        %551 = vmatprep.subr.mxu0 0.0
        %552 = vmatpush1.msra.mxu0 0.0
        %553 = vmatprep.subr.mxu0 0.0
        %554 = vmatpush1.msra.mxu0 0.0
        %555 = vmatprep.subr.mxu0 0.0
        %556 = vmatpush1.msra.mxu0 0.0
        %557 = vmatprep.subr.mxu0 0.0
        %558 = vmatpush1.msra.mxu0 0.0
        %559 = vmatprep.subr.mxu0 0.0
        %560 = vmatpush1.msra.mxu0 0.0
        %561 = vmatprep.subr.mxu0 0.0
        %562 = vmatpush1.msra.mxu0 0.0
        %563 = vmatprep.subr.mxu0 0.0
        %564 = vmatpush1.msra.mxu0 0.0
        %565 = vmatprep.subr.mxu0 0.0
        %566 = vmatpush1.msra.mxu0 0.0
        %567 = vmatprep.subr.mxu0 0.0
        %568 = vmatpush1.msra.mxu0 0.0
        %569 = vmatprep.subr.mxu0 0.0
        %570 = vmatpush1.msra.mxu0 0.0
        %571 = vmatprep.subr.mxu0 0.0
        %572 = vmatpush1.msra.mxu0 0.0
        %573 = vmatprep.mubr.f32.mxu0 0.0
        %574 = vmatmul.mubr.f32.gmra.mrb[0].mxu0 %v417
        %v575 = vpop.f32.mrb[0].mxu0
        %v576 = vadd.f32 0.0, %v575
        %v577 = vpop.f32.mrb[0].mxu0
        %v578 = vadd.f32 0.0, %v577
        %579 = vdwg.mxu0
        %580 = vmatprep.subr.mxu0 %v436
        %581 = vmatpush1.msra.mxu0 %v433
        %582 = vmatprep.subr.mxu0 0.0
        %583 = vmatpush1.msra.mxu0 0.0
        %584 = vmatprep.subr.mxu0 0.0
        %585 = vmatpush1.msra.mxu0 0.0
        %586 = vmatprep.subr.mxu0 0.0
        %587 = vmatpush1.msra.mxu0 0.0
        %588 = vmatprep.subr.mxu0 0.0
        %589 = vmatpush1.msra.mxu0 0.0
        %590 = vmatprep.subr.mxu0 0.0
        %591 = vmatpush1.msra.mxu0 0.0
        %592 = vmatprep.subr.mxu0 0.0
        %593 = vmatpush1.msra.mxu0 0.0
        %594 = vmatprep.subr.mxu0 0.0
        %595 = vmatpush1.msra.mxu0 0.0
        %596 = vmatprep.subr.mxu0 0.0
        %597 = vmatpush1.msra.mxu0 0.0
        %598 = vmatprep.subr.mxu0 0.0
        %599 = vmatpush1.msra.mxu0 0.0
        %600 = vmatprep.subr.mxu0 0.0
        %601 = vmatpush1.msra.mxu0 0.0
        %602 = vmatprep.subr.mxu0 0.0
        %603 = vmatpush1.msra.mxu0 0.0
        %604 = vmatprep.subr.mxu0 0.0
        %605 = vmatpush1.msra.mxu0 0.0
        %606 = vmatprep.subr.mxu0 0.0
        %607 = vmatpush1.msra.mxu0 0.0
        %608 = vmatprep.subr.mxu0 0.0
        %609 = vmatpush1.msra.mxu0 0.0
        %610 = vmatprep.subr.mxu0 0.0
        %611 = vmatpush1.msra.mxu0 0.0
        %612 = vmatprep.subr.mxu0 0.0
        %613 = vmatpush1.msra.mxu0 0.0
        %614 = vmatprep.subr.mxu0 0.0
        %615 = vmatpush1.msra.mxu0 0.0
        %616 = vmatprep.subr.mxu0 0.0
        %617 = vmatpush1.msra.mxu0 0.0
        %618 = vmatprep.subr.mxu0 0.0
        %619 = vmatpush1.msra.mxu0 0.0
        %620 = vmatprep.subr.mxu0 0.0
        %621 = vmatpush1.msra.mxu0 0.0
        %622 = vmatprep.subr.mxu0 0.0
        %623 = vmatpush1.msra.mxu0 0.0
        %624 = vmatprep.subr.mxu0 0.0
        %625 = vmatpush1.msra.mxu0 0.0
        %626 = vmatprep.subr.mxu0 0.0
        %627 = vmatpush1.msra.mxu0 0.0
        %628 = vmatprep.subr.mxu0 0.0
        %629 = vmatpush1.msra.mxu0 0.0
        %630 = vmatprep.subr.mxu0 0.0
        %631 = vmatpush1.msra.mxu0 0.0
        %632 = vmatprep.subr.mxu0 0.0
        %633 = vmatpush1.msra.mxu0 0.0
        %634 = vmatprep.subr.mxu0 0.0
        %635 = vmatpush1.msra.mxu0 0.0
        %636 = vmatprep.subr.mxu0 0.0
        %637 = vmatpush1.msra.mxu0 0.0
        %638 = vmatprep.subr.mxu0 0.0
        %639 = vmatpush1.msra.mxu0 0.0
        %640 = vmatprep.subr.mxu0 0.0
        %641 = vmatpush1.msra.mxu0 0.0
        %642 = vmatprep.subr.mxu0 0.0
        %643 = vmatpush1.msra.mxu0 0.0
        %644 = vmatprep.mubr.f32.mxu0 0.0
        %645 = vmatmul.mubr.f32.gmra.mrb[0].mxu0 %v417
        %v646 = vpop.f32.mrb[0].mxu0
        %v647 = vadd.f32 0.0, %v646
        %v648 = vpop.f32.mrb[0].mxu0
        %v649 = vadd.f32 0.0, %v648
        %650 = vdwg.mxu0
        %s651 = scalar_lea.vmem [#allocation4], 4
        %v652 = vld [vmem:[%s651] sm:$0xf]
        %v654 = vsel %vm415, %v652, 0
        %656 = vmatprep.subr.mxu0 %v424
        %657 = vmatpush1.msra.mxu0 %v421
        %658 = vmatprep.subr.mxu0 0.0
        %659 = vmatpush1.msra.mxu0 0.0
        %660 = vmatprep.subr.mxu0 0.0
        %661 = vmatpush1.msra.mxu0 0.0
        %662 = vmatprep.subr.mxu0 0.0
        %663 = vmatpush1.msra.mxu0 0.0
        %664 = vmatprep.subr.mxu0 0.0
        %665 = vmatpush1.msra.mxu0 0.0
        %666 = vmatprep.subr.mxu0 0.0
        %667 = vmatpush1.msra.mxu0 0.0
        %668 = vmatprep.subr.mxu0 0.0
        %669 = vmatpush1.msra.mxu0 0.0
        %670 = vmatprep.subr.mxu0 0.0
        %671 = vmatpush1.msra.mxu0 0.0
        %672 = vmatprep.subr.mxu0 0.0
        %673 = vmatpush1.msra.mxu0 0.0
        %674 = vmatprep.subr.mxu0 0.0
        %675 = vmatpush1.msra.mxu0 0.0
        %676 = vmatprep.subr.mxu0 0.0
        %677 = vmatpush1.msra.mxu0 0.0
        %678 = vmatprep.subr.mxu0 0.0
        %679 = vmatpush1.msra.mxu0 0.0
        %680 = vmatprep.subr.mxu0 0.0
        %681 = vmatpush1.msra.mxu0 0.0
        %682 = vmatprep.subr.mxu0 0.0
        %683 = vmatpush1.msra.mxu0 0.0
        %684 = vmatprep.subr.mxu0 0.0
        %685 = vmatpush1.msra.mxu0 0.0
        %686 = vmatprep.subr.mxu0 0.0
        %687 = vmatpush1.msra.mxu0 0.0
        %688 = vmatprep.subr.mxu0 0.0
        %689 = vmatpush1.msra.mxu0 0.0
        %690 = vmatprep.subr.mxu0 0.0
        %691 = vmatpush1.msra.mxu0 0.0
        %692 = vmatprep.subr.mxu0 0.0
        %693 = vmatpush1.msra.mxu0 0.0
        %694 = vmatprep.subr.mxu0 0.0
        %695 = vmatpush1.msra.mxu0 0.0
        %696 = vmatprep.subr.mxu0 0.0
        %697 = vmatpush1.msra.mxu0 0.0
        %698 = vmatprep.subr.mxu0 0.0
        %699 = vmatpush1.msra.mxu0 0.0
        %700 = vmatprep.subr.mxu0 0.0
        %701 = vmatpush1.msra.mxu0 0.0
        %702 = vmatprep.subr.mxu0 0.0
        %703 = vmatpush1.msra.mxu0 0.0
        %704 = vmatprep.subr.mxu0 0.0
        %705 = vmatpush1.msra.mxu0 0.0
        %706 = vmatprep.subr.mxu0 0.0
        %707 = vmatpush1.msra.mxu0 0.0
        %708 = vmatprep.subr.mxu0 0.0
        %709 = vmatpush1.msra.mxu0 0.0
        %710 = vmatprep.subr.mxu0 0.0
        %711 = vmatpush1.msra.mxu0 0.0
        %712 = vmatprep.subr.mxu0 0.0
        %713 = vmatpush1.msra.mxu0 0.0
        %714 = vmatprep.subr.mxu0 0.0
        %715 = vmatpush1.msra.mxu0 0.0
        %716 = vmatprep.subr.mxu0 0.0
        %717 = vmatpush1.msra.mxu0 0.0
        %718 = vmatprep.subr.mxu0 0.0
        %719 = vmatpush1.msra.mxu0 0.0
        %720 = vmatprep.mubr.f32.mxu0 0.0
        %721 = vmatmul.mubr.f32.gmra.mrb[0].mxu0 %v654
        %v722 = vpop.f32.mrb[0].mxu0
        %v723 = vadd.f32 0.0, %v722
        %v724 = vpop.f32.mrb[0].mxu0
        %v725 = vadd.f32 0.0, %v724
        %726 = vdwg.mxu0
        %727 = vmatprep.subr.mxu0 %v430
        %728 = vmatpush1.msra.mxu0 %v427
        %729 = vmatprep.subr.mxu0 0.0
        %730 = vmatpush1.msra.mxu0 0.0
        %731 = vmatprep.subr.mxu0 0.0
        %732 = vmatpush1.msra.mxu0 0.0
        %733 = vmatprep.subr.mxu0 0.0
        %734 = vmatpush1.msra.mxu0 0.0
        %735 = vmatprep.subr.mxu0 0.0
        %736 = vmatpush1.msra.mxu0 0.0
        %737 = vmatprep.subr.mxu0 0.0
        %738 = vmatpush1.msra.mxu0 0.0
        %739 = vmatprep.subr.mxu0 0.0
        %740 = vmatpush1.msra.mxu0 0.0
        %741 = vmatprep.subr.mxu0 0.0
        %742 = vmatpush1.msra.mxu0 0.0
        %743 = vmatprep.subr.mxu0 0.0
        %744 = vmatpush1.msra.mxu0 0.0
        %745 = vmatprep.subr.mxu0 0.0
        %746 = vmatpush1.msra.mxu0 0.0
        %747 = vmatprep.subr.mxu0 0.0
        %748 = vmatpush1.msra.mxu0 0.0
        %749 = vmatprep.subr.mxu0 0.0
        %750 = vmatpush1.msra.mxu0 0.0
        %751 = vmatprep.subr.mxu0 0.0
        %752 = vmatpush1.msra.mxu0 0.0
        %753 = vmatprep.subr.mxu0 0.0
        %754 = vmatpush1.msra.mxu0 0.0
        %755 = vmatprep.subr.mxu0 0.0
        %756 = vmatpush1.msra.mxu0 0.0
        %757 = vmatprep.subr.mxu0 0.0
        %758 = vmatpush1.msra.mxu0 0.0
        %759 = vmatprep.subr.mxu0 0.0
        %760 = vmatpush1.msra.mxu0 0.0
        %761 = vmatprep.subr.mxu0 0.0
        %762 = vmatpush1.msra.mxu0 0.0
        %763 = vmatprep.subr.mxu0 0.0
        %764 = vmatpush1.msra.mxu0 0.0
        %765 = vmatprep.subr.mxu0 0.0
        %766 = vmatpush1.msra.mxu0 0.0
        %767 = vmatprep.subr.mxu0 0.0
        %768 = vmatpush1.msra.mxu0 0.0
        %769 = vmatprep.subr.mxu0 0.0
        %770 = vmatpush1.msra.mxu0 0.0
        %771 = vmatprep.subr.mxu0 0.0
        %772 = vmatpush1.msra.mxu0 0.0
        %773 = vmatprep.subr.mxu0 0.0
        %774 = vmatpush1.msra.mxu0 0.0
        %775 = vmatprep.subr.mxu0 0.0
        %776 = vmatpush1.msra.mxu0 0.0
        %777 = vmatprep.subr.mxu0 0.0
        %778 = vmatpush1.msra.mxu0 0.0
        %779 = vmatprep.subr.mxu0 0.0
        %780 = vmatpush1.msra.mxu0 0.0
        %781 = vmatprep.subr.mxu0 0.0
        %782 = vmatpush1.msra.mxu0 0.0
        %783 = vmatprep.subr.mxu0 0.0
        %784 = vmatpush1.msra.mxu0 0.0
        %785 = vmatprep.subr.mxu0 0.0
        %786 = vmatpush1.msra.mxu0 0.0
        %787 = vmatprep.subr.mxu0 0.0
        %788 = vmatpush1.msra.mxu0 0.0
        %789 = vmatprep.subr.mxu0 0.0
        %790 = vmatpush1.msra.mxu0 0.0
        %791 = vmatprep.mubr.f32.mxu0 0.0
        %792 = vmatmul.mubr.f32.gmra.mrb[0].mxu0 %v654
        %v793 = vpop.f32.mrb[0].mxu0
        %v794 = vadd.f32 0.0, %v793
        %v795 = vpop.f32.mrb[0].mxu0
        %v796 = vadd.f32 0.0, %v795
        %797 = vdwg.mxu0
        %798 = vmatprep.subr.mxu0 %v436
        %799 = vmatpush1.msra.mxu0 %v433
        %800 = vmatprep.subr.mxu0 0.0
        %801 = vmatpush1.msra.mxu0 0.0
        %802 = vmatprep.subr.mxu0 0.0
        %803 = vmatpush1.msra.mxu0 0.0
        %804 = vmatprep.subr.mxu0 0.0
        %805 = vmatpush1.msra.mxu0 0.0
        %806 = vmatprep.subr.mxu0 0.0
        %807 = vmatpush1.msra.mxu0 0.0
        %808 = vmatprep.subr.mxu0 0.0
        %809 = vmatpush1.msra.mxu0 0.0
        %810 = vmatprep.subr.mxu0 0.0
        %811 = vmatpush1.msra.mxu0 0.0
        %812 = vmatprep.subr.mxu0 0.0
        %813 = vmatpush1.msra.mxu0 0.0
        %814 = vmatprep.subr.mxu0 0.0
        %815 = vmatpush1.msra.mxu0 0.0
        %816 = vmatprep.subr.mxu0 0.0
        %817 = vmatpush1.msra.mxu0 0.0
        %818 = vmatprep.subr.mxu0 0.0
        %819 = vmatpush1.msra.mxu0 0.0
        %820 = vmatprep.subr.mxu0 0.0
        %821 = vmatpush1.msra.mxu0 0.0
        %822 = vmatprep.subr.mxu0 0.0
        %823 = vmatpush1.msra.mxu0 0.0
        %824 = vmatprep.subr.mxu0 0.0
        %825 = vmatpush1.msra.mxu0 0.0
        %826 = vmatprep.subr.mxu0 0.0
        %827 = vmatpush1.msra.mxu0 0.0
        %828 = vmatprep.subr.mxu0 0.0
        %829 = vmatpush1.msra.mxu0 0.0
        %830 = vmatprep.subr.mxu0 0.0
        %831 = vmatpush1.msra.mxu0 0.0
        %832 = vmatprep.subr.mxu0 0.0
        %833 = vmatpush1.msra.mxu0 0.0
        %834 = vmatprep.subr.mxu0 0.0
        %835 = vmatpush1.msra.mxu0 0.0
        %836 = vmatprep.subr.mxu0 0.0
        %837 = vmatpush1.msra.mxu0 0.0
        %838 = vmatprep.subr.mxu0 0.0
        %839 = vmatpush1.msra.mxu0 0.0
        %840 = vmatprep.subr.mxu0 0.0
        %841 = vmatpush1.msra.mxu0 0.0
        %842 = vmatprep.subr.mxu0 0.0
        %843 = vmatpush1.msra.mxu0 0.0
        %844 = vmatprep.subr.mxu0 0.0
        %845 = vmatpush1.msra.mxu0 0.0
        %846 = vmatprep.subr.mxu0 0.0
        %847 = vmatpush1.msra.mxu0 0.0
        %848 = vmatprep.subr.mxu0 0.0
        %849 = vmatpush1.msra.mxu0 0.0
        %850 = vmatprep.subr.mxu0 0.0
        %851 = vmatpush1.msra.mxu0 0.0
        %852 = vmatprep.subr.mxu0 0.0
        %853 = vmatpush1.msra.mxu0 0.0
        %854 = vmatprep.subr.mxu0 0.0
        %855 = vmatpush1.msra.mxu0 0.0
        %856 = vmatprep.subr.mxu0 0.0
        %857 = vmatpush1.msra.mxu0 0.0
        %858 = vmatprep.subr.mxu0 0.0
        %859 = vmatpush1.msra.mxu0 0.0
        %860 = vmatprep.subr.mxu0 0.0
        %861 = vmatpush1.msra.mxu0 0.0
        %862 = vmatprep.mubr.f32.mxu0 0.0
        %863 = vmatmul.mubr.f32.gmra.mrb[0].mxu0 %v654
        %v864 = vpop.f32.mrb[0].mxu0
        %v865 = vadd.f32 0.0, %v864
        %v866 = vpop.f32.mrb[0].mxu0
        %v867 = vadd.f32 0.0, %v866
        %868 = vdwg.mxu0
        %s869 = scalar_lea.vmem [#allocation4], 8
        %v870 = vld [vmem:[%s869] sm:$0xf]
        %v872 = vsel %vm415, %v870, 0
        %874 = vmatprep.subr.mxu0 %v424
        %875 = vmatpush1.msra.mxu0 %v421
        %876 = vmatprep.subr.mxu0 0.0
        %877 = vmatpush1.msra.mxu0 0.0
        %878 = vmatprep.subr.mxu0 0.0
        %879 = vmatpush1.msra.mxu0 0.0
        %880 = vmatprep.subr.mxu0 0.0
        %881 = vmatpush1.msra.mxu0 0.0
        %882 = vmatprep.subr.mxu0 0.0
        %883 = vmatpush1.msra.mxu0 0.0
        %884 = vmatprep.subr.mxu0 0.0
        %885 = vmatpush1.msra.mxu0 0.0
        %886 = vmatprep.subr.mxu0 0.0
        %887 = vmatpush1.msra.mxu0 0.0
        %888 = vmatprep.subr.mxu0 0.0
        %889 = vmatpush1.msra.mxu0 0.0
        %890 = vmatprep.subr.mxu0 0.0
        %891 = vmatpush1.msra.mxu0 0.0
        %892 = vmatprep.subr.mxu0 0.0
        %893 = vmatpush1.msra.mxu0 0.0
        %894 = vmatprep.subr.mxu0 0.0
        %895 = vmatpush1.msra.mxu0 0.0
        %896 = vmatprep.subr.mxu0 0.0
        %897 = vmatpush1.msra.mxu0 0.0
        %898 = vmatprep.subr.mxu0 0.0
        %899 = vmatpush1.msra.mxu0 0.0
        %900 = vmatprep.subr.mxu0 0.0
        %901 = vmatpush1.msra.mxu0 0.0
        %902 = vmatprep.subr.mxu0 0.0
        %903 = vmatpush1.msra.mxu0 0.0
        %904 = vmatprep.subr.mxu0 0.0
        %905 = vmatpush1.msra.mxu0 0.0
        %906 = vmatprep.subr.mxu0 0.0
        %907 = vmatpush1.msra.mxu0 0.0
        %908 = vmatprep.subr.mxu0 0.0
        %909 = vmatpush1.msra.mxu0 0.0
        %910 = vmatprep.subr.mxu0 0.0
        %911 = vmatpush1.msra.mxu0 0.0
        %912 = vmatprep.subr.mxu0 0.0
        %913 = vmatpush1.msra.mxu0 0.0
        %914 = vmatprep.subr.mxu0 0.0
        %915 = vmatpush1.msra.mxu0 0.0
        %916 = vmatprep.subr.mxu0 0.0
        %917 = vmatpush1.msra.mxu0 0.0
        %918 = vmatprep.subr.mxu0 0.0
        %919 = vmatpush1.msra.mxu0 0.0
        %920 = vmatprep.subr.mxu0 0.0
        %921 = vmatpush1.msra.mxu0 0.0
        %922 = vmatprep.subr.mxu0 0.0
        %923 = vmatpush1.msra.mxu0 0.0
        %924 = vmatprep.subr.mxu0 0.0
        %925 = vmatpush1.msra.mxu0 0.0
        %926 = vmatprep.subr.mxu0 0.0
        %927 = vmatpush1.msra.mxu0 0.0
        %928 = vmatprep.subr.mxu0 0.0
        %929 = vmatpush1.msra.mxu0 0.0
        %930 = vmatprep.subr.mxu0 0.0
        %931 = vmatpush1.msra.mxu0 0.0
        %932 = vmatprep.subr.mxu0 0.0
        %933 = vmatpush1.msra.mxu0 0.0
        %934 = vmatprep.subr.mxu0 0.0
        %935 = vmatpush1.msra.mxu0 0.0
        %936 = vmatprep.subr.mxu0 0.0
        %937 = vmatpush1.msra.mxu0 0.0
        %938 = vmatprep.mubr.f32.mxu0 0.0
        %939 = vmatmul.mubr.f32.gmra.mrb[0].mxu0 %v872
        %v940 = vpop.f32.mrb[0].mxu0
        %v941 = vadd.f32 0.0, %v940
        %v942 = vpop.f32.mrb[0].mxu0
        %v943 = vadd.f32 0.0, %v942
        %944 = vdwg.mxu0
        %945 = vmatprep.subr.mxu0 %v430
        %946 = vmatpush1.msra.mxu0 %v427
        %947 = vmatprep.subr.mxu0 0.0
        %948 = vmatpush1.msra.mxu0 0.0
        %949 = vmatprep.subr.mxu0 0.0
        %950 = vmatpush1.msra.mxu0 0.0
        %951 = vmatprep.subr.mxu0 0.0
        %952 = vmatpush1.msra.mxu0 0.0
        %953 = vmatprep.subr.mxu0 0.0
        %954 = vmatpush1.msra.mxu0 0.0
        %955 = vmatprep.subr.mxu0 0.0
        %956 = vmatpush1.msra.mxu0 0.0
        %957 = vmatprep.subr.mxu0 0.0
        %958 = vmatpush1.msra.mxu0 0.0
        %959 = vmatprep.subr.mxu0 0.0
        %960 = vmatpush1.msra.mxu0 0.0
        %961 = vmatprep.subr.mxu0 0.0
        %962 = vmatpush1.msra.mxu0 0.0
        %963 = vmatprep.subr.mxu0 0.0
        %964 = vmatpush1.msra.mxu0 0.0
        %965 = vmatprep.subr.mxu0 0.0
        %966 = vmatpush1.msra.mxu0 0.0
        %967 = vmatprep.subr.mxu0 0.0
        %968 = vmatpush1.msra.mxu0 0.0
        %969 = vmatprep.subr.mxu0 0.0
        %970 = vmatpush1.msra.mxu0 0.0
        %971 = vmatprep.subr.mxu0 0.0
        %972 = vmatpush1.msra.mxu0 0.0
        %973 = vmatprep.subr.mxu0 0.0
        %974 = vmatpush1.msra.mxu0 0.0
        %975 = vmatprep.subr.mxu0 0.0
        %976 = vmatpush1.msra.mxu0 0.0
        %977 = vmatprep.subr.mxu0 0.0
        %978 = vmatpush1.msra.mxu0 0.0
        %979 = vmatprep.subr.mxu0 0.0
        %980 = vmatpush1.msra.mxu0 0.0
        %981 = vmatprep.subr.mxu0 0.0
        %982 = vmatpush1.msra.mxu0 0.0
        %983 = vmatprep.subr.mxu0 0.0
        %984 = vmatpush1.msra.mxu0 0.0
        %985 = vmatprep.subr.mxu0 0.0
        %986 = vmatpush1.msra.mxu0 0.0
        %987 = vmatprep.subr.mxu0 0.0
        %988 = vmatpush1.msra.mxu0 0.0
        %989 = vmatprep.subr.mxu0 0.0
        %990 = vmatpush1.msra.mxu0 0.0
        %991 = vmatprep.subr.mxu0 0.0
        %992 = vmatpush1.msra.mxu0 0.0
        %993 = vmatprep.subr.mxu0 0.0
        %994 = vmatpush1.msra.mxu0 0.0
        %995 = vmatprep.subr.mxu0 0.0
        %996 = vmatpush1.msra.mxu0 0.0
        %997 = vmatprep.subr.mxu0 0.0
        %998 = vmatpush1.msra.mxu0 0.0
        %999 = vmatprep.subr.mxu0 0.0
        %1000 = vmatpush1.msra.mxu0 0.0
        %1001 = vmatprep.subr.mxu0 0.0
        %1002 = vmatpush1.msra.mxu0 0.0
        %1003 = vmatprep.subr.mxu0 0.0
        %1004 = vmatpush1.msra.mxu0 0.0
        %1005 = vmatprep.subr.mxu0 0.0
        %1006 = vmatpush1.msra.mxu0 0.0
        %1007 = vmatprep.subr.mxu0 0.0
        %1008 = vmatpush1.msra.mxu0 0.0
        %1009 = vmatprep.mubr.f32.mxu0 0.0
        %1010 = vmatmul.mubr.f32.gmra.mrb[0].mxu0 %v872
        %v1011 = vpop.f32.mrb[0].mxu0
        %v1012 = vadd.f32 0.0, %v1011
        %v1013 = vpop.f32.mrb[0].mxu0
        %v1014 = vadd.f32 0.0, %v1013
        %1015 = vdwg.mxu0
        %1016 = vmatprep.subr.mxu0 %v436
        %1017 = vmatpush1.msra.mxu0 %v433
        %1018 = vmatprep.subr.mxu0 0.0
        %1019 = vmatpush1.msra.mxu0 0.0
        %1020 = vmatprep.subr.mxu0 0.0
        %1021 = vmatpush1.msra.mxu0 0.0
        %1022 = vmatprep.subr.mxu0 0.0
        %1023 = vmatpush1.msra.mxu0 0.0
        %1024 = vmatprep.subr.mxu0 0.0
        %1025 = vmatpush1.msra.mxu0 0.0
        %1026 = vmatprep.subr.mxu0 0.0
        %1027 = vmatpush1.msra.mxu0 0.0
        %1028 = vmatprep.subr.mxu0 0.0
        %1029 = vmatpush1.msra.mxu0 0.0
        %1030 = vmatprep.subr.mxu0 0.0
        %1031 = vmatpush1.msra.mxu0 0.0
        %1032 = vmatprep.subr.mxu0 0.0
        %1033 = vmatpush1.msra.mxu0 0.0
        %1034 = vmatprep.subr.mxu0 0.0
        %1035 = vmatpush1.msra.mxu0 0.0
        %1036 = vmatprep.subr.mxu0 0.0
        %1037 = vmatpush1.msra.mxu0 0.0
        %1038 = vmatprep.subr.mxu0 0.0
        %1039 = vmatpush1.msra.mxu0 0.0
        %1040 = vmatprep.subr.mxu0 0.0
        %1041 = vmatpush1.msra.mxu0 0.0
        %1042 = vmatprep.subr.mxu0 0.0
        %1043 = vmatpush1.msra.mxu0 0.0
        %1044 = vmatprep.subr.mxu0 0.0
        %1045 = vmatpush1.msra.mxu0 0.0
        %1046 = vmatprep.subr.mxu0 0.0
        %1047 = vmatpush1.msra.mxu0 0.0
        %1048 = vmatprep.subr.mxu0 0.0
        %1049 = vmatpush1.msra.mxu0 0.0
        %1050 = vmatprep.subr.mxu0 0.0
        %1051 = vmatpush1.msra.mxu0 0.0
        %1052 = vmatprep.subr.mxu0 0.0
        %1053 = vmatpush1.msra.mxu0 0.0
        %1054 = vmatprep.subr.mxu0 0.0
        %1055 = vmatpush1.msra.mxu0 0.0
        %1056 = vmatprep.subr.mxu0 0.0
        %1057 = vmatpush1.msra.mxu0 0.0
        %1058 = vmatprep.subr.mxu0 0.0
        %1059 = vmatpush1.msra.mxu0 0.0
        %1060 = vmatprep.subr.mxu0 0.0
        %1061 = vmatpush1.msra.mxu0 0.0
        %1062 = vmatprep.subr.mxu0 0.0
        %1063 = vmatpush1.msra.mxu0 0.0
        %1064 = vmatprep.subr.mxu0 0.0
        %1065 = vmatpush1.msra.mxu0 0.0
        %1066 = vmatprep.subr.mxu0 0.0
        %1067 = vmatpush1.msra.mxu0 0.0
        %1068 = vmatprep.subr.mxu0 0.0
        %1069 = vmatpush1.msra.mxu0 0.0
        %1070 = vmatprep.subr.mxu0 0.0
        %1071 = vmatpush1.msra.mxu0 0.0
        %1072 = vmatprep.subr.mxu0 0.0
        %1073 = vmatpush1.msra.mxu0 0.0
        %1074 = vmatprep.subr.mxu0 0.0
        %1075 = vmatpush1.msra.mxu0 0.0
        %1076 = vmatprep.subr.mxu0 0.0
        %1077 = vmatpush1.msra.mxu0 0.0
        %1078 = vmatprep.subr.mxu0 0.0
        %1079 = vmatpush1.msra.mxu0 0.0
        %1080 = vmatprep.mubr.f32.mxu0 0.0
        %1081 = vmatmul.mubr.f32.gmra.mrb[0].mxu0 %v872
        %v1082 = vpop.f32.mrb[0].mxu0
        %v1083 = vadd.f32 0.0, %v1082
        %v1084 = vpop.f32.mrb[0].mxu0
        %1085 = vdwg.mxu0
        %v1086 = vadd.f32 %v507, %v723
        %v1087 = vadd.f32 %v576, %v725
        %v1088 = vadd.f32 %v578, %v794
        %v1089 = vadd.f32 %v647, %v796
        %v1090 = vadd.f32 %v649, %v865
        %v1091 = vadd.f32 %v1087, %v941
        %v1092 = vadd.f32 %v1088, %v943
        %v1093 = vadd.f32 %v1089, %v1012
        %v1094 = vadd.f32 %v1090, %v1014
        %v1095 = vadd.f32 %v867, %v1083
        %v1096 = vld [vmem:[%s4] sm:$0xf]
        %1098 = vset.pattern.permute.xlu0 0
        %1099 = vperm.xlu0 %1098, %v1096
        %v1100 = vpop.permute.xlu0 %1099
        %v1102 = vadd.f32 %v505, %v1100
        %v1103 = vadd.f32 %v1086, %v1100
        %v1104 = vadd.f32 %v1091, %v1100
        %v1105 = vadd.f32 %v1092, %v1100
        %v1106 = vadd.f32 %v1093, %v1100
        %v1107 = vadd.f32 %v1095, %v1100
        %v1108 = vcombine.low %v1102, %v1104
        %v1110 = vunpack.c.l.s4 1983009808
        %v1111 = vunpack.c.0.s8 %v1110
        %v1112 = vlaneseq
        %v1113 = vshrl.u32 %v1112, 7
        %v1114 = vsub.s32 %v1111, %v1113
        %v1115 = vrot.slane %v1108, %v1114
        %v1116 = vcombine.low %v1103, %v1105
        %v1118 = vunpack.c.l.s4 1983009808
        %v1119 = vunpack.c.0.s8 %v1118
        %v1120 = vlaneseq
        %v1121 = vshrl.u32 %v1120, 7
        %v1122 = vsub.s32 %v1119, %v1121
        %v1123 = vrot.slane %v1116, %v1122
        %v1124 = vcombine.low %v1106, %v1107
        %v1126 = vunpack.c.l.s4 1983009808
        %v1127 = vunpack.c.0.s8 %v1126
        %v1128 = vlaneseq
        %v1129 = vshrl.u32 %v1128, 7
        %v1130 = vsub.s32 %v1127, %v1129
        %v1131 = vrot.slane %v1124, %v1130
        %v1132 = vadd.f32 %v1094, %v1100
        %v1134 = vunpack.c.l.s4 1983009808
        %v1135 = vunpack.c.0.s8 %v1134
        %v1136 = vlaneseq
        %v1137 = vshrl.u32 %v1136, 7
        %v1138 = vsub.s32 %v1135, %v1137
        %v1139 = vrot.slane %v1132, %v1138
        %v1140 = vcombine.low %v1115, %v1123
        %v1141 = vcombine.high %v1115, %v1123
        %v1143 = vunpack.c.l.s4 1934713408
        %v1144 = vunpack.c.0.s8 %v1143
        %v1145 = vlaneseq
        %v1146 = vshrl.u32 %v1145, 7
        %v1147 = vsub.s32 %v1144, %v1146
        %v1148 = vrot.slane %v1140, %v1147
        %v1150 = vunpack.c.l.s4 1934713408
        %v1151 = vunpack.c.0.s8 %v1150
        %v1152 = vlaneseq
        %v1153 = vshrl.u32 %v1152, 7
        %v1154 = vsub.s32 %v1151, %v1153
        %v1155 = vrot.slane %v1141, %v1154
        %v1156 = vcombine.low %v1131, %v1139
        %v1157 = vcombine.high %v1131, %v1139
        %v1159 = vunpack.c.l.s4 1934713408
        %v1160 = vunpack.c.0.s8 %v1159
        %v1161 = vlaneseq
        %v1162 = vshrl.u32 %v1161, 7
        %v1163 = vsub.s32 %v1160, %v1162
        %v1164 = vrot.slane %v1156, %v1163
        %v1166 = vunpack.c.l.s4 1934713408
        %v1167 = vunpack.c.0.s8 %v1166
        %v1168 = vlaneseq
        %v1169 = vshrl.u32 %v1168, 7
        %v1170 = vsub.s32 %v1167, %v1169
        %v1171 = vrot.slane %v1157, %v1170
        %v1172 = vcombine.low %v1148, %v1164
        %v1173 = vcombine.high %v1148, %v1164
        %v1174 = vcombine.low %v1155, %v1171
        %v1175 = vcombine.high %v1155, %v1171
        %1176 = vst [vmem:[%s350] sm:$0x7f] %v1172
        %1177 = vst [vmem:[%s350 + $0x28] sm:$0x7f] %v1173
        %1178 = vst [vmem:[%s350 + $0x50] sm:$0x7f] %v1174
        %1179 = vst [vmem:[%s350 + $0x78] sm:$0x7f] %v1175
        %v1180 = vld [vmem:[%s301 + $0x6] sm:$0x3f]
        %v1181 = vld [vmem:[%s301 + $0x16] sm:$0x3f]
        %v1182 = vld [vmem:[%s301 + $0x26] sm:$0x3f]
        %v1183 = vld [vmem:[%s301 + $0x36] sm:$0x3f]
        %v1184 = vcombine.low %v1180, %v1182
        %v1185 = vcombine.high %v1180, %v1182
        %v1187 = vunpack.c.l.s4 1983009808
        %v1188 = vunpack.c.0.s8 %v1187
        %v1189 = vlaneseq
        %v1190 = vshrl.u32 %v1189, 7
        %v1191 = vsub.s32 %v1188, %v1190
        %v1192 = vrot.slane %v1184, %v1191
        %v1194 = vunpack.c.l.s4 1983009808
        %v1195 = vunpack.c.0.s8 %v1194
        %v1196 = vlaneseq
        %v1197 = vshrl.u32 %v1196, 7
        %v1198 = vsub.s32 %v1195, %v1197
        %v1199 = vrot.slane %v1185, %v1198
        %v1200 = vcombine.low %v1181, %v1183
        %v1201 = vcombine.high %v1181, %v1183
        %v1203 = vunpack.c.l.s4 1983009808
        %v1204 = vunpack.c.0.s8 %v1203
        %v1205 = vlaneseq
        %v1206 = vshrl.u32 %v1205, 7
        %v1207 = vsub.s32 %v1204, %v1206
        %v1208 = vrot.slane %v1200, %v1207
        %v1210 = vunpack.c.l.s4 1983009808
        %v1211 = vunpack.c.0.s8 %v1210
        %v1212 = vlaneseq
        %v1213 = vshrl.u32 %v1212, 7
        %v1214 = vsub.s32 %v1211, %v1213
        %v1215 = vrot.slane %v1201, %v1214
        %v1216 = vcombine.low %v1192, %v1208
        %v1217 = vcombine.high %v1192, %v1208
        %v1219 = vunpack.c.l.s4 1934713408
        %v1220 = vunpack.c.0.s8 %v1219
        %v1221 = vlaneseq
        %v1222 = vshrl.u32 %v1221, 7
        %v1223 = vsub.s32 %v1220, %v1222
        %v1224 = vrot.slane %v1216, %v1223
        %v1226 = vunpack.c.l.s4 1934713408
        %v1227 = vunpack.c.0.s8 %v1226
        %v1228 = vlaneseq
        %v1229 = vshrl.u32 %v1228, 7
        %v1230 = vsub.s32 %v1227, %v1229
        %v1231 = vrot.slane %v1217, %v1230
        %v1232 = vcombine.low %v1199, %v1215
        %v1234 = vunpack.c.l.s4 1934713408
        %v1235 = vunpack.c.0.s8 %v1234
        %v1236 = vlaneseq
        %v1237 = vshrl.u32 %v1236, 7
        %v1238 = vsub.s32 %v1235, %v1237
        %v1239 = vrot.slane %v1232, %v1238
        %v1240 = vcombine.high %v1224, 0.0
        %v1241 = vcombine.high %v1231, 0.0
        %v1242 = vcombine.high %v1239, 0.0
        %v1243 = vld [vmem:[%s2] sm:$0xf]
        %v1245 = vsel %vm415, %v1243, 0
        %v1248 = vsel %vm419, %v1224, 0
        %v1251 = vsel %vm419, %v1240, 0
        %v1254 = vsel %vm419, %v1231, 0
        %v1257 = vsel %vm419, %v1241, 0
        %v1260 = vsel %vm419, %v1239, 0
        %v1263 = vsel %vm419, %v1242, 0
        %1265 = vmatprep.subr.mxu0 %v1251
        %1266 = vmatpush1.msra.mxu0 %v1248
        %1267 = vmatprep.subr.mxu0 0.0
        %1268 = vmatpush1.msra.mxu0 0.0
        %1269 = vmatprep.subr.mxu0 0.0
        %1270 = vmatpush1.msra.mxu0 0.0
        %1271 = vmatprep.subr.mxu0 0.0
        %1272 = vmatpush1.msra.mxu0 0.0
        %1273 = vmatprep.subr.mxu0 0.0
        %1274 = vmatpush1.msra.mxu0 0.0
        %1275 = vmatprep.subr.mxu0 0.0
        %1276 = vmatpush1.msra.mxu0 0.0
        %1277 = vmatprep.subr.mxu0 0.0
        %1278 = vmatpush1.msra.mxu0 0.0
        %1279 = vmatprep.subr.mxu0 0.0
        %1280 = vmatpush1.msra.mxu0 0.0
        %1281 = vmatprep.subr.mxu0 0.0
        %1282 = vmatpush1.msra.mxu0 0.0
        %1283 = vmatprep.subr.mxu0 0.0
        %1284 = vmatpush1.msra.mxu0 0.0
        %1285 = vmatprep.subr.mxu0 0.0
        %1286 = vmatpush1.msra.mxu0 0.0
        %1287 = vmatprep.subr.mxu0 0.0
        %1288 = vmatpush1.msra.mxu0 0.0
        %1289 = vmatprep.subr.mxu0 0.0
        %1290 = vmatpush1.msra.mxu0 0.0
        %1291 = vmatprep.subr.mxu0 0.0
        %1292 = vmatpush1.msra.mxu0 0.0
        %1293 = vmatprep.subr.mxu0 0.0
        %1294 = vmatpush1.msra.mxu0 0.0
        %1295 = vmatprep.subr.mxu0 0.0
        %1296 = vmatpush1.msra.mxu0 0.0
        %1297 = vmatprep.subr.mxu0 0.0
        %1298 = vmatpush1.msra.mxu0 0.0
        %1299 = vmatprep.subr.mxu0 0.0
        %1300 = vmatpush1.msra.mxu0 0.0
        %1301 = vmatprep.subr.mxu0 0.0
        %1302 = vmatpush1.msra.mxu0 0.0
        %1303 = vmatprep.subr.mxu0 0.0
        %1304 = vmatpush1.msra.mxu0 0.0
        %1305 = vmatprep.subr.mxu0 0.0
        %1306 = vmatpush1.msra.mxu0 0.0
        %1307 = vmatprep.subr.mxu0 0.0
        %1308 = vmatpush1.msra.mxu0 0.0
        %1309 = vmatprep.subr.mxu0 0.0
        %1310 = vmatpush1.msra.mxu0 0.0
        %1311 = vmatprep.subr.mxu0 0.0
        %1312 = vmatpush1.msra.mxu0 0.0
        %1313 = vmatprep.subr.mxu0 0.0
        %1314 = vmatpush1.msra.mxu0 0.0
        %1315 = vmatprep.subr.mxu0 0.0
        %1316 = vmatpush1.msra.mxu0 0.0
        %1317 = vmatprep.subr.mxu0 0.0
        %1318 = vmatpush1.msra.mxu0 0.0
        %1319 = vmatprep.subr.mxu0 0.0
        %1320 = vmatpush1.msra.mxu0 0.0
        %1321 = vmatprep.subr.mxu0 0.0
        %1322 = vmatpush1.msra.mxu0 0.0
        %1323 = vmatprep.subr.mxu0 0.0
        %1324 = vmatpush1.msra.mxu0 0.0
        %1325 = vmatprep.subr.mxu0 0.0
        %1326 = vmatpush1.msra.mxu0 0.0
        %1327 = vmatprep.subr.mxu0 0.0
        %1328 = vmatpush1.msra.mxu0 0.0
        %1329 = vmatprep.mubr.f32.mxu0 0.0
        %1330 = vmatmul.mubr.f32.gmra.mrb[0].mxu0 %v1245
        %v1331 = vpop.f32.mrb[0].mxu0
        %v1332 = vpop.f32.mrb[0].mxu0
        %v1333 = vadd.f32 0.0, %v1332
        %1334 = vdwg.mxu0
        %1335 = vmatprep.subr.mxu0 %v1257
        %1336 = vmatpush1.msra.mxu0 %v1254
        %1337 = vmatprep.subr.mxu0 0.0
        %1338 = vmatpush1.msra.mxu0 0.0
        %1339 = vmatprep.subr.mxu0 0.0
        %1340 = vmatpush1.msra.mxu0 0.0
        %1341 = vmatprep.subr.mxu0 0.0
        %1342 = vmatpush1.msra.mxu0 0.0
        %1343 = vmatprep.subr.mxu0 0.0
        %1344 = vmatpush1.msra.mxu0 0.0
        %1345 = vmatprep.subr.mxu0 0.0
        %1346 = vmatpush1.msra.mxu0 0.0
        %1347 = vmatprep.subr.mxu0 0.0
        %1348 = vmatpush1.msra.mxu0 0.0
        %1349 = vmatprep.subr.mxu0 0.0
        %1350 = vmatpush1.msra.mxu0 0.0
        %1351 = vmatprep.subr.mxu0 0.0
        %1352 = vmatpush1.msra.mxu0 0.0
        %1353 = vmatprep.subr.mxu0 0.0
        %1354 = vmatpush1.msra.mxu0 0.0
        %1355 = vmatprep.subr.mxu0 0.0
        %1356 = vmatpush1.msra.mxu0 0.0
        %1357 = vmatprep.subr.mxu0 0.0
        %1358 = vmatpush1.msra.mxu0 0.0
        %1359 = vmatprep.subr.mxu0 0.0
        %1360 = vmatpush1.msra.mxu0 0.0
        %1361 = vmatprep.subr.mxu0 0.0
        %1362 = vmatpush1.msra.mxu0 0.0
        %1363 = vmatprep.subr.mxu0 0.0
        %1364 = vmatpush1.msra.mxu0 0.0
        %1365 = vmatprep.subr.mxu0 0.0
        %1366 = vmatpush1.msra.mxu0 0.0
        %1367 = vmatprep.subr.mxu0 0.0
        %1368 = vmatpush1.msra.mxu0 0.0
        %1369 = vmatprep.subr.mxu0 0.0
        %1370 = vmatpush1.msra.mxu0 0.0
        %1371 = vmatprep.subr.mxu0 0.0
        %1372 = vmatpush1.msra.mxu0 0.0
        %1373 = vmatprep.subr.mxu0 0.0
        %1374 = vmatpush1.msra.mxu0 0.0
        %1375 = vmatprep.subr.mxu0 0.0
        %1376 = vmatpush1.msra.mxu0 0.0
        %1377 = vmatprep.subr.mxu0 0.0
        %1378 = vmatpush1.msra.mxu0 0.0
        %1379 = vmatprep.subr.mxu0 0.0
        %1380 = vmatpush1.msra.mxu0 0.0
        %1381 = vmatprep.subr.mxu0 0.0
        %1382 = vmatpush1.msra.mxu0 0.0
        %1383 = vmatprep.subr.mxu0 0.0
        %1384 = vmatpush1.msra.mxu0 0.0
        %1385 = vmatprep.subr.mxu0 0.0
        %1386 = vmatpush1.msra.mxu0 0.0
        %1387 = vmatprep.subr.mxu0 0.0
        %1388 = vmatpush1.msra.mxu0 0.0
        %1389 = vmatprep.subr.mxu0 0.0
        %1390 = vmatpush1.msra.mxu0 0.0
        %1391 = vmatprep.subr.mxu0 0.0
        %1392 = vmatpush1.msra.mxu0 0.0
        %1393 = vmatprep.subr.mxu0 0.0
        %1394 = vmatpush1.msra.mxu0 0.0
        %1395 = vmatprep.subr.mxu0 0.0
        %1396 = vmatpush1.msra.mxu0 0.0
        %1397 = vmatprep.subr.mxu0 0.0
        %1398 = vmatpush1.msra.mxu0 0.0
        %1399 = vmatprep.mubr.f32.mxu0 0.0
        %1400 = vmatmul.mubr.f32.gmra.mrb[0].mxu0 %v1245
        %v1401 = vpop.f32.mrb[0].mxu0
        %v1402 = vadd.f32 0.0, %v1401
        %v1403 = vpop.f32.mrb[0].mxu0
        %v1404 = vadd.f32 0.0, %v1403
        %1405 = vdwg.mxu0
        %1406 = vmatprep.subr.mxu0 %v1263
        %1407 = vmatpush1.msra.mxu0 %v1260
        %1408 = vmatprep.subr.mxu0 0.0
        %1409 = vmatpush1.msra.mxu0 0.0
        %1410 = vmatprep.subr.mxu0 0.0
        %1411 = vmatpush1.msra.mxu0 0.0
        %1412 = vmatprep.subr.mxu0 0.0
        %1413 = vmatpush1.msra.mxu0 0.0
        %1414 = vmatprep.subr.mxu0 0.0
        %1415 = vmatpush1.msra.mxu0 0.0
        %1416 = vmatprep.subr.mxu0 0.0
        %1417 = vmatpush1.msra.mxu0 0.0
        %1418 = vmatprep.subr.mxu0 0.0
        %1419 = vmatpush1.msra.mxu0 0.0
        %1420 = vmatprep.subr.mxu0 0.0
        %1421 = vmatpush1.msra.mxu0 0.0
        %1422 = vmatprep.subr.mxu0 0.0
        %1423 = vmatpush1.msra.mxu0 0.0
        %1424 = vmatprep.subr.mxu0 0.0
        %1425 = vmatpush1.msra.mxu0 0.0
        %1426 = vmatprep.subr.mxu0 0.0
        %1427 = vmatpush1.msra.mxu0 0.0
        %1428 = vmatprep.subr.mxu0 0.0
        %1429 = vmatpush1.msra.mxu0 0.0
        %1430 = vmatprep.subr.mxu0 0.0
        %1431 = vmatpush1.msra.mxu0 0.0
        %1432 = vmatprep.subr.mxu0 0.0
        %1433 = vmatpush1.msra.mxu0 0.0
        %1434 = vmatprep.subr.mxu0 0.0
        %1435 = vmatpush1.msra.mxu0 0.0
        %1436 = vmatprep.subr.mxu0 0.0
        %1437 = vmatpush1.msra.mxu0 0.0
        %1438 = vmatprep.subr.mxu0 0.0
        %1439 = vmatpush1.msra.mxu0 0.0
        %1440 = vmatprep.subr.mxu0 0.0
        %1441 = vmatpush1.msra.mxu0 0.0
        %1442 = vmatprep.subr.mxu0 0.0
        %1443 = vmatpush1.msra.mxu0 0.0
        %1444 = vmatprep.subr.mxu0 0.0
        %1445 = vmatpush1.msra.mxu0 0.0
        %1446 = vmatprep.subr.mxu0 0.0
        %1447 = vmatpush1.msra.mxu0 0.0
        %1448 = vmatprep.subr.mxu0 0.0
        %1449 = vmatpush1.msra.mxu0 0.0
        %1450 = vmatprep.subr.mxu0 0.0
        %1451 = vmatpush1.msra.mxu0 0.0
        %1452 = vmatprep.subr.mxu0 0.0
        %1453 = vmatpush1.msra.mxu0 0.0
        %1454 = vmatprep.subr.mxu0 0.0
        %1455 = vmatpush1.msra.mxu0 0.0
        %1456 = vmatprep.subr.mxu0 0.0
        %1457 = vmatpush1.msra.mxu0 0.0
        %1458 = vmatprep.subr.mxu0 0.0
        %1459 = vmatpush1.msra.mxu0 0.0
        %1460 = vmatprep.subr.mxu0 0.0
        %1461 = vmatpush1.msra.mxu0 0.0
        %1462 = vmatprep.subr.mxu0 0.0
        %1463 = vmatpush1.msra.mxu0 0.0
        %1464 = vmatprep.subr.mxu0 0.0
        %1465 = vmatpush1.msra.mxu0 0.0
        %1466 = vmatprep.subr.mxu0 0.0
        %1467 = vmatpush1.msra.mxu0 0.0
        %1468 = vmatprep.subr.mxu0 0.0
        %1469 = vmatpush1.msra.mxu0 0.0
        %1470 = vmatprep.mubr.f32.mxu0 0.0
        %1471 = vmatmul.mubr.f32.gmra.mrb[0].mxu0 %v1245
        %v1472 = vpop.f32.mrb[0].mxu0
        %v1473 = vadd.f32 0.0, %v1472
        %v1474 = vpop.f32.mrb[0].mxu0
        %v1475 = vadd.f32 0.0, %v1474
        %1476 = vdwg.mxu0
        %s1477 = scalar_lea.vmem %s2, 8
        %v1478 = vld [vmem:[%s1477] sm:$0xf]
        %v1480 = vsel %vm415, %v1478, 0
        %1482 = vmatprep.subr.mxu0 %v1251
        %1483 = vmatpush1.msra.mxu0 %v1248
        %1484 = vmatprep.subr.mxu0 0.0
        %1485 = vmatpush1.msra.mxu0 0.0
        %1486 = vmatprep.subr.mxu0 0.0
        %1487 = vmatpush1.msra.mxu0 0.0
        %1488 = vmatprep.subr.mxu0 0.0
        %1489 = vmatpush1.msra.mxu0 0.0
        %1490 = vmatprep.subr.mxu0 0.0
        %1491 = vmatpush1.msra.mxu0 0.0
        %1492 = vmatprep.subr.mxu0 0.0
        %1493 = vmatpush1.msra.mxu0 0.0
        %1494 = vmatprep.subr.mxu0 0.0
        %1495 = vmatpush1.msra.mxu0 0.0
        %1496 = vmatprep.subr.mxu0 0.0
        %1497 = vmatpush1.msra.mxu0 0.0
        %1498 = vmatprep.subr.mxu0 0.0
        %1499 = vmatpush1.msra.mxu0 0.0
        %1500 = vmatprep.subr.mxu0 0.0
        %1501 = vmatpush1.msra.mxu0 0.0
        %1502 = vmatprep.subr.mxu0 0.0
        %1503 = vmatpush1.msra.mxu0 0.0
        %1504 = vmatprep.subr.mxu0 0.0
        %1505 = vmatpush1.msra.mxu0 0.0
        %1506 = vmatprep.subr.mxu0 0.0
        %1507 = vmatpush1.msra.mxu0 0.0
        %1508 = vmatprep.subr.mxu0 0.0
        %1509 = vmatpush1.msra.mxu0 0.0
        %1510 = vmatprep.subr.mxu0 0.0
        %1511 = vmatpush1.msra.mxu0 0.0
        %1512 = vmatprep.subr.mxu0 0.0
        %1513 = vmatpush1.msra.mxu0 0.0
        %1514 = vmatprep.subr.mxu0 0.0
        %1515 = vmatpush1.msra.mxu0 0.0
        %1516 = vmatprep.subr.mxu0 0.0
        %1517 = vmatpush1.msra.mxu0 0.0
        %1518 = vmatprep.subr.mxu0 0.0
        %1519 = vmatpush1.msra.mxu0 0.0
        %1520 = vmatprep.subr.mxu0 0.0
        %1521 = vmatpush1.msra.mxu0 0.0
        %1522 = vmatprep.subr.mxu0 0.0
        %1523 = vmatpush1.msra.mxu0 0.0
        %1524 = vmatprep.subr.mxu0 0.0
        %1525 = vmatpush1.msra.mxu0 0.0
        %1526 = vmatprep.subr.mxu0 0.0
        %1527 = vmatpush1.msra.mxu0 0.0
        %1528 = vmatprep.subr.mxu0 0.0
        %1529 = vmatpush1.msra.mxu0 0.0
        %1530 = vmatprep.subr.mxu0 0.0
        %1531 = vmatpush1.msra.mxu0 0.0
        %1532 = vmatprep.subr.mxu0 0.0
        %1533 = vmatpush1.msra.mxu0 0.0
        %1534 = vmatprep.subr.mxu0 0.0
        %1535 = vmatpush1.msra.mxu0 0.0
        %1536 = vmatprep.subr.mxu0 0.0
        %1537 = vmatpush1.msra.mxu0 0.0
        %1538 = vmatprep.subr.mxu0 0.0
        %1539 = vmatpush1.msra.mxu0 0.0
        %1540 = vmatprep.subr.mxu0 0.0
        %1541 = vmatpush1.msra.mxu0 0.0
        %1542 = vmatprep.subr.mxu0 0.0
        %1543 = vmatpush1.msra.mxu0 0.0
        %1544 = vmatprep.subr.mxu0 0.0
        %1545 = vmatpush1.msra.mxu0 0.0
        %1546 = vmatprep.mubr.f32.mxu0 0.0
        %1547 = vmatmul.mubr.f32.gmra.mrb[0].mxu0 %v1480
        %v1548 = vpop.f32.mrb[0].mxu0
        %v1549 = vadd.f32 0.0, %v1548
        %v1550 = vpop.f32.mrb[0].mxu0
        %v1551 = vadd.f32 0.0, %v1550
        %1552 = vdwg.mxu0
        %1553 = vmatprep.subr.mxu0 %v1257
        %1554 = vmatpush1.msra.mxu0 %v1254
        %1555 = vmatprep.subr.mxu0 0.0
        %1556 = vmatpush1.msra.mxu0 0.0
        %1557 = vmatprep.subr.mxu0 0.0
        %1558 = vmatpush1.msra.mxu0 0.0
        %1559 = vmatprep.subr.mxu0 0.0
        %1560 = vmatpush1.msra.mxu0 0.0
        %1561 = vmatprep.subr.mxu0 0.0
        %1562 = vmatpush1.msra.mxu0 0.0
        %1563 = vmatprep.subr.mxu0 0.0
        %1564 = vmatpush1.msra.mxu0 0.0
        %1565 = vmatprep.subr.mxu0 0.0
        %1566 = vmatpush1.msra.mxu0 0.0
        %1567 = vmatprep.subr.mxu0 0.0
        %1568 = vmatpush1.msra.mxu0 0.0
        %1569 = vmatprep.subr.mxu0 0.0
        %1570 = vmatpush1.msra.mxu0 0.0
        %1571 = vmatprep.subr.mxu0 0.0
        %1572 = vmatpush1.msra.mxu0 0.0
        %1573 = vmatprep.subr.mxu0 0.0
        %1574 = vmatpush1.msra.mxu0 0.0
        %1575 = vmatprep.subr.mxu0 0.0
        %1576 = vmatpush1.msra.mxu0 0.0
        %1577 = vmatprep.subr.mxu0 0.0
        %1578 = vmatpush1.msra.mxu0 0.0
        %1579 = vmatprep.subr.mxu0 0.0
        %1580 = vmatpush1.msra.mxu0 0.0
        %1581 = vmatprep.subr.mxu0 0.0
        %1582 = vmatpush1.msra.mxu0 0.0
        %1583 = vmatprep.subr.mxu0 0.0
        %1584 = vmatpush1.msra.mxu0 0.0
        %1585 = vmatprep.subr.mxu0 0.0
        %1586 = vmatpush1.msra.mxu0 0.0
        %1587 = vmatprep.subr.mxu0 0.0
        %1588 = vmatpush1.msra.mxu0 0.0
        %1589 = vmatprep.subr.mxu0 0.0
        %1590 = vmatpush1.msra.mxu0 0.0
        %1591 = vmatprep.subr.mxu0 0.0
        %1592 = vmatpush1.msra.mxu0 0.0
        %1593 = vmatprep.subr.mxu0 0.0
        %1594 = vmatpush1.msra.mxu0 0.0
        %1595 = vmatprep.subr.mxu0 0.0
        %1596 = vmatpush1.msra.mxu0 0.0
        %1597 = vmatprep.subr.mxu0 0.0
        %1598 = vmatpush1.msra.mxu0 0.0
        %1599 = vmatprep.subr.mxu0 0.0
        %1600 = vmatpush1.msra.mxu0 0.0
        %1601 = vmatprep.subr.mxu0 0.0
        %1602 = vmatpush1.msra.mxu0 0.0
        %1603 = vmatprep.subr.mxu0 0.0
        %1604 = vmatpush1.msra.mxu0 0.0
        %1605 = vmatprep.subr.mxu0 0.0
        %1606 = vmatpush1.msra.mxu0 0.0
        %1607 = vmatprep.subr.mxu0 0.0
        %1608 = vmatpush1.msra.mxu0 0.0
        %1609 = vmatprep.subr.mxu0 0.0
        %1610 = vmatpush1.msra.mxu0 0.0
        %1611 = vmatprep.subr.mxu0 0.0
        %1612 = vmatpush1.msra.mxu0 0.0
        %1613 = vmatprep.subr.mxu0 0.0
        %1614 = vmatpush1.msra.mxu0 0.0
        %1615 = vmatprep.subr.mxu0 0.0
        %1616 = vmatpush1.msra.mxu0 0.0
        %1617 = vmatprep.mubr.f32.mxu0 0.0
        %1618 = vmatmul.mubr.f32.gmra.mrb[0].mxu0 %v1480
        %v1619 = vpop.f32.mrb[0].mxu0
        %v1620 = vadd.f32 0.0, %v1619
        %v1621 = vpop.f32.mrb[0].mxu0
        %v1622 = vadd.f32 0.0, %v1621
        %1623 = vdwg.mxu0
        %1624 = vmatprep.subr.mxu0 %v1263
        %1625 = vmatpush1.msra.mxu0 %v1260
        %1626 = vmatprep.subr.mxu0 0.0
        %1627 = vmatpush1.msra.mxu0 0.0
        %1628 = vmatprep.subr.mxu0 0.0
        %1629 = vmatpush1.msra.mxu0 0.0
        %1630 = vmatprep.subr.mxu0 0.0
        %1631 = vmatpush1.msra.mxu0 0.0
        %1632 = vmatprep.subr.mxu0 0.0
        %1633 = vmatpush1.msra.mxu0 0.0
        %1634 = vmatprep.subr.mxu0 0.0
        %1635 = vmatpush1.msra.mxu0 0.0
        %1636 = vmatprep.subr.mxu0 0.0
        %1637 = vmatpush1.msra.mxu0 0.0
        %1638 = vmatprep.subr.mxu0 0.0
        %1639 = vmatpush1.msra.mxu0 0.0
        %1640 = vmatprep.subr.mxu0 0.0
        %1641 = vmatpush1.msra.mxu0 0.0
        %1642 = vmatprep.subr.mxu0 0.0
        %1643 = vmatpush1.msra.mxu0 0.0
        %1644 = vmatprep.subr.mxu0 0.0
        %1645 = vmatpush1.msra.mxu0 0.0
        %1646 = vmatprep.subr.mxu0 0.0
        %1647 = vmatpush1.msra.mxu0 0.0
        %1648 = vmatprep.subr.mxu0 0.0
        %1649 = vmatpush1.msra.mxu0 0.0
        %1650 = vmatprep.subr.mxu0 0.0
        %1651 = vmatpush1.msra.mxu0 0.0
        %1652 = vmatprep.subr.mxu0 0.0
        %1653 = vmatpush1.msra.mxu0 0.0
        %1654 = vmatprep.subr.mxu0 0.0
        %1655 = vmatpush1.msra.mxu0 0.0
        %1656 = vmatprep.subr.mxu0 0.0
        %1657 = vmatpush1.msra.mxu0 0.0
        %1658 = vmatprep.subr.mxu0 0.0
        %1659 = vmatpush1.msra.mxu0 0.0
        %1660 = vmatprep.subr.mxu0 0.0
        %1661 = vmatpush1.msra.mxu0 0.0
        %1662 = vmatprep.subr.mxu0 0.0
        %1663 = vmatpush1.msra.mxu0 0.0
        %1664 = vmatprep.subr.mxu0 0.0
        %1665 = vmatpush1.msra.mxu0 0.0
        %1666 = vmatprep.subr.mxu0 0.0
        %1667 = vmatpush1.msra.mxu0 0.0
        %1668 = vmatprep.subr.mxu0 0.0
        %1669 = vmatpush1.msra.mxu0 0.0
        %1670 = vmatprep.subr.mxu0 0.0
        %1671 = vmatpush1.msra.mxu0 0.0
        %1672 = vmatprep.subr.mxu0 0.0
        %1673 = vmatpush1.msra.mxu0 0.0
        %1674 = vmatprep.subr.mxu0 0.0
        %1675 = vmatpush1.msra.mxu0 0.0
        %1676 = vmatprep.subr.mxu0 0.0
        %1677 = vmatpush1.msra.mxu0 0.0
        %1678 = vmatprep.subr.mxu0 0.0
        %1679 = vmatpush1.msra.mxu0 0.0
        %1680 = vmatprep.subr.mxu0 0.0
        %1681 = vmatpush1.msra.mxu0 0.0
        %1682 = vmatprep.subr.mxu0 0.0
        %1683 = vmatpush1.msra.mxu0 0.0
        %1684 = vmatprep.subr.mxu0 0.0
        %1685 = vmatpush1.msra.mxu0 0.0
        %1686 = vmatprep.subr.mxu0 0.0
        %1687 = vmatpush1.msra.mxu0 0.0
        %1688 = vmatprep.mubr.f32.mxu0 0.0
        %1689 = vmatmul.mubr.f32.gmra.mrb[0].mxu0 %v1480
        %v1690 = vpop.f32.mrb[0].mxu0
        %v1691 = vadd.f32 0.0, %v1690
        %v1692 = vpop.f32.mrb[0].mxu0
        %v1693 = vadd.f32 0.0, %v1692
        %1694 = vdwg.mxu0
        %v1695 = vadd.f32 %v1333, %v1549
        %v1696 = vadd.f32 %v1402, %v1551
        %v1697 = vadd.f32 %v1404, %v1620
        %v1698 = vadd.f32 %v1473, %v1622
        %v1699 = vadd.f32 %v1475, %v1691
        %s1700 = scalar_lea.vmem %s2, 4
        %v1701 = vld [vmem:[%s1700] sm:$0xf]
        %v1703 = vsel %vm415, %v1701, 0
        %1705 = vmatprep.subr.mxu0 %v1251
        %1706 = vmatpush1.msra.mxu0 %v1248
        %1707 = vmatprep.subr.mxu0 0.0
        %1708 = vmatpush1.msra.mxu0 0.0
        %1709 = vmatprep.subr.mxu0 0.0
        %1710 = vmatpush1.msra.mxu0 0.0
        %1711 = vmatprep.subr.mxu0 0.0
        %1712 = vmatpush1.msra.mxu0 0.0
        %1713 = vmatprep.subr.mxu0 0.0
        %1714 = vmatpush1.msra.mxu0 0.0
        %1715 = vmatprep.subr.mxu0 0.0
        %1716 = vmatpush1.msra.mxu0 0.0
        %1717 = vmatprep.subr.mxu0 0.0
        %1718 = vmatpush1.msra.mxu0 0.0
        %1719 = vmatprep.subr.mxu0 0.0
        %1720 = vmatpush1.msra.mxu0 0.0
        %1721 = vmatprep.subr.mxu0 0.0
        %1722 = vmatpush1.msra.mxu0 0.0
        %1723 = vmatprep.subr.mxu0 0.0
        %1724 = vmatpush1.msra.mxu0 0.0
        %1725 = vmatprep.subr.mxu0 0.0
        %1726 = vmatpush1.msra.mxu0 0.0
        %1727 = vmatprep.subr.mxu0 0.0
        %1728 = vmatpush1.msra.mxu0 0.0
        %1729 = vmatprep.subr.mxu0 0.0
        %1730 = vmatpush1.msra.mxu0 0.0
        %1731 = vmatprep.subr.mxu0 0.0
        %1732 = vmatpush1.msra.mxu0 0.0
        %1733 = vmatprep.subr.mxu0 0.0
        %1734 = vmatpush1.msra.mxu0 0.0
        %1735 = vmatprep.subr.mxu0 0.0
        %1736 = vmatpush1.msra.mxu0 0.0
        %1737 = vmatprep.subr.mxu0 0.0
        %1738 = vmatpush1.msra.mxu0 0.0
        %1739 = vmatprep.subr.mxu0 0.0
        %1740 = vmatpush1.msra.mxu0 0.0
        %1741 = vmatprep.subr.mxu0 0.0
        %1742 = vmatpush1.msra.mxu0 0.0
        %1743 = vmatprep.subr.mxu0 0.0
        %1744 = vmatpush1.msra.mxu0 0.0
        %1745 = vmatprep.subr.mxu0 0.0
        %1746 = vmatpush1.msra.mxu0 0.0
        %1747 = vmatprep.subr.mxu0 0.0
        %1748 = vmatpush1.msra.mxu0 0.0
        %1749 = vmatprep.subr.mxu0 0.0
        %1750 = vmatpush1.msra.mxu0 0.0
        %1751 = vmatprep.subr.mxu0 0.0
        %1752 = vmatpush1.msra.mxu0 0.0
        %1753 = vmatprep.subr.mxu0 0.0
        %1754 = vmatpush1.msra.mxu0 0.0
        %1755 = vmatprep.subr.mxu0 0.0
        %1756 = vmatpush1.msra.mxu0 0.0
        %1757 = vmatprep.subr.mxu0 0.0
        %1758 = vmatpush1.msra.mxu0 0.0
        %1759 = vmatprep.subr.mxu0 0.0
        %1760 = vmatpush1.msra.mxu0 0.0
        %1761 = vmatprep.subr.mxu0 0.0
        %1762 = vmatpush1.msra.mxu0 0.0
        %1763 = vmatprep.subr.mxu0 0.0
        %1764 = vmatpush1.msra.mxu0 0.0
        %1765 = vmatprep.subr.mxu0 0.0
        %1766 = vmatpush1.msra.mxu0 0.0
        %1767 = vmatprep.subr.mxu0 0.0
        %1768 = vmatpush1.msra.mxu0 0.0
        %1769 = vmatprep.mubr.f32.mxu0 0.0
        %1770 = vmatmul.mubr.f32.gmra.mrb[0].mxu0 %v1703
        %v1771 = vpop.f32.mrb[0].mxu0
        %v1772 = vadd.f32 0.0, %v1771
        %v1773 = vpop.f32.mrb[0].mxu0
        %v1774 = vadd.f32 0.0, %v1773
        %1775 = vdwg.mxu0
        %1776 = vmatprep.subr.mxu0 %v1257
        %1777 = vmatpush1.msra.mxu0 %v1254
        %1778 = vmatprep.subr.mxu0 0.0
        %1779 = vmatpush1.msra.mxu0 0.0
        %1780 = vmatprep.subr.mxu0 0.0
        %1781 = vmatpush1.msra.mxu0 0.0
        %1782 = vmatprep.subr.mxu0 0.0
        %1783 = vmatpush1.msra.mxu0 0.0
        %1784 = vmatprep.subr.mxu0 0.0
        %1785 = vmatpush1.msra.mxu0 0.0
        %1786 = vmatprep.subr.mxu0 0.0
        %1787 = vmatpush1.msra.mxu0 0.0
        %1788 = vmatprep.subr.mxu0 0.0
        %1789 = vmatpush1.msra.mxu0 0.0
        %1790 = vmatprep.subr.mxu0 0.0
        %1791 = vmatpush1.msra.mxu0 0.0
        %1792 = vmatprep.subr.mxu0 0.0
        %1793 = vmatpush1.msra.mxu0 0.0
        %1794 = vmatprep.subr.mxu0 0.0
        %1795 = vmatpush1.msra.mxu0 0.0
        %1796 = vmatprep.subr.mxu0 0.0
        %1797 = vmatpush1.msra.mxu0 0.0
        %1798 = vmatprep.subr.mxu0 0.0
        %1799 = vmatpush1.msra.mxu0 0.0
        %1800 = vmatprep.subr.mxu0 0.0
        %1801 = vmatpush1.msra.mxu0 0.0
        %1802 = vmatprep.subr.mxu0 0.0
        %1803 = vmatpush1.msra.mxu0 0.0
        %1804 = vmatprep.subr.mxu0 0.0
        %1805 = vmatpush1.msra.mxu0 0.0
        %1806 = vmatprep.subr.mxu0 0.0
        %1807 = vmatpush1.msra.mxu0 0.0
        %1808 = vmatprep.subr.mxu0 0.0
        %1809 = vmatpush1.msra.mxu0 0.0
        %1810 = vmatprep.subr.mxu0 0.0
        %1811 = vmatpush1.msra.mxu0 0.0
        %1812 = vmatprep.subr.mxu0 0.0
        %1813 = vmatpush1.msra.mxu0 0.0
        %1814 = vmatprep.subr.mxu0 0.0
        %1815 = vmatpush1.msra.mxu0 0.0
        %1816 = vmatprep.subr.mxu0 0.0
        %1817 = vmatpush1.msra.mxu0 0.0
        %1818 = vmatprep.subr.mxu0 0.0
        %1819 = vmatpush1.msra.mxu0 0.0
        %1820 = vmatprep.subr.mxu0 0.0
        %1821 = vmatpush1.msra.mxu0 0.0
        %1822 = vmatprep.subr.mxu0 0.0
        %1823 = vmatpush1.msra.mxu0 0.0
        %1824 = vmatprep.subr.mxu0 0.0
        %1825 = vmatpush1.msra.mxu0 0.0
        %1826 = vmatprep.subr.mxu0 0.0
        %1827 = vmatpush1.msra.mxu0 0.0
        %1828 = vmatprep.subr.mxu0 0.0
        %1829 = vmatpush1.msra.mxu0 0.0
        %1830 = vmatprep.subr.mxu0 0.0
        %1831 = vmatpush1.msra.mxu0 0.0
        %1832 = vmatprep.subr.mxu0 0.0
        %1833 = vmatpush1.msra.mxu0 0.0
        %1834 = vmatprep.subr.mxu0 0.0
        %1835 = vmatpush1.msra.mxu0 0.0
        %1836 = vmatprep.subr.mxu0 0.0
        %1837 = vmatpush1.msra.mxu0 0.0
        %1838 = vmatprep.subr.mxu0 0.0
        %1839 = vmatpush1.msra.mxu0 0.0
        %1840 = vmatprep.mubr.f32.mxu0 0.0
        %1841 = vmatmul.mubr.f32.gmra.mrb[0].mxu0 %v1703
        %v1842 = vpop.f32.mrb[0].mxu0
        %v1843 = vadd.f32 0.0, %v1842
        %v1844 = vpop.f32.mrb[0].mxu0
        %v1845 = vadd.f32 0.0, %v1844
        %1846 = vdwg.mxu0
        %1847 = vmatprep.subr.mxu0 %v1263
        %1848 = vmatpush1.msra.mxu0 %v1260
        %1849 = vmatprep.subr.mxu0 0.0
        %1850 = vmatpush1.msra.mxu0 0.0
        %1851 = vmatprep.subr.mxu0 0.0
        %1852 = vmatpush1.msra.mxu0 0.0
        %1853 = vmatprep.subr.mxu0 0.0
        %1854 = vmatpush1.msra.mxu0 0.0
        %1855 = vmatprep.subr.mxu0 0.0
        %1856 = vmatpush1.msra.mxu0 0.0
        %1857 = vmatprep.subr.mxu0 0.0
        %1858 = vmatpush1.msra.mxu0 0.0
        %1859 = vmatprep.subr.mxu0 0.0
        %1860 = vmatpush1.msra.mxu0 0.0
        %1861 = vmatprep.subr.mxu0 0.0
        %1862 = vmatpush1.msra.mxu0 0.0
        %1863 = vmatprep.subr.mxu0 0.0
        %1864 = vmatpush1.msra.mxu0 0.0
        %1865 = vmatprep.subr.mxu0 0.0
        %1866 = vmatpush1.msra.mxu0 0.0
        %1867 = vmatprep.subr.mxu0 0.0
        %1868 = vmatpush1.msra.mxu0 0.0
        %1869 = vmatprep.subr.mxu0 0.0
        %1870 = vmatpush1.msra.mxu0 0.0
        %1871 = vmatprep.subr.mxu0 0.0
        %1872 = vmatpush1.msra.mxu0 0.0
        %1873 = vmatprep.subr.mxu0 0.0
        %1874 = vmatpush1.msra.mxu0 0.0
        %1875 = vmatprep.subr.mxu0 0.0
        %1876 = vmatpush1.msra.mxu0 0.0
        %1877 = vmatprep.subr.mxu0 0.0
        %1878 = vmatpush1.msra.mxu0 0.0
        %1879 = vmatprep.subr.mxu0 0.0
        %1880 = vmatpush1.msra.mxu0 0.0
        %1881 = vmatprep.subr.mxu0 0.0
        %1882 = vmatpush1.msra.mxu0 0.0
        %1883 = vmatprep.subr.mxu0 0.0
        %1884 = vmatpush1.msra.mxu0 0.0
        %1885 = vmatprep.subr.mxu0 0.0
        %1886 = vmatpush1.msra.mxu0 0.0
        %1887 = vmatprep.subr.mxu0 0.0
        %1888 = vmatpush1.msra.mxu0 0.0
        %1889 = vmatprep.subr.mxu0 0.0
        %1890 = vmatpush1.msra.mxu0 0.0
        %1891 = vmatprep.subr.mxu0 0.0
        %1892 = vmatpush1.msra.mxu0 0.0
        %1893 = vmatprep.subr.mxu0 0.0
        %1894 = vmatpush1.msra.mxu0 0.0
        %1895 = vmatprep.subr.mxu0 0.0
        %1896 = vmatpush1.msra.mxu0 0.0
        %1897 = vmatprep.subr.mxu0 0.0
        %1898 = vmatpush1.msra.mxu0 0.0
        %1899 = vmatprep.subr.mxu0 0.0
        %1900 = vmatpush1.msra.mxu0 0.0
        %1901 = vmatprep.subr.mxu0 0.0
        %1902 = vmatpush1.msra.mxu0 0.0
        %1903 = vmatprep.subr.mxu0 0.0
        %1904 = vmatpush1.msra.mxu0 0.0
        %1905 = vmatprep.subr.mxu0 0.0
        %1906 = vmatpush1.msra.mxu0 0.0
        %1907 = vmatprep.subr.mxu0 0.0
        %1908 = vmatpush1.msra.mxu0 0.0
        %1909 = vmatprep.subr.mxu0 0.0
        %1910 = vmatpush1.msra.mxu0 0.0
        %1911 = vmatprep.mubr.f32.mxu0 0.0
        %1912 = vmatmul.mubr.f32.gmra.mrb[0].mxu0 %v1703
        %v1913 = vpop.f32.mrb[0].mxu0
        %v1914 = vadd.f32 0.0, %v1913
        %v1915 = vpop.f32.mrb[0].mxu0
        %v1916 = vadd.f32 0.0, %v1915
        %1917 = vdwg.mxu0
        %s1918 = scalar_lea.vmem %s2, 12
        %v1919 = vld [vmem:[%s1918] sm:$0xf]
        %v1921 = vsel %vm415, %v1919, 0
        %1923 = vmatprep.subr.mxu0 %v1251
        %1924 = vmatpush1.msra.mxu0 %v1248
        %1925 = vmatprep.subr.mxu0 0.0
        %1926 = vmatpush1.msra.mxu0 0.0
        %1927 = vmatprep.subr.mxu0 0.0
        %1928 = vmatpush1.msra.mxu0 0.0
        %1929 = vmatprep.subr.mxu0 0.0
        %1930 = vmatpush1.msra.mxu0 0.0
        %1931 = vmatprep.subr.mxu0 0.0
        %1932 = vmatpush1.msra.mxu0 0.0
        %1933 = vmatprep.subr.mxu0 0.0
        %1934 = vmatpush1.msra.mxu0 0.0
        %1935 = vmatprep.subr.mxu0 0.0
        %1936 = vmatpush1.msra.mxu0 0.0
        %1937 = vmatprep.subr.mxu0 0.0
        %1938 = vmatpush1.msra.mxu0 0.0
        %1939 = vmatprep.subr.mxu0 0.0
        %1940 = vmatpush1.msra.mxu0 0.0
        %1941 = vmatprep.subr.mxu0 0.0
        %1942 = vmatpush1.msra.mxu0 0.0
        %1943 = vmatprep.subr.mxu0 0.0
        %1944 = vmatpush1.msra.mxu0 0.0
        %1945 = vmatprep.subr.mxu0 0.0
        %1946 = vmatpush1.msra.mxu0 0.0
        %1947 = vmatprep.subr.mxu0 0.0
        %1948 = vmatpush1.msra.mxu0 0.0
        %1949 = vmatprep.subr.mxu0 0.0
        %1950 = vmatpush1.msra.mxu0 0.0
        %1951 = vmatprep.subr.mxu0 0.0
        %1952 = vmatpush1.msra.mxu0 0.0
        %1953 = vmatprep.subr.mxu0 0.0
        %1954 = vmatpush1.msra.mxu0 0.0
        %1955 = vmatprep.subr.mxu0 0.0
        %1956 = vmatpush1.msra.mxu0 0.0
        %1957 = vmatprep.subr.mxu0 0.0
        %1958 = vmatpush1.msra.mxu0 0.0
        %1959 = vmatprep.subr.mxu0 0.0
        %1960 = vmatpush1.msra.mxu0 0.0
        %1961 = vmatprep.subr.mxu0 0.0
        %1962 = vmatpush1.msra.mxu0 0.0
        %1963 = vmatprep.subr.mxu0 0.0
        %1964 = vmatpush1.msra.mxu0 0.0
        %1965 = vmatprep.subr.mxu0 0.0
        %1966 = vmatpush1.msra.mxu0 0.0
        %1967 = vmatprep.subr.mxu0 0.0
        %1968 = vmatpush1.msra.mxu0 0.0
        %1969 = vmatprep.subr.mxu0 0.0
        %1970 = vmatpush1.msra.mxu0 0.0
        %1971 = vmatprep.subr.mxu0 0.0
        %1972 = vmatpush1.msra.mxu0 0.0
        %1973 = vmatprep.subr.mxu0 0.0
        %1974 = vmatpush1.msra.mxu0 0.0
        %1975 = vmatprep.subr.mxu0 0.0
        %1976 = vmatpush1.msra.mxu0 0.0
        %1977 = vmatprep.subr.mxu0 0.0
        %1978 = vmatpush1.msra.mxu0 0.0
        %1979 = vmatprep.subr.mxu0 0.0
        %1980 = vmatpush1.msra.mxu0 0.0
        %1981 = vmatprep.subr.mxu0 0.0
        %1982 = vmatpush1.msra.mxu0 0.0
        %1983 = vmatprep.subr.mxu0 0.0
        %1984 = vmatpush1.msra.mxu0 0.0
        %1985 = vmatprep.subr.mxu0 0.0
        %1986 = vmatpush1.msra.mxu0 0.0
        %1987 = vmatprep.mubr.f32.mxu0 0.0
        %1988 = vmatmul.mubr.f32.gmra.mrb[0].mxu0 %v1921
        %v1989 = vpop.f32.mrb[0].mxu0
        %v1990 = vadd.f32 0.0, %v1989
        %v1991 = vpop.f32.mrb[0].mxu0
        %v1992 = vadd.f32 0.0, %v1991
        %1993 = vdwg.mxu0
        %1994 = vmatprep.subr.mxu0 %v1257
        %1995 = vmatpush1.msra.mxu0 %v1254
        %1996 = vmatprep.subr.mxu0 0.0
        %1997 = vmatpush1.msra.mxu0 0.0
        %1998 = vmatprep.subr.mxu0 0.0
        %1999 = vmatpush1.msra.mxu0 0.0
        %2000 = vmatprep.subr.mxu0 0.0
        %2001 = vmatpush1.msra.mxu0 0.0
        %2002 = vmatprep.subr.mxu0 0.0
        %2003 = vmatpush1.msra.mxu0 0.0
        %2004 = vmatprep.subr.mxu0 0.0
        %2005 = vmatpush1.msra.mxu0 0.0
        %2006 = vmatprep.subr.mxu0 0.0
        %2007 = vmatpush1.msra.mxu0 0.0
        %2008 = vmatprep.subr.mxu0 0.0
        %2009 = vmatpush1.msra.mxu0 0.0
        %2010 = vmatprep.subr.mxu0 0.0
        %2011 = vmatpush1.msra.mxu0 0.0
        %2012 = vmatprep.subr.mxu0 0.0
        %2013 = vmatpush1.msra.mxu0 0.0
        %2014 = vmatprep.subr.mxu0 0.0
        %2015 = vmatpush1.msra.mxu0 0.0
        %2016 = vmatprep.subr.mxu0 0.0
        %2017 = vmatpush1.msra.mxu0 0.0
        %2018 = vmatprep.subr.mxu0 0.0
        %2019 = vmatpush1.msra.mxu0 0.0
        %2020 = vmatprep.subr.mxu0 0.0
        %2021 = vmatpush1.msra.mxu0 0.0
        %2022 = vmatprep.subr.mxu0 0.0
        %2023 = vmatpush1.msra.mxu0 0.0
        %2024 = vmatprep.subr.mxu0 0.0
        %2025 = vmatpush1.msra.mxu0 0.0
        %2026 = vmatprep.subr.mxu0 0.0
        %2027 = vmatpush1.msra.mxu0 0.0
        %2028 = vmatprep.subr.mxu0 0.0
        %2029 = vmatpush1.msra.mxu0 0.0
        %2030 = vmatprep.subr.mxu0 0.0
        %2031 = vmatpush1.msra.mxu0 0.0
        %2032 = vmatprep.subr.mxu0 0.0
        %2033 = vmatpush1.msra.mxu0 0.0
        %2034 = vmatprep.subr.mxu0 0.0
        %2035 = vmatpush1.msra.mxu0 0.0
        %2036 = vmatprep.subr.mxu0 0.0
        %2037 = vmatpush1.msra.mxu0 0.0
        %2038 = vmatprep.subr.mxu0 0.0
        %2039 = vmatpush1.msra.mxu0 0.0
        %2040 = vmatprep.subr.mxu0 0.0
        %2041 = vmatpush1.msra.mxu0 0.0
        %2042 = vmatprep.subr.mxu0 0.0
        %2043 = vmatpush1.msra.mxu0 0.0
        %2044 = vmatprep.subr.mxu0 0.0
        %2045 = vmatpush1.msra.mxu0 0.0
        %2046 = vmatprep.subr.mxu0 0.0
        %2047 = vmatpush1.msra.mxu0 0.0
        %2048 = vmatprep.subr.mxu0 0.0
        %2049 = vmatpush1.msra.mxu0 0.0
        %2050 = vmatprep.subr.mxu0 0.0
        %2051 = vmatpush1.msra.mxu0 0.0
        %2052 = vmatprep.subr.mxu0 0.0
        %2053 = vmatpush1.msra.mxu0 0.0
        %2054 = vmatprep.subr.mxu0 0.0
        %2055 = vmatpush1.msra.mxu0 0.0
        %2056 = vmatprep.subr.mxu0 0.0
        %2057 = vmatpush1.msra.mxu0 0.0
        %2058 = vmatprep.mubr.f32.mxu0 0.0
        %2059 = vmatmul.mubr.f32.gmra.mrb[0].mxu0 %v1921
        %v2060 = vpop.f32.mrb[0].mxu0
        %v2061 = vadd.f32 0.0, %v2060
        %v2062 = vpop.f32.mrb[0].mxu0
        %v2063 = vadd.f32 0.0, %v2062
        %2064 = vdwg.mxu0
        %2065 = vmatprep.subr.mxu0 %v1263
        %2066 = vmatpush1.msra.mxu0 %v1260
        %2067 = vmatprep.subr.mxu0 0.0
        %2068 = vmatpush1.msra.mxu0 0.0
        %2069 = vmatprep.subr.mxu0 0.0
        %2070 = vmatpush1.msra.mxu0 0.0
        %2071 = vmatprep.subr.mxu0 0.0
        %2072 = vmatpush1.msra.mxu0 0.0
        %2073 = vmatprep.subr.mxu0 0.0
        %2074 = vmatpush1.msra.mxu0 0.0
        %2075 = vmatprep.subr.mxu0 0.0
        %2076 = vmatpush1.msra.mxu0 0.0
        %2077 = vmatprep.subr.mxu0 0.0
        %2078 = vmatpush1.msra.mxu0 0.0
        %2079 = vmatprep.subr.mxu0 0.0
        %2080 = vmatpush1.msra.mxu0 0.0
        %2081 = vmatprep.subr.mxu0 0.0
        %2082 = vmatpush1.msra.mxu0 0.0
        %2083 = vmatprep.subr.mxu0 0.0
        %2084 = vmatpush1.msra.mxu0 0.0
        %2085 = vmatprep.subr.mxu0 0.0
        %2086 = vmatpush1.msra.mxu0 0.0
        %2087 = vmatprep.subr.mxu0 0.0
        %2088 = vmatpush1.msra.mxu0 0.0
        %2089 = vmatprep.subr.mxu0 0.0
        %2090 = vmatpush1.msra.mxu0 0.0
        %2091 = vmatprep.subr.mxu0 0.0
        %2092 = vmatpush1.msra.mxu0 0.0
        %2093 = vmatprep.subr.mxu0 0.0
        %2094 = vmatpush1.msra.mxu0 0.0
        %2095 = vmatprep.subr.mxu0 0.0
        %2096 = vmatpush1.msra.mxu0 0.0
        %2097 = vmatprep.subr.mxu0 0.0
        %2098 = vmatpush1.msra.mxu0 0.0
        %2099 = vmatprep.subr.mxu0 0.0
        %2100 = vmatpush1.msra.mxu0 0.0
        %2101 = vmatprep.subr.mxu0 0.0
        %2102 = vmatpush1.msra.mxu0 0.0
        %2103 = vmatprep.subr.mxu0 0.0
        %2104 = vmatpush1.msra.mxu0 0.0
        %2105 = vmatprep.subr.mxu0 0.0
        %2106 = vmatpush1.msra.mxu0 0.0
        %2107 = vmatprep.subr.mxu0 0.0
        %2108 = vmatpush1.msra.mxu0 0.0
        %2109 = vmatprep.subr.mxu0 0.0
        %2110 = vmatpush1.msra.mxu0 0.0
        %2111 = vmatprep.subr.mxu0 0.0
        %2112 = vmatpush1.msra.mxu0 0.0
        %2113 = vmatprep.subr.mxu0 0.0
        %2114 = vmatpush1.msra.mxu0 0.0
        %2115 = vmatprep.subr.mxu0 0.0
        %2116 = vmatpush1.msra.mxu0 0.0
        %2117 = vmatprep.subr.mxu0 0.0
        %2118 = vmatpush1.msra.mxu0 0.0
        %2119 = vmatprep.subr.mxu0 0.0
        %2120 = vmatpush1.msra.mxu0 0.0
        %2121 = vmatprep.subr.mxu0 0.0
        %2122 = vmatpush1.msra.mxu0 0.0
        %2123 = vmatprep.subr.mxu0 0.0
        %2124 = vmatpush1.msra.mxu0 0.0
        %2125 = vmatprep.subr.mxu0 0.0
        %2126 = vmatpush1.msra.mxu0 0.0
        %2127 = vmatprep.subr.mxu0 0.0
        %2128 = vmatpush1.msra.mxu0 0.0
        %2129 = vmatprep.mubr.f32.mxu0 0.0
        %2130 = vmatmul.mubr.f32.gmra.mrb[0].mxu0 %v1921
        %v2131 = vpop.f32.mrb[0].mxu0
        %v2132 = vadd.f32 0.0, %v2131
        %v2133 = vpop.f32.mrb[0].mxu0
        %2134 = vdwg.mxu0
        %v2135 = vadd.f32 %v1774, %v1990
        %v2136 = vadd.f32 %v1843, %v1992
        %v2137 = vadd.f32 %v1845, %v2061
        %v2138 = vadd.f32 %v1914, %v2063
        %v2139 = vadd.f32 %v1916, %v2132
        %v2140 = vld [vmem:[%s5] sm:$0xf]
        %2142 = vset.pattern.permute.xlu0 0
        %2143 = vperm.xlu0 %2142, %v2140
        %v2144 = vpop.permute.xlu0 %2143
        %v2146 = vadd.f32 %v1772, %v2144
        %v2147 = vadd.f32 %v1695, %v2144
        %v2148 = vadd.f32 %v2135, %v2144
        %v2149 = vadd.f32 %v1696, %v2144
        %v2150 = vadd.f32 %v2136, %v2144
        %v2151 = vadd.f32 %v1697, %v2144
        %v2152 = vadd.f32 %v2137, %v2144
        %v2153 = vadd.f32 %v1698, %v2144
        %v2154 = vadd.f32 %v2138, %v2144
        %v2155 = vadd.f32 %v1699, %v2144
        %v2156 = vadd.f32 %v2139, %v2144
        %v2157 = vadd.f32 %v1693, %v2144
        %v2158 = vcombine.low %v2146, %v2148
        %v2160 = vunpack.c.l.s4 1983009808
        %v2161 = vunpack.c.0.s8 %v2160
        %v2162 = vlaneseq
        %v2163 = vshrl.u32 %v2162, 7
        %v2164 = vsub.s32 %v2161, %v2163
        %v2165 = vrot.slane %v2158, %v2164
        %v2166 = vcombine.low %v2147, %v2149
        %v2168 = vunpack.c.l.s4 1983009808
        %v2169 = vunpack.c.0.s8 %v2168
        %v2170 = vlaneseq
        %v2171 = vshrl.u32 %v2170, 7
        %v2172 = vsub.s32 %v2169, %v2171
        %v2173 = vrot.slane %v2166, %v2172
        %v2174 = vcombine.low %v2150, %v2152
        %v2176 = vunpack.c.l.s4 1983009808
        %v2177 = vunpack.c.0.s8 %v2176
        %v2178 = vlaneseq
        %v2179 = vshrl.u32 %v2178, 7
        %v2180 = vsub.s32 %v2177, %v2179
        %v2181 = vrot.slane %v2174, %v2180
        %v2182 = vcombine.low %v2151, %v2153
        %v2184 = vunpack.c.l.s4 1983009808
        %v2185 = vunpack.c.0.s8 %v2184
        %v2186 = vlaneseq
        %v2187 = vshrl.u32 %v2186, 7
        %v2188 = vsub.s32 %v2185, %v2187
        %v2189 = vrot.slane %v2182, %v2188
        %v2190 = vcombine.low %v2165, %v2173
        %v2191 = vcombine.high %v2165, %v2173
        %v2193 = vunpack.c.l.s4 1934713408
        %v2194 = vunpack.c.0.s8 %v2193
        %v2195 = vlaneseq
        %v2196 = vshrl.u32 %v2195, 7
        %v2197 = vsub.s32 %v2194, %v2196
        %v2198 = vrot.slane %v2190, %v2197
        %v2200 = vunpack.c.l.s4 1934713408
        %v2201 = vunpack.c.0.s8 %v2200
        %v2202 = vlaneseq
        %v2203 = vshrl.u32 %v2202, 7
        %v2204 = vsub.s32 %v2201, %v2203
        %v2205 = vrot.slane %v2191, %v2204
        %v2206 = vcombine.low %v2181, %v2189
        %v2207 = vcombine.high %v2181, %v2189
        %v2209 = vunpack.c.l.s4 1934713408
        %v2210 = vunpack.c.0.s8 %v2209
        %v2211 = vlaneseq
        %v2212 = vshrl.u32 %v2211, 7
        %v2213 = vsub.s32 %v2210, %v2212
        %v2214 = vrot.slane %v2206, %v2213
        %v2216 = vunpack.c.l.s4 1934713408
        %v2217 = vunpack.c.0.s8 %v2216
        %v2218 = vlaneseq
        %v2219 = vshrl.u32 %v2218, 7
        %v2220 = vsub.s32 %v2217, %v2219
        %v2221 = vrot.slane %v2207, %v2220
        %v2222 = vcombine.low %v2198, %v2214
        %v2223 = vcombine.high %v2198, %v2214
        %v2224 = vcombine.low %v2205, %v2221
        %v2225 = vcombine.high %v2205, %v2221
        %v2226 = vcombine.low %v2154, %v2156
        %v2228 = vunpack.c.l.s4 1983009808
        %v2229 = vunpack.c.0.s8 %v2228
        %v2230 = vlaneseq
        %v2231 = vshrl.u32 %v2230, 7
        %v2232 = vsub.s32 %v2229, %v2231
        %v2233 = vrot.slane %v2226, %v2232
        %v2234 = vcombine.low %v2155, %v2157
        %v2236 = vunpack.c.l.s4 1983009808
        %v2237 = vunpack.c.0.s8 %v2236
        %v2238 = vlaneseq
        %v2239 = vshrl.u32 %v2238, 7
        %v2240 = vsub.s32 %v2237, %v2239
        %v2241 = vrot.slane %v2234, %v2240
        %v2242 = vcombine.low %v2233, %v2241
        %v2243 = vcombine.high %v2233, %v2241
        %v2245 = vunpack.c.l.s4 1934713408
        %v2246 = vunpack.c.0.s8 %v2245
        %v2247 = vlaneseq
        %v2248 = vshrl.u32 %v2247, 7
        %v2249 = vsub.s32 %v2246, %v2248
        %v2250 = vrot.slane %v2242, %v2249
        %v2252 = vunpack.c.l.s4 1934713408
        %v2253 = vunpack.c.0.s8 %v2252
        %v2254 = vlaneseq
        %v2255 = vshrl.u32 %v2254, 7
        %v2256 = vsub.s32 %v2253, %v2255
        %v2257 = vrot.slane %v2243, %v2256
        %v2258 = vcombine.high %v2250, 0.0
        %v2259 = vcombine.high %v2257, 0.0
        %2260 = vst [vmem:[%s350 + $0x7] sm:$0xff] %v2222
        %2261 = vst [vmem:[%s350 + $0xf] sm:$0xf] %v2250
        %2262 = vst [vmem:[%s350 + $0x2f] sm:$0xff] %v2223
        %2263 = vst [vmem:[%s350 + $0x37] sm:$0xf] %v2258
        %2264 = vst [vmem:[%s350 + $0x57] sm:$0xff] %v2224
        %2265 = vst [vmem:[%s350 + $0x5f] sm:$0xf] %v2257
        %2266 = vst [vmem:[%s350 + $0x7f] sm:$0xff] %v2225
        %2267 = vst [vmem:[%s350 + $0x87] sm:$0xf] %v2259
        %v2268 = vld [vmem:[%s301 + $0xc] sm:$0xf]
        %v2269 = vld [vmem:[%s301 + $0x1c] sm:$0xf]
        %v2270 = vld [vmem:[%s301 + $0x2c] sm:$0xf]
        %v2271 = vld [vmem:[%s301 + $0x3c] sm:$0xf]
        %v2272 = vcombine.low %v2268, %v2270
        %v2274 = vunpack.c.l.s4 1983009808
        %v2275 = vunpack.c.0.s8 %v2274
        %v2276 = vlaneseq
        %v2277 = vshrl.u32 %v2276, 7
        %v2278 = vsub.s32 %v2275, %v2277
        %v2279 = vrot.slane %v2272, %v2278
        %v2280 = vcombine.low %v2269, %v2271
        %v2282 = vunpack.c.l.s4 1983009808
        %v2283 = vunpack.c.0.s8 %v2282
        %v2284 = vlaneseq
        %v2285 = vshrl.u32 %v2284, 7
        %v2286 = vsub.s32 %v2283, %v2285
        %v2287 = vrot.slane %v2280, %v2286
        %v2288 = vcombine.low %v2279, %v2287
        %v2289 = vcombine.high %v2279, %v2287
        %v2291 = vunpack.c.l.s4 1934713408
        %v2292 = vunpack.c.0.s8 %v2291
        %v2293 = vlaneseq
        %v2294 = vshrl.u32 %v2293, 7
        %v2295 = vsub.s32 %v2292, %v2294
        %v2296 = vrot.slane %v2288, %v2295
        %v2298 = vunpack.c.l.s4 1934713408
        %v2299 = vunpack.c.0.s8 %v2298
        %v2300 = vlaneseq
        %v2301 = vshrl.u32 %v2300, 7
        %v2302 = vsub.s32 %v2299, %v2301
        %v2303 = vrot.slane %v2289, %v2302
        %v2304 = vcombine.high %v2296, 0.0
        %v2305 = vcombine.high %v2303, 0.0
        %v2306 = vld [vmem:[#allocation6] sm:$0xf]
        %v2308 = vsel %vm415, %v2306, 0
        %v2311 = vsel %vm419, %v2296, 0
        %v2314 = vsel %vm419, %v2304, 0
        %v2317 = vsel %vm419, %v2303, 0
        %v2320 = vsel %vm419, %v2305, 0
        %2322 = vmatprep.subr.mxu0 %v2314
        %2323 = vmatpush1.msra.mxu0 %v2311
        %2324 = vmatprep.subr.mxu0 0.0
        %2325 = vmatpush1.msra.mxu0 0.0
        %2326 = vmatprep.subr.mxu0 0.0
        %2327 = vmatpush1.msra.mxu0 0.0
        %2328 = vmatprep.subr.mxu0 0.0
        %2329 = vmatpush1.msra.mxu0 0.0
        %2330 = vmatprep.subr.mxu0 0.0
        %2331 = vmatpush1.msra.mxu0 0.0
        %2332 = vmatprep.subr.mxu0 0.0
        %2333 = vmatpush1.msra.mxu0 0.0
        %2334 = vmatprep.subr.mxu0 0.0
        %2335 = vmatpush1.msra.mxu0 0.0
        %2336 = vmatprep.subr.mxu0 0.0
        %2337 = vmatpush1.msra.mxu0 0.0
        %2338 = vmatprep.subr.mxu0 0.0
        %2339 = vmatpush1.msra.mxu0 0.0
        %2340 = vmatprep.subr.mxu0 0.0
        %2341 = vmatpush1.msra.mxu0 0.0
        %2342 = vmatprep.subr.mxu0 0.0
        %2343 = vmatpush1.msra.mxu0 0.0
        %2344 = vmatprep.subr.mxu0 0.0
        %2345 = vmatpush1.msra.mxu0 0.0
        %2346 = vmatprep.subr.mxu0 0.0
        %2347 = vmatpush1.msra.mxu0 0.0
        %2348 = vmatprep.subr.mxu0 0.0
        %2349 = vmatpush1.msra.mxu0 0.0
        %2350 = vmatprep.subr.mxu0 0.0
        %2351 = vmatpush1.msra.mxu0 0.0
        %2352 = vmatprep.subr.mxu0 0.0
        %2353 = vmatpush1.msra.mxu0 0.0
        %2354 = vmatprep.subr.mxu0 0.0
        %2355 = vmatpush1.msra.mxu0 0.0
        %2356 = vmatprep.subr.mxu0 0.0
        %2357 = vmatpush1.msra.mxu0 0.0
        %2358 = vmatprep.subr.mxu0 0.0
        %2359 = vmatpush1.msra.mxu0 0.0
        %2360 = vmatprep.subr.mxu0 0.0
        %2361 = vmatpush1.msra.mxu0 0.0
        %2362 = vmatprep.subr.mxu0 0.0
        %2363 = vmatpush1.msra.mxu0 0.0
        %2364 = vmatprep.subr.mxu0 0.0
        %2365 = vmatpush1.msra.mxu0 0.0
        %2366 = vmatprep.subr.mxu0 0.0
        %2367 = vmatpush1.msra.mxu0 0.0
        %2368 = vmatprep.subr.mxu0 0.0
        %2369 = vmatpush1.msra.mxu0 0.0
        %2370 = vmatprep.subr.mxu0 0.0
        %2371 = vmatpush1.msra.mxu0 0.0
        %2372 = vmatprep.subr.mxu0 0.0
        %2373 = vmatpush1.msra.mxu0 0.0
        %2374 = vmatprep.subr.mxu0 0.0
        %2375 = vmatpush1.msra.mxu0 0.0
        %2376 = vmatprep.subr.mxu0 0.0
        %2377 = vmatpush1.msra.mxu0 0.0
        %2378 = vmatprep.subr.mxu0 0.0
        %2379 = vmatpush1.msra.mxu0 0.0
        %2380 = vmatprep.subr.mxu0 0.0
        %2381 = vmatpush1.msra.mxu0 0.0
        %2382 = vmatprep.subr.mxu0 0.0
        %2383 = vmatpush1.msra.mxu0 0.0
        %2384 = vmatprep.subr.mxu0 0.0
        %2385 = vmatpush1.msra.mxu0 0.0
        %2386 = vmatprep.mubr.f32.mxu0 0.0
        %2387 = vmatmul.mubr.f32.gmra.mrb[0].mxu0 %v2308
        %v2388 = vpop.f32.mrb[0].mxu0
        %v2389 = vadd.f32 0.0, %v2388
        %v2390 = vpop.f32.mrb[0].mxu0
        %v2391 = vadd.f32 0.0, %v2390
        %2392 = vdwg.mxu0
        %2393 = vmatprep.subr.mxu0 %v2320
        %2394 = vmatpush1.msra.mxu0 %v2317
        %2395 = vmatprep.subr.mxu0 0.0
        %2396 = vmatpush1.msra.mxu0 0.0
        %2397 = vmatprep.subr.mxu0 0.0
        %2398 = vmatpush1.msra.mxu0 0.0
        %2399 = vmatprep.subr.mxu0 0.0
        %2400 = vmatpush1.msra.mxu0 0.0
        %2401 = vmatprep.subr.mxu0 0.0
        %2402 = vmatpush1.msra.mxu0 0.0
        %2403 = vmatprep.subr.mxu0 0.0
        %2404 = vmatpush1.msra.mxu0 0.0
        %2405 = vmatprep.subr.mxu0 0.0
        %2406 = vmatpush1.msra.mxu0 0.0
        %2407 = vmatprep.subr.mxu0 0.0
        %2408 = vmatpush1.msra.mxu0 0.0
        %2409 = vmatprep.subr.mxu0 0.0
        %2410 = vmatpush1.msra.mxu0 0.0
        %2411 = vmatprep.subr.mxu0 0.0
        %2412 = vmatpush1.msra.mxu0 0.0
        %2413 = vmatprep.subr.mxu0 0.0
        %2414 = vmatpush1.msra.mxu0 0.0
        %2415 = vmatprep.subr.mxu0 0.0
        %2416 = vmatpush1.msra.mxu0 0.0
        %2417 = vmatprep.subr.mxu0 0.0
        %2418 = vmatpush1.msra.mxu0 0.0
        %2419 = vmatprep.subr.mxu0 0.0
        %2420 = vmatpush1.msra.mxu0 0.0
        %2421 = vmatprep.subr.mxu0 0.0
        %2422 = vmatpush1.msra.mxu0 0.0
        %2423 = vmatprep.subr.mxu0 0.0
        %2424 = vmatpush1.msra.mxu0 0.0
        %2425 = vmatprep.subr.mxu0 0.0
        %2426 = vmatpush1.msra.mxu0 0.0
        %2427 = vmatprep.subr.mxu0 0.0
        %2428 = vmatpush1.msra.mxu0 0.0
        %2429 = vmatprep.subr.mxu0 0.0
        %2430 = vmatpush1.msra.mxu0 0.0
        %2431 = vmatprep.subr.mxu0 0.0
        %2432 = vmatpush1.msra.mxu0 0.0
        %2433 = vmatprep.subr.mxu0 0.0
        %2434 = vmatpush1.msra.mxu0 0.0
        %2435 = vmatprep.subr.mxu0 0.0
        %2436 = vmatpush1.msra.mxu0 0.0
        %2437 = vmatprep.subr.mxu0 0.0
        %2438 = vmatpush1.msra.mxu0 0.0
        %2439 = vmatprep.subr.mxu0 0.0
        %2440 = vmatpush1.msra.mxu0 0.0
        %2441 = vmatprep.subr.mxu0 0.0
        %2442 = vmatpush1.msra.mxu0 0.0
        %2443 = vmatprep.subr.mxu0 0.0
        %2444 = vmatpush1.msra.mxu0 0.0
        %2445 = vmatprep.subr.mxu0 0.0
        %2446 = vmatpush1.msra.mxu0 0.0
        %2447 = vmatprep.subr.mxu0 0.0
        %2448 = vmatpush1.msra.mxu0 0.0
        %2449 = vmatprep.subr.mxu0 0.0
        %2450 = vmatpush1.msra.mxu0 0.0
        %2451 = vmatprep.subr.mxu0 0.0
        %2452 = vmatpush1.msra.mxu0 0.0
        %2453 = vmatprep.subr.mxu0 0.0
        %2454 = vmatpush1.msra.mxu0 0.0
        %2455 = vmatprep.subr.mxu0 0.0
        %2456 = vmatpush1.msra.mxu0 0.0
        %2457 = vmatprep.mubr.f32.mxu0 0.0
        %2458 = vmatmul.mubr.f32.gmra.mrb[0].mxu0 %v2308
        %v2459 = vpop.f32.mrb[0].mxu0
        %v2460 = vadd.f32 0.0, %v2459
        %v2461 = vpop.f32.mrb[0].mxu0
        %v2462 = vadd.f32 0.0, %v2461
        %2463 = vdwg.mxu0
        %s2464 = scalar_lea.vmem [#allocation6], 4
        %v2465 = vld [vmem:[%s2464] sm:$0xf]
        %v2467 = vsel %vm415, %v2465, 0
        %2469 = vmatprep.subr.mxu0 %v2314
        %2470 = vmatpush1.msra.mxu0 %v2311
        %2471 = vmatprep.subr.mxu0 0.0
        %2472 = vmatpush1.msra.mxu0 0.0
        %2473 = vmatprep.subr.mxu0 0.0
        %2474 = vmatpush1.msra.mxu0 0.0
        %2475 = vmatprep.subr.mxu0 0.0
        %2476 = vmatpush1.msra.mxu0 0.0
        %2477 = vmatprep.subr.mxu0 0.0
        %2478 = vmatpush1.msra.mxu0 0.0
        %2479 = vmatprep.subr.mxu0 0.0
        %2480 = vmatpush1.msra.mxu0 0.0
        %2481 = vmatprep.subr.mxu0 0.0
        %2482 = vmatpush1.msra.mxu0 0.0
        %2483 = vmatprep.subr.mxu0 0.0
        %2484 = vmatpush1.msra.mxu0 0.0
        %2485 = vmatprep.subr.mxu0 0.0
        %2486 = vmatpush1.msra.mxu0 0.0
        %2487 = vmatprep.subr.mxu0 0.0
        %2488 = vmatpush1.msra.mxu0 0.0
        %2489 = vmatprep.subr.mxu0 0.0
        %2490 = vmatpush1.msra.mxu0 0.0
        %2491 = vmatprep.subr.mxu0 0.0
        %2492 = vmatpush1.msra.mxu0 0.0
        %2493 = vmatprep.subr.mxu0 0.0
        %2494 = vmatpush1.msra.mxu0 0.0
        %2495 = vmatprep.subr.mxu0 0.0
        %2496 = vmatpush1.msra.mxu0 0.0
        %2497 = vmatprep.subr.mxu0 0.0
        %2498 = vmatpush1.msra.mxu0 0.0
        %2499 = vmatprep.subr.mxu0 0.0
        %2500 = vmatpush1.msra.mxu0 0.0
        %2501 = vmatprep.subr.mxu0 0.0
        %2502 = vmatpush1.msra.mxu0 0.0
        %2503 = vmatprep.subr.mxu0 0.0
        %2504 = vmatpush1.msra.mxu0 0.0
        %2505 = vmatprep.subr.mxu0 0.0
        %2506 = vmatpush1.msra.mxu0 0.0
        %2507 = vmatprep.subr.mxu0 0.0
        %2508 = vmatpush1.msra.mxu0 0.0
        %2509 = vmatprep.subr.mxu0 0.0
        %2510 = vmatpush1.msra.mxu0 0.0
        %2511 = vmatprep.subr.mxu0 0.0
        %2512 = vmatpush1.msra.mxu0 0.0
        %2513 = vmatprep.subr.mxu0 0.0
        %2514 = vmatpush1.msra.mxu0 0.0
        %2515 = vmatprep.subr.mxu0 0.0
        %2516 = vmatpush1.msra.mxu0 0.0
        %2517 = vmatprep.subr.mxu0 0.0
        %2518 = vmatpush1.msra.mxu0 0.0
        %2519 = vmatprep.subr.mxu0 0.0
        %2520 = vmatpush1.msra.mxu0 0.0
        %2521 = vmatprep.subr.mxu0 0.0
        %2522 = vmatpush1.msra.mxu0 0.0
        %2523 = vmatprep.subr.mxu0 0.0
        %2524 = vmatpush1.msra.mxu0 0.0
        %2525 = vmatprep.subr.mxu0 0.0
        %2526 = vmatpush1.msra.mxu0 0.0
        %2527 = vmatprep.subr.mxu0 0.0
        %2528 = vmatpush1.msra.mxu0 0.0
        %2529 = vmatprep.subr.mxu0 0.0
        %2530 = vmatpush1.msra.mxu0 0.0
        %2531 = vmatprep.subr.mxu0 0.0
        %2532 = vmatpush1.msra.mxu0 0.0
        %2533 = vmatprep.mubr.f32.mxu0 0.0
        %2534 = vmatmul.mubr.f32.gmra.mrb[0].mxu0 %v2467
        %v2535 = vpop.f32.mrb[0].mxu0
        %v2536 = vadd.f32 0.0, %v2535
        %v2537 = vpop.f32.mrb[0].mxu0
        %v2538 = vadd.f32 0.0, %v2537
        %2539 = vdwg.mxu0
        %2540 = vmatprep.subr.mxu0 %v2320
        %2541 = vmatpush1.msra.mxu0 %v2317
        %2542 = vmatprep.subr.mxu0 0.0
        %2543 = vmatpush1.msra.mxu0 0.0
        %2544 = vmatprep.subr.mxu0 0.0
        %2545 = vmatpush1.msra.mxu0 0.0
        %2546 = vmatprep.subr.mxu0 0.0
        %2547 = vmatpush1.msra.mxu0 0.0
        %2548 = vmatprep.subr.mxu0 0.0
        %2549 = vmatpush1.msra.mxu0 0.0
        %2550 = vmatprep.subr.mxu0 0.0
        %2551 = vmatpush1.msra.mxu0 0.0
        %2552 = vmatprep.subr.mxu0 0.0
        %2553 = vmatpush1.msra.mxu0 0.0
        %2554 = vmatprep.subr.mxu0 0.0
        %2555 = vmatpush1.msra.mxu0 0.0
        %2556 = vmatprep.subr.mxu0 0.0
        %2557 = vmatpush1.msra.mxu0 0.0
        %2558 = vmatprep.subr.mxu0 0.0
        %2559 = vmatpush1.msra.mxu0 0.0
        %2560 = vmatprep.subr.mxu0 0.0
        %2561 = vmatpush1.msra.mxu0 0.0
        %2562 = vmatprep.subr.mxu0 0.0
        %2563 = vmatpush1.msra.mxu0 0.0
        %2564 = vmatprep.subr.mxu0 0.0
        %2565 = vmatpush1.msra.mxu0 0.0
        %2566 = vmatprep.subr.mxu0 0.0
        %2567 = vmatpush1.msra.mxu0 0.0
        %2568 = vmatprep.subr.mxu0 0.0
        %2569 = vmatpush1.msra.mxu0 0.0
        %2570 = vmatprep.subr.mxu0 0.0
        %2571 = vmatpush1.msra.mxu0 0.0
        %2572 = vmatprep.subr.mxu0 0.0
        %2573 = vmatpush1.msra.mxu0 0.0
        %2574 = vmatprep.subr.mxu0 0.0
        %2575 = vmatpush1.msra.mxu0 0.0
        %2576 = vmatprep.subr.mxu0 0.0
        %2577 = vmatpush1.msra.mxu0 0.0
        %2578 = vmatprep.subr.mxu0 0.0
        %2579 = vmatpush1.msra.mxu0 0.0
        %2580 = vmatprep.subr.mxu0 0.0
        %2581 = vmatpush1.msra.mxu0 0.0
        %2582 = vmatprep.subr.mxu0 0.0
        %2583 = vmatpush1.msra.mxu0 0.0
        %2584 = vmatprep.subr.mxu0 0.0
        %2585 = vmatpush1.msra.mxu0 0.0
        %2586 = vmatprep.subr.mxu0 0.0
        %2587 = vmatpush1.msra.mxu0 0.0
        %2588 = vmatprep.subr.mxu0 0.0
        %2589 = vmatpush1.msra.mxu0 0.0
        %2590 = vmatprep.subr.mxu0 0.0
        %2591 = vmatpush1.msra.mxu0 0.0
        %2592 = vmatprep.subr.mxu0 0.0
        %2593 = vmatpush1.msra.mxu0 0.0
        %2594 = vmatprep.subr.mxu0 0.0
        %2595 = vmatpush1.msra.mxu0 0.0
        %2596 = vmatprep.subr.mxu0 0.0
        %2597 = vmatpush1.msra.mxu0 0.0
        %2598 = vmatprep.subr.mxu0 0.0
        %2599 = vmatpush1.msra.mxu0 0.0
        %2600 = vmatprep.subr.mxu0 0.0
        %2601 = vmatpush1.msra.mxu0 0.0
        %2602 = vmatprep.subr.mxu0 0.0
        %2603 = vmatpush1.msra.mxu0 0.0
        %2604 = vmatprep.mubr.f32.mxu0 0.0
        %2605 = vmatmul.mubr.f32.gmra.mrb[0].mxu0 %v2467
        %v2606 = vpop.f32.mrb[0].mxu0
        %v2607 = vadd.f32 0.0, %v2606
        %v2608 = vpop.f32.mrb[0].mxu0
        %v2609 = vadd.f32 0.0, %v2608
        %2610 = vdwg.mxu0
        %s2611 = scalar_lea.vmem [#allocation6], 8
        %v2612 = vld [vmem:[%s2611] sm:$0xf]
        %v2614 = vsel %vm415, %v2612, 0
        %2616 = vmatprep.subr.mxu0 %v2314
        %2617 = vmatpush1.msra.mxu0 %v2311
        %2618 = vmatprep.subr.mxu0 0.0
        %2619 = vmatpush1.msra.mxu0 0.0
        %2620 = vmatprep.subr.mxu0 0.0
        %2621 = vmatpush1.msra.mxu0 0.0
        %2622 = vmatprep.subr.mxu0 0.0
        %2623 = vmatpush1.msra.mxu0 0.0
        %2624 = vmatprep.subr.mxu0 0.0
        %2625 = vmatpush1.msra.mxu0 0.0
        %2626 = vmatprep.subr.mxu0 0.0
        %2627 = vmatpush1.msra.mxu0 0.0
        %2628 = vmatprep.subr.mxu0 0.0
        %2629 = vmatpush1.msra.mxu0 0.0
        %2630 = vmatprep.subr.mxu0 0.0
        %2631 = vmatpush1.msra.mxu0 0.0
        %2632 = vmatprep.subr.mxu0 0.0
        %2633 = vmatpush1.msra.mxu0 0.0
        %2634 = vmatprep.subr.mxu0 0.0
        %2635 = vmatpush1.msra.mxu0 0.0
        %2636 = vmatprep.subr.mxu0 0.0
        %2637 = vmatpush1.msra.mxu0 0.0
        %2638 = vmatprep.subr.mxu0 0.0
        %2639 = vmatpush1.msra.mxu0 0.0
        %2640 = vmatprep.subr.mxu0 0.0
        %2641 = vmatpush1.msra.mxu0 0.0
        %2642 = vmatprep.subr.mxu0 0.0
        %2643 = vmatpush1.msra.mxu0 0.0
        %2644 = vmatprep.subr.mxu0 0.0
        %2645 = vmatpush1.msra.mxu0 0.0
        %2646 = vmatprep.subr.mxu0 0.0
        %2647 = vmatpush1.msra.mxu0 0.0
        %2648 = vmatprep.subr.mxu0 0.0
        %2649 = vmatpush1.msra.mxu0 0.0
        %2650 = vmatprep.subr.mxu0 0.0
        %2651 = vmatpush1.msra.mxu0 0.0
        %2652 = vmatprep.subr.mxu0 0.0
        %2653 = vmatpush1.msra.mxu0 0.0
        %2654 = vmatprep.subr.mxu0 0.0
        %2655 = vmatpush1.msra.mxu0 0.0
        %2656 = vmatprep.subr.mxu0 0.0
        %2657 = vmatpush1.msra.mxu0 0.0
        %2658 = vmatprep.subr.mxu0 0.0
        %2659 = vmatpush1.msra.mxu0 0.0
        %2660 = vmatprep.subr.mxu0 0.0
        %2661 = vmatpush1.msra.mxu0 0.0
        %2662 = vmatprep.subr.mxu0 0.0
        %2663 = vmatpush1.msra.mxu0 0.0
        %2664 = vmatprep.subr.mxu0 0.0
        %2665 = vmatpush1.msra.mxu0 0.0
        %2666 = vmatprep.subr.mxu0 0.0
        %2667 = vmatpush1.msra.mxu0 0.0
        %2668 = vmatprep.subr.mxu0 0.0
        %2669 = vmatpush1.msra.mxu0 0.0
        %2670 = vmatprep.subr.mxu0 0.0
        %2671 = vmatpush1.msra.mxu0 0.0
        %2672 = vmatprep.subr.mxu0 0.0
        %2673 = vmatpush1.msra.mxu0 0.0
        %2674 = vmatprep.subr.mxu0 0.0
        %2675 = vmatpush1.msra.mxu0 0.0
        %2676 = vmatprep.subr.mxu0 0.0
        %2677 = vmatpush1.msra.mxu0 0.0
        %2678 = vmatprep.subr.mxu0 0.0
        %2679 = vmatpush1.msra.mxu0 0.0
        %2680 = vmatprep.mubr.f32.mxu0 0.0
        %2681 = vmatmul.mubr.f32.gmra.mrb[0].mxu0 %v2614
        %v2682 = vpop.f32.mrb[0].mxu0
        %v2683 = vadd.f32 0.0, %v2682
        %v2684 = vpop.f32.mrb[0].mxu0
        %v2685 = vadd.f32 0.0, %v2684
        %2686 = vdwg.mxu0
        %2687 = vmatprep.subr.mxu0 %v2320
        %2688 = vmatpush1.msra.mxu0 %v2317
        %2689 = vmatprep.subr.mxu0 0.0
        %2690 = vmatpush1.msra.mxu0 0.0
        %2691 = vmatprep.subr.mxu0 0.0
        %2692 = vmatpush1.msra.mxu0 0.0
        %2693 = vmatprep.subr.mxu0 0.0
        %2694 = vmatpush1.msra.mxu0 0.0
        %2695 = vmatprep.subr.mxu0 0.0
        %2696 = vmatpush1.msra.mxu0 0.0
        %2697 = vmatprep.subr.mxu0 0.0
        %2698 = vmatpush1.msra.mxu0 0.0
        %2699 = vmatprep.subr.mxu0 0.0
        %2700 = vmatpush1.msra.mxu0 0.0
        %2701 = vmatprep.subr.mxu0 0.0
        %2702 = vmatpush1.msra.mxu0 0.0
        %2703 = vmatprep.subr.mxu0 0.0
        %2704 = vmatpush1.msra.mxu0 0.0
        %2705 = vmatprep.subr.mxu0 0.0
        %2706 = vmatpush1.msra.mxu0 0.0
        %2707 = vmatprep.subr.mxu0 0.0
        %2708 = vmatpush1.msra.mxu0 0.0
        %2709 = vmatprep.subr.mxu0 0.0
        %2710 = vmatpush1.msra.mxu0 0.0
        %2711 = vmatprep.subr.mxu0 0.0
        %2712 = vmatpush1.msra.mxu0 0.0
        %2713 = vmatprep.subr.mxu0 0.0
        %2714 = vmatpush1.msra.mxu0 0.0
        %2715 = vmatprep.subr.mxu0 0.0
        %2716 = vmatpush1.msra.mxu0 0.0
        %2717 = vmatprep.subr.mxu0 0.0
        %2718 = vmatpush1.msra.mxu0 0.0
        %2719 = vmatprep.subr.mxu0 0.0
        %2720 = vmatpush1.msra.mxu0 0.0
        %2721 = vmatprep.subr.mxu0 0.0
        %2722 = vmatpush1.msra.mxu0 0.0
        %2723 = vmatprep.subr.mxu0 0.0
        %2724 = vmatpush1.msra.mxu0 0.0
        %2725 = vmatprep.subr.mxu0 0.0
        %2726 = vmatpush1.msra.mxu0 0.0
        %2727 = vmatprep.subr.mxu0 0.0
        %2728 = vmatpush1.msra.mxu0 0.0
        %2729 = vmatprep.subr.mxu0 0.0
        %2730 = vmatpush1.msra.mxu0 0.0
        %2731 = vmatprep.subr.mxu0 0.0
        %2732 = vmatpush1.msra.mxu0 0.0
        %2733 = vmatprep.subr.mxu0 0.0
        %2734 = vmatpush1.msra.mxu0 0.0
        %2735 = vmatprep.subr.mxu0 0.0
        %2736 = vmatpush1.msra.mxu0 0.0
        %2737 = vmatprep.subr.mxu0 0.0
        %2738 = vmatpush1.msra.mxu0 0.0
        %2739 = vmatprep.subr.mxu0 0.0
        %2740 = vmatpush1.msra.mxu0 0.0
        %2741 = vmatprep.subr.mxu0 0.0
        %2742 = vmatpush1.msra.mxu0 0.0
        %2743 = vmatprep.subr.mxu0 0.0
        %2744 = vmatpush1.msra.mxu0 0.0
        %2745 = vmatprep.subr.mxu0 0.0
        %2746 = vmatpush1.msra.mxu0 0.0
        %2747 = vmatprep.subr.mxu0 0.0
        %2748 = vmatpush1.msra.mxu0 0.0
        %2749 = vmatprep.subr.mxu0 0.0
        %2750 = vmatpush1.msra.mxu0 0.0
        %2751 = vmatprep.mubr.f32.mxu0 0.0
        %2752 = vmatmul.mubr.f32.gmra.mrb[0].mxu0 %v2614
        %v2753 = vpop.f32.mrb[0].mxu0
        %v2754 = vadd.f32 0.0, %v2753
        %v2755 = vpop.f32.mrb[0].mxu0
        %v2756 = vadd.f32 0.0, %v2755
        %2757 = vdwg.mxu0
        %s2758 = scalar_lea.vmem [#allocation6], 12
        %v2759 = vld [vmem:[%s2758] sm:$0xf]
        %v2761 = vsel %vm415, %v2759, 0
        %2763 = vmatprep.subr.mxu0 %v2314
        %2764 = vmatpush1.msra.mxu0 %v2311
        %2765 = vmatprep.subr.mxu0 0.0
        %2766 = vmatpush1.msra.mxu0 0.0
        %2767 = vmatprep.subr.mxu0 0.0
        %2768 = vmatpush1.msra.mxu0 0.0
        %2769 = vmatprep.subr.mxu0 0.0
        %2770 = vmatpush1.msra.mxu0 0.0
        %2771 = vmatprep.subr.mxu0 0.0
        %2772 = vmatpush1.msra.mxu0 0.0
        %2773 = vmatprep.subr.mxu0 0.0
        %2774 = vmatpush1.msra.mxu0 0.0
        %2775 = vmatprep.subr.mxu0 0.0
        %2776 = vmatpush1.msra.mxu0 0.0
        %2777 = vmatprep.subr.mxu0 0.0
        %2778 = vmatpush1.msra.mxu0 0.0
        %2779 = vmatprep.subr.mxu0 0.0
        %2780 = vmatpush1.msra.mxu0 0.0
        %2781 = vmatprep.subr.mxu0 0.0
        %2782 = vmatpush1.msra.mxu0 0.0
        %2783 = vmatprep.subr.mxu0 0.0
        %2784 = vmatpush1.msra.mxu0 0.0
        %2785 = vmatprep.subr.mxu0 0.0
        %2786 = vmatpush1.msra.mxu0 0.0
        %2787 = vmatprep.subr.mxu0 0.0
        %2788 = vmatpush1.msra.mxu0 0.0
        %2789 = vmatprep.subr.mxu0 0.0
        %2790 = vmatpush1.msra.mxu0 0.0
        %2791 = vmatprep.subr.mxu0 0.0
        %2792 = vmatpush1.msra.mxu0 0.0
        %2793 = vmatprep.subr.mxu0 0.0
        %2794 = vmatpush1.msra.mxu0 0.0
        %2795 = vmatprep.subr.mxu0 0.0
        %2796 = vmatpush1.msra.mxu0 0.0
        %2797 = vmatprep.subr.mxu0 0.0
        %2798 = vmatpush1.msra.mxu0 0.0
        %2799 = vmatprep.subr.mxu0 0.0
        %2800 = vmatpush1.msra.mxu0 0.0
        %2801 = vmatprep.subr.mxu0 0.0
        %2802 = vmatpush1.msra.mxu0 0.0
        %2803 = vmatprep.subr.mxu0 0.0
        %2804 = vmatpush1.msra.mxu0 0.0
        %2805 = vmatprep.subr.mxu0 0.0
        %2806 = vmatpush1.msra.mxu0 0.0
        %2807 = vmatprep.subr.mxu0 0.0
        %2808 = vmatpush1.msra.mxu0 0.0
        %2809 = vmatprep.subr.mxu0 0.0
        %2810 = vmatpush1.msra.mxu0 0.0
        %2811 = vmatprep.subr.mxu0 0.0
        %2812 = vmatpush1.msra.mxu0 0.0
        %2813 = vmatprep.subr.mxu0 0.0
        %2814 = vmatpush1.msra.mxu0 0.0
        %2815 = vmatprep.subr.mxu0 0.0
        %2816 = vmatpush1.msra.mxu0 0.0
        %2817 = vmatprep.subr.mxu0 0.0
        %2818 = vmatpush1.msra.mxu0 0.0
        %2819 = vmatprep.subr.mxu0 0.0
        %2820 = vmatpush1.msra.mxu0 0.0
        %2821 = vmatprep.subr.mxu0 0.0
        %2822 = vmatpush1.msra.mxu0 0.0
        %2823 = vmatprep.subr.mxu0 0.0
        %2824 = vmatpush1.msra.mxu0 0.0
        %2825 = vmatprep.subr.mxu0 0.0
        %2826 = vmatpush1.msra.mxu0 0.0
        %2827 = vmatprep.mubr.f32.mxu0 0.0
        %2828 = vmatmul.mubr.f32.gmra.mrb[0].mxu0 %v2761
        %v2829 = vpop.f32.mrb[0].mxu0
        %v2830 = vadd.f32 0.0, %v2829
        %v2831 = vpop.f32.mrb[0].mxu0
        %v2832 = vadd.f32 0.0, %v2831
        %2833 = vdwg.mxu0
        %2834 = vmatprep.subr.mxu0 %v2320
        %2835 = vmatpush1.msra.mxu0 %v2317
        %2836 = vmatprep.subr.mxu0 0.0
        %2837 = vmatpush1.msra.mxu0 0.0
        %2838 = vmatprep.subr.mxu0 0.0
        %2839 = vmatpush1.msra.mxu0 0.0
        %2840 = vmatprep.subr.mxu0 0.0
        %2841 = vmatpush1.msra.mxu0 0.0
        %2842 = vmatprep.subr.mxu0 0.0
        %2843 = vmatpush1.msra.mxu0 0.0
        %2844 = vmatprep.subr.mxu0 0.0
        %2845 = vmatpush1.msra.mxu0 0.0
        %2846 = vmatprep.subr.mxu0 0.0
        %2847 = vmatpush1.msra.mxu0 0.0
        %2848 = vmatprep.subr.mxu0 0.0
        %2849 = vmatpush1.msra.mxu0 0.0
        %2850 = vmatprep.subr.mxu0 0.0
        %2851 = vmatpush1.msra.mxu0 0.0
        %2852 = vmatprep.subr.mxu0 0.0
        %2853 = vmatpush1.msra.mxu0 0.0
        %2854 = vmatprep.subr.mxu0 0.0
        %2855 = vmatpush1.msra.mxu0 0.0
        %2856 = vmatprep.subr.mxu0 0.0
        %2857 = vmatpush1.msra.mxu0 0.0
        %2858 = vmatprep.subr.mxu0 0.0
        %2859 = vmatpush1.msra.mxu0 0.0
        %2860 = vmatprep.subr.mxu0 0.0
        %2861 = vmatpush1.msra.mxu0 0.0
        %2862 = vmatprep.subr.mxu0 0.0
        %2863 = vmatpush1.msra.mxu0 0.0
        %2864 = vmatprep.subr.mxu0 0.0
        %2865 = vmatpush1.msra.mxu0 0.0
        %2866 = vmatprep.subr.mxu0 0.0
        %2867 = vmatpush1.msra.mxu0 0.0
        %2868 = vmatprep.subr.mxu0 0.0
        %2869 = vmatpush1.msra.mxu0 0.0
        %2870 = vmatprep.subr.mxu0 0.0
        %2871 = vmatpush1.msra.mxu0 0.0
        %2872 = vmatprep.subr.mxu0 0.0
        %2873 = vmatpush1.msra.mxu0 0.0
        %2874 = vmatprep.subr.mxu0 0.0
        %2875 = vmatpush1.msra.mxu0 0.0
        %2876 = vmatprep.subr.mxu0 0.0
        %2877 = vmatpush1.msra.mxu0 0.0
        %2878 = vmatprep.subr.mxu0 0.0
        %2879 = vmatpush1.msra.mxu0 0.0
        %2880 = vmatprep.subr.mxu0 0.0
        %2881 = vmatpush1.msra.mxu0 0.0
        %2882 = vmatprep.subr.mxu0 0.0
        %2883 = vmatpush1.msra.mxu0 0.0
        %2884 = vmatprep.subr.mxu0 0.0
        %2885 = vmatpush1.msra.mxu0 0.0
        %2886 = vmatprep.subr.mxu0 0.0
        %2887 = vmatpush1.msra.mxu0 0.0
        %2888 = vmatprep.subr.mxu0 0.0
        %2889 = vmatpush1.msra.mxu0 0.0
        %2890 = vmatprep.subr.mxu0 0.0
        %2891 = vmatpush1.msra.mxu0 0.0
        %2892 = vmatprep.subr.mxu0 0.0
        %2893 = vmatpush1.msra.mxu0 0.0
        %2894 = vmatprep.subr.mxu0 0.0
        %2895 = vmatpush1.msra.mxu0 0.0
        %2896 = vmatprep.subr.mxu0 0.0
        %2897 = vmatpush1.msra.mxu0 0.0
        %2898 = vmatprep.mubr.f32.mxu0 0.0
        %2899 = vmatmul.mubr.f32.gmra.mrb[0].mxu0 %v2761
        %v2900 = vpop.f32.mrb[0].mxu0
        %v2901 = vadd.f32 0.0, %v2900
        %v2902 = vpop.f32.mrb[0].mxu0
        %v2903 = vadd.f32 0.0, %v2902
        %2904 = vdwg.mxu0
        %v2905 = vld [vmem:[%s6] sm:$0xf]
        %2907 = vset.pattern.permute.xlu0 0
        %2908 = vperm.xlu0 %2907, %v2905
        %v2909 = vpop.permute.xlu0 %2908
        %v2911 = vadd.f32 %v2389, %v2909
        %v2912 = vadd.f32 %v2536, %v2909
        %v2913 = vadd.f32 %v2683, %v2909
        %v2914 = vadd.f32 %v2830, %v2909
        %v2915 = vadd.f32 %v2391, %v2909
        %v2916 = vadd.f32 %v2538, %v2909
        %v2917 = vadd.f32 %v2685, %v2909
        %v2918 = vadd.f32 %v2832, %v2909
        %v2919 = vadd.f32 %v2460, %v2909
        %v2920 = vadd.f32 %v2607, %v2909
        %v2921 = vadd.f32 %v2754, %v2909
        %v2922 = vadd.f32 %v2901, %v2909
        %v2923 = vadd.f32 %v2462, %v2909
        %v2924 = vadd.f32 %v2609, %v2909
        %v2925 = vadd.f32 %v2756, %v2909
        %v2926 = vadd.f32 %v2903, %v2909
        %v2927 = vcombine.low %v2911, %v2913
        %v2929 = vunpack.c.l.s4 1983009808
        %v2930 = vunpack.c.0.s8 %v2929
        %v2931 = vlaneseq
        %v2932 = vshrl.u32 %v2931, 7
        %v2933 = vsub.s32 %v2930, %v2932
        %v2934 = vrot.slane %v2927, %v2933
        %v2935 = vcombine.low %v2912, %v2914
        %v2937 = vunpack.c.l.s4 1983009808
        %v2938 = vunpack.c.0.s8 %v2937
        %v2939 = vlaneseq
        %v2940 = vshrl.u32 %v2939, 7
        %v2941 = vsub.s32 %v2938, %v2940
        %v2942 = vrot.slane %v2935, %v2941
        %v2943 = vcombine.low %v2915, %v2917
        %v2945 = vunpack.c.l.s4 1983009808
        %v2946 = vunpack.c.0.s8 %v2945
        %v2947 = vlaneseq
        %v2948 = vshrl.u32 %v2947, 7
        %v2949 = vsub.s32 %v2946, %v2948
        %v2950 = vrot.slane %v2943, %v2949
        %v2951 = vcombine.low %v2916, %v2918
        %v2953 = vunpack.c.l.s4 1983009808
        %v2954 = vunpack.c.0.s8 %v2953
        %v2955 = vlaneseq
        %v2956 = vshrl.u32 %v2955, 7
        %v2957 = vsub.s32 %v2954, %v2956
        %v2958 = vrot.slane %v2951, %v2957
        %v2959 = vcombine.low %v2934, %v2942
        %v2960 = vcombine.high %v2934, %v2942
        %v2962 = vunpack.c.l.s4 1934713408
        %v2963 = vunpack.c.0.s8 %v2962
        %v2964 = vlaneseq
        %v2965 = vshrl.u32 %v2964, 7
        %v2966 = vsub.s32 %v2963, %v2965
        %v2967 = vrot.slane %v2959, %v2966
        %v2969 = vunpack.c.l.s4 1934713408
        %v2970 = vunpack.c.0.s8 %v2969
        %v2971 = vlaneseq
        %v2972 = vshrl.u32 %v2971, 7
        %v2973 = vsub.s32 %v2970, %v2972
        %v2974 = vrot.slane %v2960, %v2973
        %v2975 = vcombine.low %v2950, %v2958
        %v2976 = vcombine.high %v2950, %v2958
        %v2978 = vunpack.c.l.s4 1934713408
        %v2979 = vunpack.c.0.s8 %v2978
        %v2980 = vlaneseq
        %v2981 = vshrl.u32 %v2980, 7
        %v2982 = vsub.s32 %v2979, %v2981
        %v2983 = vrot.slane %v2975, %v2982
        %v2985 = vunpack.c.l.s4 1934713408
        %v2986 = vunpack.c.0.s8 %v2985
        %v2987 = vlaneseq
        %v2988 = vshrl.u32 %v2987, 7
        %v2989 = vsub.s32 %v2986, %v2988
        %v2990 = vrot.slane %v2976, %v2989
        %v2991 = vcombine.low %v2967, %v2983
        %v2992 = vcombine.high %v2967, %v2983
        %v2993 = vcombine.low %v2974, %v2990
        %v2994 = vcombine.high %v2974, %v2990
        %v2995 = vcombine.low %v2919, %v2921
        %v2997 = vunpack.c.l.s4 1983009808
        %v2998 = vunpack.c.0.s8 %v2997
        %v2999 = vlaneseq
        %v3000 = vshrl.u32 %v2999, 7
        %v3001 = vsub.s32 %v2998, %v3000
        %v3002 = vrot.slane %v2995, %v3001
        %v3003 = vcombine.low %v2920, %v2922
        %v3005 = vunpack.c.l.s4 1983009808
        %v3006 = vunpack.c.0.s8 %v3005
        %v3007 = vlaneseq
        %v3008 = vshrl.u32 %v3007, 7
        %v3009 = vsub.s32 %v3006, %v3008
        %v3010 = vrot.slane %v3003, %v3009
        %v3011 = vcombine.low %v2923, %v2925
        %v3013 = vunpack.c.l.s4 1983009808
        %v3014 = vunpack.c.0.s8 %v3013
        %v3015 = vlaneseq
        %v3016 = vshrl.u32 %v3015, 7
        %v3017 = vsub.s32 %v3014, %v3016
        %v3018 = vrot.slane %v3011, %v3017
        %v3019 = vcombine.low %v2924, %v2926
        %v3021 = vunpack.c.l.s4 1983009808
        %v3022 = vunpack.c.0.s8 %v3021
        %v3023 = vlaneseq
        %v3024 = vshrl.u32 %v3023, 7
        %v3025 = vsub.s32 %v3022, %v3024
        %v3026 = vrot.slane %v3019, %v3025
        %v3027 = vcombine.low %v3002, %v3010
        %v3028 = vcombine.high %v3002, %v3010
        %v3030 = vunpack.c.l.s4 1934713408
        %v3031 = vunpack.c.0.s8 %v3030
        %v3032 = vlaneseq
        %v3033 = vshrl.u32 %v3032, 7
        %v3034 = vsub.s32 %v3031, %v3033
        %v3035 = vrot.slane %v3027, %v3034
        %v3037 = vunpack.c.l.s4 1934713408
        %v3038 = vunpack.c.0.s8 %v3037
        %v3039 = vlaneseq
        %v3040 = vshrl.u32 %v3039, 7
        %v3041 = vsub.s32 %v3038, %v3040
        %v3042 = vrot.slane %v3028, %v3041
        %v3043 = vcombine.low %v3018, %v3026
        %v3044 = vcombine.high %v3018, %v3026
        %v3046 = vunpack.c.l.s4 1934713408
        %v3047 = vunpack.c.0.s8 %v3046
        %v3048 = vlaneseq
        %v3049 = vshrl.u32 %v3048, 7
        %v3050 = vsub.s32 %v3047, %v3049
        %v3051 = vrot.slane %v3043, %v3050
        %v3053 = vunpack.c.l.s4 1934713408
        %v3054 = vunpack.c.0.s8 %v3053
        %v3055 = vlaneseq
        %v3056 = vshrl.u32 %v3055, 7
        %v3057 = vsub.s32 %v3054, %v3056
        %v3058 = vrot.slane %v3044, %v3057
        %v3059 = vcombine.low %v3035, %v3051
        %v3060 = vcombine.high %v3035, %v3051
        %v3061 = vcombine.low %v3042, %v3058
        %v3062 = vcombine.high %v3042, %v3058
        %3063 = vst [vmem:[%s350 + $0x13] sm:$0xff] %v2991
        %3064 = vst [vmem:[%s350 + $0x1b] sm:$0xff] %v3059
        %3065 = vst [vmem:[%s350 + $0x3b] sm:$0xff] %v2992
        %3066 = vst [vmem:[%s350 + $0x43] sm:$0xff] %v3060
        %3067 = vst [vmem:[%s350 + $0x63] sm:$0xff] %v2993
        %3068 = vst [vmem:[%s350 + $0x6b] sm:$0xff] %v3061
        %3069 = vst [vmem:[%s350 + $0x8b] sm:$0xff] %v2994
        %3070 = vst [vmem:[%s350 + $0x93] sm:$0xff] %v3062
        %p3071 = scmp.lt.s32.totalorder %s26, 1
        %s3072 = scalar_select %p3071, %s26, 1
        %p3073 = scmp.lt.s32.totalorder %s27, 0
        %s3074 = scalar_select %p3073, %s27, 0
        %s3075 = smul.addr %s3072, 20
        %s3076 = sadd.s32 %s3074, %s3075
        %s3077 = smul.addr %s3076, 8
        %s3078 = scalar_lea.vmem %s7, %s3077
        // Predicated region
        $region61: #{tpu_custom_call.1} parent=47 // pred_check
          %p3079 = pneg %p208
        $region62: #{tpu_custom_call.1} parent=47 // pred_check_branch
          %3081 = sbr.rel (%p3079) target = $region64
        $region63: #{tpu_custom_call.1} parent=47 // pred_region
          _
        $region64: #{tpu_custom_call.1} parent=47 // pred_fallthru
          _
      $region48: #{tpu_custom_call.1} parent=5 // pred_fallthru
        _
      %p3082 = scmp.le.s32.totalorder 2, %s17
      // Predicated region
      $region65: #{tpu_custom_call.1} parent=5 // pred_check
        %p3083 = pneg %p3082
      $region66: #{tpu_custom_call.1} parent=5 // pred_check_branch
        %3085 = sbr.rel (%p3083) target = $region68
      $region67: #{tpu_custom_call.1} parent=5 // pred_region
        %s3086 = ssub.s32 %s17, 2
        // Predicated region
        $region69: #{tpu_custom_call.1} parent=67 // pred_check
          %p3087 = pneg %p214
        $region70: #{tpu_custom_call.1} parent=67 // pred_check_branch
          %3089 = sbr.rel (%p3087) target = $region72
        $region71: #{tpu_custom_call.1} parent=67 // pred_region
          %p3090 = scmp.lt.s32.totalorder %s28, 1
          %s3091 = scalar_select %p3090, %s28, 1
          %p3092 = scmp.lt.s32.totalorder %s29, 0
          %s3093 = scalar_select %p3092, %s29, 0
          %s3094 = smul.addr %s3091, 20
          %s3095 = sadd.s32 %s3093, %s3094
          %s3096 = smul.addr %s3095, 8
          %s3097 = scalar_lea.vmem %s7, %s3096
        $region72: #{tpu_custom_call.1} parent=67 // pred_fallthru
          _
      $region68: #{tpu_custom_call.1} parent=5 // pred_fallthru
        _
    $region6: #{tpu_custom_call.1} parent=1 // loop_footer
      %s21 = sadd.s32 1, %s17
    $region7: #{tpu_custom_call.1} parent=1 // loop_footer_branch
      %16 = sbr.rel target = $region3
    $region8: #{tpu_custom_call.1} parent=1 // loop_exit
      _
    %3098 = vsyncpa [#allocation3], 1
    %s3099 = scalar_lea.sflag [#allocation3], 1
    %3100 = vsyncpa %s3099, 1
    %3101 = vsyncpa [#allocation5], 1

</llo_original>
